<compile_context>
chip_gen: v5e
topology: v5e:2x2
jax: 0.10.0
libtpu: 0.0.40
codegen_flags: <defaults>
</compile_context>

<pallas_src>
import functools

import jax
import jax.numpy as jnp
from jax import lax
from jax.experimental import pallas as pl
from jax.experimental.pallas import tpu as pltpu


def _softplus(x):
    # matches torch.nn.Softplus(beta=1, threshold=20)
    return jnp.where(x > 20.0, x, jnp.log1p(jnp.exp(jnp.minimum(x, 20.0))))


def drmm_tks_kernel(q1_ref, q2_ref, len_ref, pt_ref, o_ref, *, topk, hidden):
    Lq, E, Bt = q1_ref.shape
    Ld = q2_ref.shape[0]
    H1 = hidden

    # packed-parameter row offsets (must match the wrapper packing)
    gw_off = 0
    w1_off = E
    b1_off = w1_off + topk * H1
    w2_off = b1_off + H1
    sc_off = w2_off + H1

    # ---- one upcast per block (v5e has no bf16 VALU/EUP) ----------------------
    a = q1_ref[...].astype(jnp.float32)                      # (Lq, E, Bt)
    d = q2_ref[...].astype(jnp.float32)                      # (Ld, E, Bt)

    # ---- per-side inverse norms (EUP rsqrt; differs from ref only on masked rows)
    inv_a = lax.rsqrt(jnp.sum(a * a, axis=1) + 1e-12)        # (Lq, Bt)
    inv_d = lax.rsqrt(jnp.sum(d * d, axis=1) + 1e-12)        # (Ld, Bt)

    # ---- gating logits: E-term VPU MAC against lane-broadcast gw rows ---------
    gw = pt_ref[gw_off:gw_off + E, :]                        # (E, Bt)
    wg = jnp.sum(a * gw[None, :, :], axis=1)                 # (Lq, Bt)
    # gating bias omitted: softmax is shift invariant
    wg = wg - jnp.max(wg, axis=0, keepdims=True)
    eg = jnp.exp(wg)
    g = eg * pl.reciprocal(jnp.sum(eg, axis=0, keepdims=True), approx=True)  # (Lq, Bt)

    # ---- attention-mask pieces: lane-vector lengths + one sublane iota --------
    l1 = len_ref[0:1, :]                                     # (1, Bt) int32
    l2 = len_ref[1:2, :]                                     # (1, Bt) int32
    d_idx = lax.broadcasted_iota(jnp.int32, (Ld, Bt), 0)     # (Ld, Bt)
    mask_d = d_idx >= l2                                     # (Ld, Bt)

    # tie-break key bias: unique per doc position, value bias <= Ld * 2^-22
    d_bias = d_idx.astype(jnp.float32) * jnp.float32(2.0 ** -22)
    neg_big = jnp.float32(-3.0e38)

    # ---- hoisted deep-layer parameter rows (loaded once, reused per q) --------
    w1_rows = [pt_ref[w1_off + k * H1: w1_off + (k + 1) * H1, :] for k in range(topk)]
    b1_rows = pt_ref[b1_off:b1_off + H1, :]                  # (H1, Bt)
    w2_rows = pt_ref[w2_off:w2_off + H1, :]                  # (H1, Bt)
    sc = pt_ref[sc_off:sc_off + 8, :]                        # aligned scalar block
    b2, wout0, wout1, bout0, bout1 = (sc[i:i + 1, :] for i in range(5))

    # ---- per query row: similarity -> cosine -> mask -> top-k -> deep layers --
    mean = jnp.zeros((1, Bt), jnp.float32)
    for q in range(Lq):
        aq = a[q]                                            # (E, Bt)
        s = jnp.sum(aq[None, :, :] * d, axis=1)              # (Ld, Bt) dot over E
        s = s * inv_a[q:q + 1, :] * inv_d                    # cosine similarity
        s = jnp.where(jnp.logical_or(mask_d, l1 <= q), 0.0, s)

        # top-k along doc positions: keyed sublane max, remove exactly one per slot
        # (preserves tie multiplicity of the masked zeros like torch.topk)
        key = s - d_bias
        h1 = b1_rows                                         # (H1, Bt)
        for k in range(topk):
            m = jnp.max(key, axis=0, keepdims=True)          # (1, Bt)
            key = jnp.where(key == m, neg_big, key)
            h1 = h1 + m * w1_rows[k]                         # Linear(topk->H1) term
        h1 = _softplus(h1)
        h2 = jnp.sum(h1 * w2_rows, axis=0, keepdims=True) + b2    # Linear(H1->1)
        h2 = _softplus(h2)
        # TODO(synk): dropout treated as identity (eval mode / p = 0).
        mean = mean + h2 * g[q:q + 1, :]                     # (1, Bt)

    # ---- out_layer Linear(1->2) + EXACT 2-class softmax -----------------------
    log0 = mean * wout0 + bout0
    log1 = mean * wout1 + bout1
    mx = jnp.maximum(log0, log1)
    e0 = jnp.exp(log0 - mx)
    e1 = jnp.exp(log1 - mx)
    denom = e0 + e1
    o_ref[...] = jnp.concatenate([e0 / denom, e1 / denom], axis=0)   # (2, Bt)


def drmm_tks_forward(q1e, q2e, q1_len, q2_len, params, topk, *, block_batch=512):
    B, Lq, E = q1e.shape
    _, Ld, _ = q2e.shape
    H1 = params["w1"].shape[1]

    if block_batch % 128 != 0:
        raise ValueError("block_batch must be a multiple of 128 (lane width)")
    # On v7x pick block_batch so the grid has >= 2 blocks (2 TensorCores);
    # on v5e/v6e (1 TC) take the largest tile that fits.
    Bt = min(block_batch, pl.cdiv(B, 128) * 128)
    n_blk = pl.cdiv(B, Bt)
    B_pad = n_blk * Bt

    # ---- lane-major relayout + bf16 cast (halves HBM traffic) -----------------
    q1_t = jnp.transpose(q1e.astype(jnp.bfloat16), (1, 2, 0))   # (Lq, E, B)
    q2_t = jnp.transpose(q2e.astype(jnp.bfloat16), (1, 2, 0))   # (Ld, E, B)
    lens = jnp.stack([q1_len.astype(jnp.int32),
                      q2_len.astype(jnp.int32)], axis=0)        # (2, B)
    if B_pad != B:
        pad = B_pad - B
        q1_t = jnp.pad(q1_t, ((0, 0), (0, 0), (0, pad)))
        q2_t = jnp.pad(q2_t, ((0, 0), (0, 0), (0, pad)))
        lens = jnp.pad(lens, ((0, 0), (0, pad)))   # padded lanes: length 0 -> fully masked

    # ---- packed parameters: one lane-broadcast f32 row per scalar -------------
    #   rows [0, E)               : gating weight gw
    #   rows [E, E + topk*H1)     : w1[k, j] at row E + k*H1 + j
    #   next H1 rows              : b1
    #   next H1 rows              : w2t
    #   next 5 rows               : b2, wout0, wout1, bout0, bout1
    #   (gating bias dropped: softmax is shift invariant)
    flat = jnp.concatenate([
        params["gw"].reshape(E),
        params["w1"].reshape(topk * H1),
        params["b1"].reshape(H1),
        params["w2t"].reshape(H1),
        params["b2"].reshape(1),
        params["wout"].reshape(2),
        params["bout"].reshape(2),
    ]).astype(jnp.float32)
    sc_off = E + topk * H1 + 2 * H1
    R_pad = ((sc_off + 8 + 7) // 8) * 8
    flat = jnp.pad(flat, (0, R_pad - flat.shape[0]))
    pt = jnp.broadcast_to(flat[:, None], (R_pad, Bt))

    kernel = functools.partial(drmm_tks_kernel, topk=topk, hidden=H1)

    grid_spec = pltpu.PrefetchScalarGridSpec(
        num_scalar_prefetch=0,
        grid=(n_blk,),
        in_specs=[
            pl.BlockSpec((Lq, E, Bt), lambda b: (0, 0, b)),      # queries (bf16)
            pl.BlockSpec((Ld, E, Bt), lambda b: (0, 0, b)),      # docs    (bf16)
            pl.BlockSpec((2, Bt), lambda b: (0, b)),             # lengths (lane vector)
            pl.BlockSpec((R_pad, Bt), lambda b: (0, 0)),         # packed params (constant)
        ],
        out_specs=pl.BlockSpec((2, Bt), lambda b: (0, b)),       # lane-dense output
    )

    out = pl.pallas_call(
        kernel,
        out_shape=jax.ShapeDtypeStruct((2, B_pad), jnp.float32),
        grid_spec=grid_spec,
        compiler_params=pltpu.CompilerParams(
            dimension_semantics=("parallel",)),                  # independent batch blocks
    )(q1_t, q2_t, lens, pt)
    return out[:, :B].T                                          # (B, 2)


def reference_forward(q1e, q2e, q1_len, q2_len, p, topk):
    # Pure-JAX reference mirroring the PyTorch module (eval / no dropout).
    mm = jnp.einsum("bqe,bde->bqd", q1e, q2e)
    q1n = jnp.linalg.norm(q1e, axis=2, keepdims=True)
    q2n = jnp.linalg.norm(q2e, axis=2, keepdims=True)
    norm = jnp.einsum("bqi,bdi->bqd", q1n, q2n)
    mm = mm / (norm + 1e-8)
    B, Lq, Ld = mm.shape
    row = jnp.arange(Lq)[None, :, None]
    col = jnp.arange(Ld)[None, None, :]
    mask = (row >= q1_len[:, None, None]) | (col >= q2_len[:, None, None])
    mm = jnp.where(mask, 0.0, mm)
    w_g = jnp.einsum("bqe,e->bq", q1e, p["gw"][0]) + p["gb"][0, 0]
    g = jax.nn.softmax(w_g, axis=1)
    mmk, _ = lax.top_k(mm, topk)
    h1 = jax.nn.softplus(mmk @ p["w1"] + p["b1"][0])
    h2 = jax.nn.softplus(jnp.sum(h1 * p["w2t"][0], axis=-1) + p["b2"][0, 0])
    mean = jnp.sum(h2 * g, axis=1, keepdims=True)
    logits = mean * p["wout"] + p["bout"]
    return jax.nn.softmax(logits, axis=1)


if __name__ == "__main__":
    # config: vocab_size=50, emb_dim=32, topk=4, hidden_sizes=[16, 1],
    # num_layers=2, dropout_p=0.0
    B, Lq, Ld = 13, 8, 8        # B deliberately NOT a multiple of the lane tile
    V, E = 50, 32
    TOPK, H1 = 4, 16

    key = jax.random.PRNGKey(0)
    ks = jax.random.split(key, 13)

    emb_table = jax.random.normal(ks[0], (V, E), jnp.float32)

    def u(k, shape, fan_in):
        bound = 1.0 / jnp.sqrt(jnp.float32(fan_in))
        return jax.random.uniform(k, shape, jnp.float32, -bound, bound)

    params = {
        "gw":   u(ks[1], (1, E), E),          # gating Linear(E->1) weight
        "gb":   u(ks[2], (1, 1), E),          # gating bias (cancels in softmax)
        "w1":   u(ks[3], (TOPK, H1), TOPK),   # Linear(topk->H1) weight (in, out)
        "b1":   u(ks[4], (1, H1), TOPK),
        "w2t":  u(ks[5], (1, H1), H1),        # Linear(H1->1) weight (transposed)
        "b2":   u(ks[6], (1, 1), H1),
        "wout": u(ks[7], (1, 2), 1),          # out Linear(1->2) weight (transposed)
        "bout": u(ks[8], (1, 2), 1),
    }

    q1 = jax.random.randint(ks[9], (B, Lq), 0, V, jnp.int32)
    q2 = jax.random.randint(ks[10], (B, Ld), 0, V, jnp.int32)
    q1_length = jax.random.randint(ks[11], (B,), 1, Lq + 1, jnp.int32)
    q2_length = jax.random.randint(ks[12], (B,), 1, Ld + 1, jnp.int32)

    # Embedding lookup (glue, plain JAX gather)
    q1_embed = jnp.take(emb_table, q1, axis=0)   # (B, Lq, E)
    q2_embed = jnp.take(emb_table, q2, axis=0)   # (B, Ld, E)

    out = drmm_tks_forward(q1_embed, q2_embed, q1_length, q2_length, params, TOPK,
                           block_batch=128)      # B=13 -> one 128-lane block
    out = jax.block_until_ready(out)

    ref = reference_forward(q1_embed, q2_embed, q1_length, q2_length, params, TOPK)
    if not bool(jnp.allclose(out, ref, atol=2e-2, rtol=2e-2)):
        raise AssertionError("Pallas output does not match pure-JAX reference")

    print("KERNEL_OK")
</pallas_src>

<mosaic_0001>
module attributes {stable_mosaic.version = 11 : i64} {
  func.func @drmm_tks_kernel(%arg0: i32, %arg1: memref<8x32x128xbf16, #tpu.memory_space<vmem>>, %arg2: memref<8x32x128xbf16, #tpu.memory_space<vmem>>, %arg3: memref<2x128xi32, #tpu.memory_space<vmem>>, %arg4: memref<136x128xf32, #tpu.memory_space<vmem>>, %arg5: memref<2x128xf32, #tpu.memory_space<vmem>>) attributes {dimension_semantics = [#tpu.dimension_semantics<parallel>], iteration_bounds = array<i64: 1>, scalar_prefetch = 0 : i64, scratch_operands = 0 : i64, tpu.core_type = #tpu.core_type<tc>, window_params = [{transform_indices = @transform_0, window_bounds = array<i64: 8, 32, 128>}, {transform_indices = @transform_1, window_bounds = array<i64: 8, 32, 128>}, {transform_indices = @transform_2, window_bounds = array<i64: 2, 128>}, {pipeline_mode = #tpu.pipeline_mode<synchronous>, transform_indices = @transform_3, window_bounds = array<i64: 136, 128>}, {transform_indices = @transform_4, window_bounds = array<i64: 2, 128>}]} {
    %c0 = arith.constant 0 : index
    %c0_0 = arith.constant 0 : index
    %c0_1 = arith.constant 0 : index
    %0 = vector.load %arg1[%c0, %c0_0, %c0_1] : memref<8x32x128xbf16, #tpu.memory_space<vmem>>, vector<8x32x128xbf16>
    %1 = arith.extf %0 : vector<8x32x128xbf16> to vector<8x32x128xf32>
    %c0_2 = arith.constant 0 : index
    %c0_3 = arith.constant 0 : index
    %c0_4 = arith.constant 0 : index
    %2 = vector.load %arg2[%c0_2, %c0_3, %c0_4] : memref<8x32x128xbf16, #tpu.memory_space<vmem>>, vector<8x32x128xbf16>
    %3 = arith.extf %2 : vector<8x32x128xbf16> to vector<8x32x128xf32>
    %4 = arith.mulf %1, %1 : vector<8x32x128xf32>
    %cst = arith.constant dense<0.000000e+00> : vector<8x128xf32>
    %5 = vector.multi_reduction <add>, %4, %cst [1] : vector<8x32x128xf32> to vector<8x128xf32>
    %cst_5 = arith.constant 9.99999996E-13 : f32
    %6 = vector.broadcast %cst_5 : f32 to vector<8x128xf32>
    %7 = arith.addf %5, %6 : vector<8x128xf32>
    %8 = math.rsqrt %7 : vector<8x128xf32>
    %9 = arith.mulf %3, %3 : vector<8x32x128xf32>
    %cst_6 = arith.constant dense<0.000000e+00> : vector<8x128xf32>
    %10 = vector.multi_reduction <add>, %9, %cst_6 [1] : vector<8x32x128xf32> to vector<8x128xf32>
    %cst_7 = arith.constant 9.99999996E-13 : f32
    %11 = vector.broadcast %cst_7 : f32 to vector<8x128xf32>
    %12 = arith.addf %10, %11 : vector<8x128xf32>
    %13 = math.rsqrt %12 : vector<8x128xf32>
    %c0_8 = arith.constant 0 : index
    %c0_9 = arith.constant 0 : index
    %14 = vector.load %arg4[%c0_8, %c0_9] : memref<136x128xf32, #tpu.memory_space<vmem>>, vector<32x128xf32>
    %15 = vector.shape_cast %14 : vector<32x128xf32> to vector<1x32x128xf32>
    %16 = vector.broadcast %15 : vector<1x32x128xf32> to vector<8x32x128xf32>
    %17 = arith.mulf %1, %16 : vector<8x32x128xf32>
    %cst_10 = arith.constant dense<0.000000e+00> : vector<8x128xf32>
    %18 = vector.multi_reduction <add>, %17, %cst_10 [1] : vector<8x32x128xf32> to vector<8x128xf32>
    %cst_11 = arith.constant dense<0xFF800000> : vector<128xf32>
    %19 = vector.multi_reduction <maximumf>, %18, %cst_11 [0] : vector<8x128xf32> to vector<128xf32>
    %20 = vector.shape_cast %19 : vector<128xf32> to vector<1x128xf32>
    %21 = vector.broadcast %20 : vector<1x128xf32> to vector<8x128xf32>
    %22 = arith.subf %18, %21 : vector<8x128xf32>
    %23 = math.exp %22 : vector<8x128xf32>
    %cst_12 = arith.constant dense<0.000000e+00> : vector<128xf32>
    %24 = vector.multi_reduction <add>, %23, %cst_12 [0] : vector<8x128xf32> to vector<128xf32>
    %25 = vector.shape_cast %24 : vector<128xf32> to vector<1x128xf32>
    %26 = tpu.reciprocal %25 {approx = true} : vector<1x128xf32> -> vector<1x128xf32>
    %27 = vector.broadcast %26 : vector<1x128xf32> to vector<8x128xf32>
    %28 = arith.mulf %23, %27 : vector<8x128xf32>
    %c0_13 = arith.constant 0 : index
    %c0_14 = arith.constant 0 : index
    %29 = vector.load %arg3[%c0_13, %c0_14] : memref<2x128xi32, #tpu.memory_space<vmem>>, vector<1x128xi32>
    %c1 = arith.constant 1 : index
    %c0_15 = arith.constant 0 : index
    %30 = vector.load %arg3[%c1, %c0_15] : memref<2x128xi32, #tpu.memory_space<vmem>>, vector<1x128xi32>
    %31 = tpu.iota {dimensions = array<i32: 0>} : vector<8x128xi32>
    %32 = vector.broadcast %30 : vector<1x128xi32> to vector<8x128xi32>
    %33 = arith.cmpi sge, %31, %32 : vector<8x128xi32>
    %34 = arith.sitofp %31 : vector<8x128xi32> to vector<8x128xf32>
    %cst_16 = arith.constant 2.38418579E-7 : f32
    %35 = vector.broadcast %cst_16 : f32 to vector<8x128xf32>
    %36 = arith.mulf %34, %35 : vector<8x128xf32>
    %c32 = arith.constant 32 : index
    %c0_17 = arith.constant 0 : index
    %37 = vector.load %arg4[%c32, %c0_17] : memref<136x128xf32, #tpu.memory_space<vmem>>, vector<16x128xf32>
    %c48 = arith.constant 48 : index
    %c0_18 = arith.constant 0 : index
    %38 = vector.load %arg4[%c48, %c0_18] : memref<136x128xf32, #tpu.memory_space<vmem>>, vector<16x128xf32>
    %c64 = arith.constant 64 : index
    %c0_19 = arith.constant 0 : index
    %39 = vector.load %arg4[%c64, %c0_19] : memref<136x128xf32, #tpu.memory_space<vmem>>, vector<16x128xf32>
    %c80 = arith.constant 80 : index
    %c0_20 = arith.constant 0 : index
    %40 = vector.load %arg4[%c80, %c0_20] : memref<136x128xf32, #tpu.memory_space<vmem>>, vector<16x128xf32>
    %c96 = arith.constant 96 : index
    %c0_21 = arith.constant 0 : index
    %41 = vector.load %arg4[%c96, %c0_21] : memref<136x128xf32, #tpu.memory_space<vmem>>, vector<16x128xf32>
    %c112 = arith.constant 112 : index
    %c0_22 = arith.constant 0 : index
    %42 = vector.load %arg4[%c112, %c0_22] : memref<136x128xf32, #tpu.memory_space<vmem>>, vector<16x128xf32>
    %c128 = arith.constant 128 : index
    %c0_23 = arith.constant 0 : index
    %43 = vector.load %arg4[%c128, %c0_23] : memref<136x128xf32, #tpu.memory_space<vmem>>, vector<8x128xf32>
    %44 = vector.extract_strided_slice %43 {offsets = [0, 0], sizes = [1, 128], strides = [1, 1]} : vector<8x128xf32> to vector<1x128xf32>
    %45 = vector.extract_strided_slice %43 {offsets = [1, 0], sizes = [1, 128], strides = [1, 1]} : vector<8x128xf32> to vector<1x128xf32>
    %46 = vector.extract_strided_slice %43 {offsets = [2, 0], sizes = [1, 128], strides = [1, 1]} : vector<8x128xf32> to vector<1x128xf32>
    %47 = vector.extract_strided_slice %43 {offsets = [3, 0], sizes = [1, 128], strides = [1, 1]} : vector<8x128xf32> to vector<1x128xf32>
    %48 = vector.extract_strided_slice %43 {offsets = [4, 0], sizes = [1, 128], strides = [1, 1]} : vector<8x128xf32> to vector<1x128xf32>
    %cst_24 = arith.constant 0.000000e+00 : f32
    %49 = vector.broadcast %cst_24 : f32 to vector<1x128xf32>
    %50 = vector.extract_strided_slice %1 {offsets = [0, 0, 0], sizes = [1, 32, 128], strides = [1, 1, 1]} : vector<8x32x128xf32> to vector<1x32x128xf32>
    %51 = vector.shape_cast %50 : vector<1x32x128xf32> to vector<32x128xf32>
    %52 = vector.shape_cast %51 : vector<32x128xf32> to vector<1x32x128xf32>
    %53 = vector.broadcast %52 : vector<1x32x128xf32> to vector<8x32x128xf32>
    %54 = arith.mulf %53, %3 : vector<8x32x128xf32>
    %cst_25 = arith.constant dense<0.000000e+00> : vector<8x128xf32>
    %55 = vector.multi_reduction <add>, %54, %cst_25 [1] : vector<8x32x128xf32> to vector<8x128xf32>
    %56 = vector.extract_strided_slice %8 {offsets = [0, 0], sizes = [1, 128], strides = [1, 1]} : vector<8x128xf32> to vector<1x128xf32>
    %57 = vector.broadcast %56 : vector<1x128xf32> to vector<8x128xf32>
    %58 = arith.mulf %55, %57 : vector<8x128xf32>
    %59 = arith.mulf %58, %13 : vector<8x128xf32>
    %c0_i32 = arith.constant 0 : i32
    %60 = vector.broadcast %c0_i32 : i32 to vector<1x128xi32>
    %61 = arith.cmpi sle, %29, %60 : vector<1x128xi32>
    %62 = vector.broadcast %61 : vector<1x128xi1> to vector<8x128xi1>
    %63 = arith.ori %33, %62 : vector<8x128xi1>
    %cst_26 = arith.constant 0.000000e+00 : f32
    %64 = vector.broadcast %cst_26 : f32 to vector<8x128xf32>
    %65 = arith.select %63, %64, %59 : vector<8x128xi1>, vector<8x128xf32>
    %66 = arith.subf %65, %36 : vector<8x128xf32>
    %cst_27 = arith.constant dense<0xFF800000> : vector<128xf32>
    %67 = vector.multi_reduction <maximumf>, %66, %cst_27 [0] : vector<8x128xf32> to vector<128xf32>
    %68 = vector.shape_cast %67 : vector<128xf32> to vector<1x128xf32>
    %69 = vector.broadcast %68 : vector<1x128xf32> to vector<8x128xf32>
    %70 = arith.cmpf oeq, %66, %69 : vector<8x128xf32>
    %cst_28 = arith.constant -3.000000e+38 : f32
    %71 = vector.broadcast %cst_28 : f32 to vector<8x128xf32>
    %72 = arith.select %70, %71, %66 : vector<8x128xi1>, vector<8x128xf32>
    %73 = vector.broadcast %68 : vector<1x128xf32> to vector<16x128xf32>
    %74 = arith.mulf %73, %37 : vector<16x128xf32>
    %75 = arith.addf %41, %74 : vector<16x128xf32>
    %cst_29 = arith.constant dense<0xFF800000> : vector<128xf32>
    %76 = vector.multi_reduction <maximumf>, %72, %cst_29 [0] : vector<8x128xf32> to vector<128xf32>
    %77 = vector.shape_cast %76 : vector<128xf32> to vector<1x128xf32>
    %78 = vector.broadcast %77 : vector<1x128xf32> to vector<8x128xf32>
    %79 = arith.cmpf oeq, %72, %78 : vector<8x128xf32>
    %cst_30 = arith.constant -3.000000e+38 : f32
    %80 = vector.broadcast %cst_30 : f32 to vector<8x128xf32>
    %81 = arith.select %79, %80, %72 : vector<8x128xi1>, vector<8x128xf32>
    %82 = vector.broadcast %77 : vector<1x128xf32> to vector<16x128xf32>
    %83 = arith.mulf %82, %38 : vector<16x128xf32>
    %84 = arith.addf %75, %83 : vector<16x128xf32>
    %cst_31 = arith.constant dense<0xFF800000> : vector<128xf32>
    %85 = vector.multi_reduction <maximumf>, %81, %cst_31 [0] : vector<8x128xf32> to vector<128xf32>
    %86 = vector.shape_cast %85 : vector<128xf32> to vector<1x128xf32>
    %87 = vector.broadcast %86 : vector<1x128xf32> to vector<8x128xf32>
    %88 = arith.cmpf oeq, %81, %87 : vector<8x128xf32>
    %cst_32 = arith.constant -3.000000e+38 : f32
    %89 = vector.broadcast %cst_32 : f32 to vector<8x128xf32>
    %90 = arith.select %88, %89, %81 : vector<8x128xi1>, vector<8x128xf32>
    %91 = vector.broadcast %86 : vector<1x128xf32> to vector<16x128xf32>
    %92 = arith.mulf %91, %39 : vector<16x128xf32>
    %93 = arith.addf %84, %92 : vector<16x128xf32>
    %cst_33 = arith.constant dense<0xFF800000> : vector<128xf32>
    %94 = vector.multi_reduction <maximumf>, %90, %cst_33 [0] : vector<8x128xf32> to vector<128xf32>
    %95 = vector.shape_cast %94 : vector<128xf32> to vector<1x128xf32>
    %96 = vector.broadcast %95 : vector<1x128xf32> to vector<16x128xf32>
    %97 = arith.mulf %96, %40 : vector<16x128xf32>
    %98 = arith.addf %93, %97 : vector<16x128xf32>
    %cst_34 = arith.constant 2.000000e+01 : f32
    %99 = vector.broadcast %cst_34 : f32 to vector<16x128xf32>
    %100 = arith.cmpf ogt, %98, %99 : vector<16x128xf32>
    %cst_35 = arith.constant 2.000000e+01 : f32
    %101 = vector.broadcast %cst_35 : f32 to vector<16x128xf32>
    %102 = arith.minimumf %98, %101 : vector<16x128xf32>
    %103 = math.exp %102 : vector<16x128xf32>
    %104 = math.log1p %103 : vector<16x128xf32>
    %105 = arith.select %100, %98, %104 : vector<16x128xi1>, vector<16x128xf32>
    %106 = arith.mulf %105, %42 : vector<16x128xf32>
    %cst_36 = arith.constant dense<0.000000e+00> : vector<128xf32>
    %107 = vector.multi_reduction <add>, %106, %cst_36 [0] : vector<16x128xf32> to vector<128xf32>
    %108 = vector.shape_cast %107 : vector<128xf32> to vector<1x128xf32>
    %109 = arith.addf %108, %44 : vector<1x128xf32>
    %cst_37 = arith.constant 2.000000e+01 : f32
    %110 = vector.broadcast %cst_37 : f32 to vector<1x128xf32>
    %111 = arith.cmpf ogt, %109, %110 : vector<1x128xf32>
    %cst_38 = arith.constant 2.000000e+01 : f32
    %112 = vector.broadcast %cst_38 : f32 to vector<1x128xf32>
    %113 = arith.minimumf %109, %112 : vector<1x128xf32>
    %114 = math.exp %113 : vector<1x128xf32>
    %115 = math.log1p %114 : vector<1x128xf32>
    %116 = arith.select %111, %109, %115 : vector<1x128xi1>, vector<1x128xf32>
    %117 = vector.extract_strided_slice %28 {offsets = [0, 0], sizes = [1, 128], strides = [1, 1]} : vector<8x128xf32> to vector<1x128xf32>
    %118 = arith.mulf %116, %117 : vector<1x128xf32>
    %119 = arith.addf %49, %118 : vector<1x128xf32>
    %120 = vector.extract_strided_slice %1 {offsets = [1, 0, 0], sizes = [1, 32, 128], strides = [1, 1, 1]} : vector<8x32x128xf32> to vector<1x32x128xf32>
    %121 = vector.shape_cast %120 : vector<1x32x128xf32> to vector<32x128xf32>
    %122 = vector.shape_cast %121 : vector<32x128xf32> to vector<1x32x128xf32>
    %123 = vector.broadcast %122 : vector<1x32x128xf32> to vector<8x32x128xf32>
    %124 = arith.mulf %123, %3 : vector<8x32x128xf32>
    %cst_39 = arith.constant dense<0.000000e+00> : vector<8x128xf32>
    %125 = vector.multi_reduction <add>, %124, %cst_39 [1] : vector<8x32x128xf32> to vector<8x128xf32>
    %126 = vector.extract_strided_slice %8 {offsets = [1, 0], sizes = [1, 128], strides = [1, 1]} : vector<8x128xf32> to vector<1x128xf32>
    %127 = vector.broadcast %126 : vector<1x128xf32> to vector<8x128xf32>
    %128 = arith.mulf %125, %127 : vector<8x128xf32>
    %129 = arith.mulf %128, %13 : vector<8x128xf32>
    %c1_i32 = arith.constant 1 : i32
    %130 = vector.broadcast %c1_i32 : i32 to vector<1x128xi32>
    %131 = arith.cmpi sle, %29, %130 : vector<1x128xi32>
    %132 = vector.broadcast %131 : vector<1x128xi1> to vector<8x128xi1>
    %133 = arith.ori %33, %132 : vector<8x128xi1>
    %cst_40 = arith.constant 0.000000e+00 : f32
    %134 = vector.broadcast %cst_40 : f32 to vector<8x128xf32>
    %135 = arith.select %133, %134, %129 : vector<8x128xi1>, vector<8x128xf32>
    %136 = arith.subf %135, %36 : vector<8x128xf32>
    %cst_41 = arith.constant dense<0xFF800000> : vector<128xf32>
    %137 = vector.multi_reduction <maximumf>, %136, %cst_41 [0] : vector<8x128xf32> to vector<128xf32>
    %138 = vector.shape_cast %137 : vector<128xf32> to vector<1x128xf32>
    %139 = vector.broadcast %138 : vector<1x128xf32> to vector<8x128xf32>
    %140 = arith.cmpf oeq, %136, %139 : vector<8x128xf32>
    %cst_42 = arith.constant -3.000000e+38 : f32
    %141 = vector.broadcast %cst_42 : f32 to vector<8x128xf32>
    %142 = arith.select %140, %141, %136 : vector<8x128xi1>, vector<8x128xf32>
    %143 = vector.broadcast %138 : vector<1x128xf32> to vector<16x128xf32>
    %144 = arith.mulf %143, %37 : vector<16x128xf32>
    %145 = arith.addf %41, %144 : vector<16x128xf32>
    %cst_43 = arith.constant dense<0xFF800000> : vector<128xf32>
    %146 = vector.multi_reduction <maximumf>, %142, %cst_43 [0] : vector<8x128xf32> to vector<128xf32>
    %147 = vector.shape_cast %146 : vector<128xf32> to vector<1x128xf32>
    %148 = vector.broadcast %147 : vector<1x128xf32> to vector<8x128xf32>
    %149 = arith.cmpf oeq, %142, %148 : vector<8x128xf32>
    %cst_44 = arith.constant -3.000000e+38 : f32
    %150 = vector.broadcast %cst_44 : f32 to vector<8x128xf32>
    %151 = arith.select %149, %150, %142 : vector<8x128xi1>, vector<8x128xf32>
    %152 = vector.broadcast %147 : vector<1x128xf32> to vector<16x128xf32>
    %153 = arith.mulf %152, %38 : vector<16x128xf32>
    %154 = arith.addf %145, %153 : vector<16x128xf32>
    %cst_45 = arith.constant dense<0xFF800000> : vector<128xf32>
    %155 = vector.multi_reduction <maximumf>, %151, %cst_45 [0] : vector<8x128xf32> to vector<128xf32>
    %156 = vector.shape_cast %155 : vector<128xf32> to vector<1x128xf32>
    %157 = vector.broadcast %156 : vector<1x128xf32> to vector<8x128xf32>
    %158 = arith.cmpf oeq, %151, %157 : vector<8x128xf32>
    %cst_46 = arith.constant -3.000000e+38 : f32
    %159 = vector.broadcast %cst_46 : f32 to vector<8x128xf32>
    %160 = arith.select %158, %159, %151 : vector<8x128xi1>, vector<8x128xf32>
    %161 = vector.broadcast %156 : vector<1x128xf32> to vector<16x128xf32>
    %162 = arith.mulf %161, %39 : vector<16x128xf32>
    %163 = arith.addf %154, %162 : vector<16x128xf32>
    %cst_47 = arith.constant dense<0xFF800000> : vector<128xf32>
    %164 = vector.multi_reduction <maximumf>, %160, %cst_47 [0] : vector<8x128xf32> to vector<128xf32>
    %165 = vector.shape_cast %164 : vector<128xf32> to vector<1x128xf32>
    %166 = vector.broadcast %165 : vector<1x128xf32> to vector<16x128xf32>
    %167 = arith.mulf %166, %40 : vector<16x128xf32>
    %168 = arith.addf %163, %167 : vector<16x128xf32>
    %cst_48 = arith.constant 2.000000e+01 : f32
    %169 = vector.broadcast %cst_48 : f32 to vector<16x128xf32>
    %170 = arith.cmpf ogt, %168, %169 : vector<16x128xf32>
    %cst_49 = arith.constant 2.000000e+01 : f32
    %171 = vector.broadcast %cst_49 : f32 to vector<16x128xf32>
    %172 = arith.minimumf %168, %171 : vector<16x128xf32>
    %173 = math.exp %172 : vector<16x128xf32>
    %174 = math.log1p %173 : vector<16x128xf32>
    %175 = arith.select %170, %168, %174 : vector<16x128xi1>, vector<16x128xf32>
    %176 = arith.mulf %175, %42 : vector<16x128xf32>
    %cst_50 = arith.constant dense<0.000000e+00> : vector<128xf32>
    %177 = vector.multi_reduction <add>, %176, %cst_50 [0] : vector<16x128xf32> to vector<128xf32>
    %178 = vector.shape_cast %177 : vector<128xf32> to vector<1x128xf32>
    %179 = arith.addf %178, %44 : vector<1x128xf32>
    %cst_51 = arith.constant 2.000000e+01 : f32
    %180 = vector.broadcast %cst_51 : f32 to vector<1x128xf32>
    %181 = arith.cmpf ogt, %179, %180 : vector<1x128xf32>
    %cst_52 = arith.constant 2.000000e+01 : f32
    %182 = vector.broadcast %cst_52 : f32 to vector<1x128xf32>
    %183 = arith.minimumf %179, %182 : vector<1x128xf32>
    %184 = math.exp %183 : vector<1x128xf32>
    %185 = math.log1p %184 : vector<1x128xf32>
    %186 = arith.select %181, %179, %185 : vector<1x128xi1>, vector<1x128xf32>
    %187 = vector.extract_strided_slice %28 {offsets = [1, 0], sizes = [1, 128], strides = [1, 1]} : vector<8x128xf32> to vector<1x128xf32>
    %188 = arith.mulf %186, %187 : vector<1x128xf32>
    %189 = arith.addf %119, %188 : vector<1x128xf32>
    %190 = vector.extract_strided_slice %1 {offsets = [2, 0, 0], sizes = [1, 32, 128], strides = [1, 1, 1]} : vector<8x32x128xf32> to vector<1x32x128xf32>
    %191 = vector.shape_cast %190 : vector<1x32x128xf32> to vector<32x128xf32>
    %192 = vector.shape_cast %191 : vector<32x128xf32> to vector<1x32x128xf32>
    %193 = vector.broadcast %192 : vector<1x32x128xf32> to vector<8x32x128xf32>
    %194 = arith.mulf %193, %3 : vector<8x32x128xf32>
    %cst_53 = arith.constant dense<0.000000e+00> : vector<8x128xf32>
    %195 = vector.multi_reduction <add>, %194, %cst_53 [1] : vector<8x32x128xf32> to vector<8x128xf32>
    %196 = vector.extract_strided_slice %8 {offsets = [2, 0], sizes = [1, 128], strides = [1, 1]} : vector<8x128xf32> to vector<1x128xf32>
    %197 = vector.broadcast %196 : vector<1x128xf32> to vector<8x128xf32>
    %198 = arith.mulf %195, %197 : vector<8x128xf32>
    %199 = arith.mulf %198, %13 : vector<8x128xf32>
    %c2_i32 = arith.constant 2 : i32
    %200 = vector.broadcast %c2_i32 : i32 to vector<1x128xi32>
    %201 = arith.cmpi sle, %29, %200 : vector<1x128xi32>
    %202 = vector.broadcast %201 : vector<1x128xi1> to vector<8x128xi1>
    %203 = arith.ori %33, %202 : vector<8x128xi1>
    %cst_54 = arith.constant 0.000000e+00 : f32
    %204 = vector.broadcast %cst_54 : f32 to vector<8x128xf32>
    %205 = arith.select %203, %204, %199 : vector<8x128xi1>, vector<8x128xf32>
    %206 = arith.subf %205, %36 : vector<8x128xf32>
    %cst_55 = arith.constant dense<0xFF800000> : vector<128xf32>
    %207 = vector.multi_reduction <maximumf>, %206, %cst_55 [0] : vector<8x128xf32> to vector<128xf32>
    %208 = vector.shape_cast %207 : vector<128xf32> to vector<1x128xf32>
    %209 = vector.broadcast %208 : vector<1x128xf32> to vector<8x128xf32>
    %210 = arith.cmpf oeq, %206, %209 : vector<8x128xf32>
    %cst_56 = arith.constant -3.000000e+38 : f32
    %211 = vector.broadcast %cst_56 : f32 to vector<8x128xf32>
    %212 = arith.select %210, %211, %206 : vector<8x128xi1>, vector<8x128xf32>
    %213 = vector.broadcast %208 : vector<1x128xf32> to vector<16x128xf32>
    %214 = arith.mulf %213, %37 : vector<16x128xf32>
    %215 = arith.addf %41, %214 : vector<16x128xf32>
    %cst_57 = arith.constant dense<0xFF800000> : vector<128xf32>
    %216 = vector.multi_reduction <maximumf>, %212, %cst_57 [0] : vector<8x128xf32> to vector<128xf32>
    %217 = vector.shape_cast %216 : vector<128xf32> to vector<1x128xf32>
    %218 = vector.broadcast %217 : vector<1x128xf32> to vector<8x128xf32>
    %219 = arith.cmpf oeq, %212, %218 : vector<8x128xf32>
    %cst_58 = arith.constant -3.000000e+38 : f32
    %220 = vector.broadcast %cst_58 : f32 to vector<8x128xf32>
    %221 = arith.select %219, %220, %212 : vector<8x128xi1>, vector<8x128xf32>
    %222 = vector.broadcast %217 : vector<1x128xf32> to vector<16x128xf32>
    %223 = arith.mulf %222, %38 : vector<16x128xf32>
    %224 = arith.addf %215, %223 : vector<16x128xf32>
    %cst_59 = arith.constant dense<0xFF800000> : vector<128xf32>
    %225 = vector.multi_reduction <maximumf>, %221, %cst_59 [0] : vector<8x128xf32> to vector<128xf32>
    %226 = vector.shape_cast %225 : vector<128xf32> to vector<1x128xf32>
    %227 = vector.broadcast %226 : vector<1x128xf32> to vector<8x128xf32>
    %228 = arith.cmpf oeq, %221, %227 : vector<8x128xf32>
    %cst_60 = arith.constant -3.000000e+38 : f32
    %229 = vector.broadcast %cst_60 : f32 to vector<8x128xf32>
    %230 = arith.select %228, %229, %221 : vector<8x128xi1>, vector<8x128xf32>
    %231 = vector.broadcast %226 : vector<1x128xf32> to vector<16x128xf32>
    %232 = arith.mulf %231, %39 : vector<16x128xf32>
    %233 = arith.addf %224, %232 : vector<16x128xf32>
    %cst_61 = arith.constant dense<0xFF800000> : vector<128xf32>
    %234 = vector.multi_reduction <maximumf>, %230, %cst_61 [0] : vector<8x128xf32> to vector<128xf32>
    %235 = vector.shape_cast %234 : vector<128xf32> to vector<1x128xf32>
    %236 = vector.broadcast %235 : vector<1x128xf32> to vector<16x128xf32>
    %237 = arith.mulf %236, %40 : vector<16x128xf32>
    %238 = arith.addf %233, %237 : vector<16x128xf32>
    %cst_62 = arith.constant 2.000000e+01 : f32
    %239 = vector.broadcast %cst_62 : f32 to vector<16x128xf32>
    %240 = arith.cmpf ogt, %238, %239 : vector<16x128xf32>
    %cst_63 = arith.constant 2.000000e+01 : f32
    %241 = vector.broadcast %cst_63 : f32 to vector<16x128xf32>
    %242 = arith.minimumf %238, %241 : vector<16x128xf32>
    %243 = math.exp %242 : vector<16x128xf32>
    %244 = math.log1p %243 : vector<16x128xf32>
    %245 = arith.select %240, %238, %244 : vector<16x128xi1>, vector<16x128xf32>
    %246 = arith.mulf %245, %42 : vector<16x128xf32>
    %cst_64 = arith.constant dense<0.000000e+00> : vector<128xf32>
    %247 = vector.multi_reduction <add>, %246, %cst_64 [0] : vector<16x128xf32> to vector<128xf32>
    %248 = vector.shape_cast %247 : vector<128xf32> to vector<1x128xf32>
    %249 = arith.addf %248, %44 : vector<1x128xf32>
    %cst_65 = arith.constant 2.000000e+01 : f32
    %250 = vector.broadcast %cst_65 : f32 to vector<1x128xf32>
    %251 = arith.cmpf ogt, %249, %250 : vector<1x128xf32>
    %cst_66 = arith.constant 2.000000e+01 : f32
    %252 = vector.broadcast %cst_66 : f32 to vector<1x128xf32>
    %253 = arith.minimumf %249, %252 : vector<1x128xf32>
    %254 = math.exp %253 : vector<1x128xf32>
    %255 = math.log1p %254 : vector<1x128xf32>
    %256 = arith.select %251, %249, %255 : vector<1x128xi1>, vector<1x128xf32>
    %257 = vector.extract_strided_slice %28 {offsets = [2, 0], sizes = [1, 128], strides = [1, 1]} : vector<8x128xf32> to vector<1x128xf32>
    %258 = arith.mulf %256, %257 : vector<1x128xf32>
    %259 = arith.addf %189, %258 : vector<1x128xf32>
    %260 = vector.extract_strided_slice %1 {offsets = [3, 0, 0], sizes = [1, 32, 128], strides = [1, 1, 1]} : vector<8x32x128xf32> to vector<1x32x128xf32>
    %261 = vector.shape_cast %260 : vector<1x32x128xf32> to vector<32x128xf32>
    %262 = vector.shape_cast %261 : vector<32x128xf32> to vector<1x32x128xf32>
    %263 = vector.broadcast %262 : vector<1x32x128xf32> to vector<8x32x128xf32>
    %264 = arith.mulf %263, %3 : vector<8x32x128xf32>
    %cst_67 = arith.constant dense<0.000000e+00> : vector<8x128xf32>
    %265 = vector.multi_reduction <add>, %264, %cst_67 [1] : vector<8x32x128xf32> to vector<8x128xf32>
    %266 = vector.extract_strided_slice %8 {offsets = [3, 0], sizes = [1, 128], strides = [1, 1]} : vector<8x128xf32> to vector<1x128xf32>
    %267 = vector.broadcast %266 : vector<1x128xf32> to vector<8x128xf32>
    %268 = arith.mulf %265, %267 : vector<8x128xf32>
    %269 = arith.mulf %268, %13 : vector<8x128xf32>
    %c3_i32 = arith.constant 3 : i32
    %270 = vector.broadcast %c3_i32 : i32 to vector<1x128xi32>
    %271 = arith.cmpi sle, %29, %270 : vector<1x128xi32>
    %272 = vector.broadcast %271 : vector<1x128xi1> to vector<8x128xi1>
    %273 = arith.ori %33, %272 : vector<8x128xi1>
    %cst_68 = arith.constant 0.000000e+00 : f32
    %274 = vector.broadcast %cst_68 : f32 to vector<8x128xf32>
    %275 = arith.select %273, %274, %269 : vector<8x128xi1>, vector<8x128xf32>
    %276 = arith.subf %275, %36 : vector<8x128xf32>
    %cst_69 = arith.constant dense<0xFF800000> : vector<128xf32>
    %277 = vector.multi_reduction <maximumf>, %276, %cst_69 [0] : vector<8x128xf32> to vector<128xf32>
    %278 = vector.shape_cast %277 : vector<128xf32> to vector<1x128xf32>
    %279 = vector.broadcast %278 : vector<1x128xf32> to vector<8x128xf32>
    %280 = arith.cmpf oeq, %276, %279 : vector<8x128xf32>
    %cst_70 = arith.constant -3.000000e+38 : f32
    %281 = vector.broadcast %cst_70 : f32 to vector<8x128xf32>
    %282 = arith.select %280, %281, %276 : vector<8x128xi1>, vector<8x128xf32>
    %283 = vector.broadcast %278 : vector<1x128xf32> to vector<16x128xf32>
    %284 = arith.mulf %283, %37 : vector<16x128xf32>
    %285 = arith.addf %41, %284 : vector<16x128xf32>
    %cst_71 = arith.constant dense<0xFF800000> : vector<128xf32>
    %286 = vector.multi_reduction <maximumf>, %282, %cst_71 [0] : vector<8x128xf32> to vector<128xf32>
    %287 = vector.shape_cast %286 : vector<128xf32> to vector<1x128xf32>
    %288 = vector.broadcast %287 : vector<1x128xf32> to vector<8x128xf32>
    %289 = arith.cmpf oeq, %282, %288 : vector<8x128xf32>
    %cst_72 = arith.constant -3.000000e+38 : f32
    %290 = vector.broadcast %cst_72 : f32 to vector<8x128xf32>
    %291 = arith.select %289, %290, %282 : vector<8x128xi1>, vector<8x128xf32>
    %292 = vector.broadcast %287 : vector<1x128xf32> to vector<16x128xf32>
    %293 = arith.mulf %292, %38 : vector<16x128xf32>
    %294 = arith.addf %285, %293 : vector<16x128xf32>
    %cst_73 = arith.constant dense<0xFF800000> : vector<128xf32>
    %295 = vector.multi_reduction <maximumf>, %291, %cst_73 [0] : vector<8x128xf32> to vector<128xf32>
    %296 = vector.shape_cast %295 : vector<128xf32> to vector<1x128xf32>
    %297 = vector.broadcast %296 : vector<1x128xf32> to vector<8x128xf32>
    %298 = arith.cmpf oeq, %291, %297 : vector<8x128xf32>
    %cst_74 = arith.constant -3.000000e+38 : f32
    %299 = vector.broadcast %cst_74 : f32 to vector<8x128xf32>
    %300 = arith.select %298, %299, %291 : vector<8x128xi1>, vector<8x128xf32>
    %301 = vector.broadcast %296 : vector<1x128xf32> to vector<16x128xf32>
    %302 = arith.mulf %301, %39 : vector<16x128xf32>
    %303 = arith.addf %294, %302 : vector<16x128xf32>
    %cst_75 = arith.constant dense<0xFF800000> : vector<128xf32>
    %304 = vector.multi_reduction <maximumf>, %300, %cst_75 [0] : vector<8x128xf32> to vector<128xf32>
    %305 = vector.shape_cast %304 : vector<128xf32> to vector<1x128xf32>
    %306 = vector.broadcast %305 : vector<1x128xf32> to vector<16x128xf32>
    %307 = arith.mulf %306, %40 : vector<16x128xf32>
    %308 = arith.addf %303, %307 : vector<16x128xf32>
    %cst_76 = arith.constant 2.000000e+01 : f32
    %309 = vector.broadcast %cst_76 : f32 to vector<16x128xf32>
    %310 = arith.cmpf ogt, %308, %309 : vector<16x128xf32>
    %cst_77 = arith.constant 2.000000e+01 : f32
    %311 = vector.broadcast %cst_77 : f32 to vector<16x128xf32>
    %312 = arith.minimumf %308, %311 : vector<16x128xf32>
    %313 = math.exp %312 : vector<16x128xf32>
    %314 = math.log1p %313 : vector<16x128xf32>
    %315 = arith.select %310, %308, %314 : vector<16x128xi1>, vector<16x128xf32>
    %316 = arith.mulf %315, %42 : vector<16x128xf32>
    %cst_78 = arith.constant dense<0.000000e+00> : vector<128xf32>
    %317 = vector.multi_reduction <add>, %316, %cst_78 [0] : vector<16x128xf32> to vector<128xf32>
    %318 = vector.shape_cast %317 : vector<128xf32> to vector<1x128xf32>
    %319 = arith.addf %318, %44 : vector<1x128xf32>
    %cst_79 = arith.constant 2.000000e+01 : f32
    %320 = vector.broadcast %cst_79 : f32 to vector<1x128xf32>
    %321 = arith.cmpf ogt, %319, %320 : vector<1x128xf32>
    %cst_80 = arith.constant 2.000000e+01 : f32
    %322 = vector.broadcast %cst_80 : f32 to vector<1x128xf32>
    %323 = arith.minimumf %319, %322 : vector<1x128xf32>
    %324 = math.exp %323 : vector<1x128xf32>
    %325 = math.log1p %324 : vector<1x128xf32>
    %326 = arith.select %321, %319, %325 : vector<1x128xi1>, vector<1x128xf32>
    %327 = vector.extract_strided_slice %28 {offsets = [3, 0], sizes = [1, 128], strides = [1, 1]} : vector<8x128xf32> to vector<1x128xf32>
    %328 = arith.mulf %326, %327 : vector<1x128xf32>
    %329 = arith.addf %259, %328 : vector<1x128xf32>
    %330 = vector.extract_strided_slice %1 {offsets = [4, 0, 0], sizes = [1, 32, 128], strides = [1, 1, 1]} : vector<8x32x128xf32> to vector<1x32x128xf32>
    %331 = vector.shape_cast %330 : vector<1x32x128xf32> to vector<32x128xf32>
    %332 = vector.shape_cast %331 : vector<32x128xf32> to vector<1x32x128xf32>
    %333 = vector.broadcast %332 : vector<1x32x128xf32> to vector<8x32x128xf32>
    %334 = arith.mulf %333, %3 : vector<8x32x128xf32>
    %cst_81 = arith.constant dense<0.000000e+00> : vector<8x128xf32>
    %335 = vector.multi_reduction <add>, %334, %cst_81 [1] : vector<8x32x128xf32> to vector<8x128xf32>
    %336 = vector.extract_strided_slice %8 {offsets = [4, 0], sizes = [1, 128], strides = [1, 1]} : vector<8x128xf32> to vector<1x128xf32>
    %337 = vector.broadcast %336 : vector<1x128xf32> to vector<8x128xf32>
    %338 = arith.mulf %335, %337 : vector<8x128xf32>
    %339 = arith.mulf %338, %13 : vector<8x128xf32>
    %c4_i32 = arith.constant 4 : i32
    %340 = vector.broadcast %c4_i32 : i32 to vector<1x128xi32>
    %341 = arith.cmpi sle, %29, %340 : vector<1x128xi32>
    %342 = vector.broadcast %341 : vector<1x128xi1> to vector<8x128xi1>
    %343 = arith.ori %33, %342 : vector<8x128xi1>
    %cst_82 = arith.constant 0.000000e+00 : f32
    %344 = vector.broadcast %cst_82 : f32 to vector<8x128xf32>
    %345 = arith.select %343, %344, %339 : vector<8x128xi1>, vector<8x128xf32>
    %346 = arith.subf %345, %36 : vector<8x128xf32>
    %cst_83 = arith.constant dense<0xFF800000> : vector<128xf32>
    %347 = vector.multi_reduction <maximumf>, %346, %cst_83 [0] : vector<8x128xf32> to vector<128xf32>
    %348 = vector.shape_cast %347 : vector<128xf32> to vector<1x128xf32>
    %349 = vector.broadcast %348 : vector<1x128xf32> to vector<8x128xf32>
    %350 = arith.cmpf oeq, %346, %349 : vector<8x128xf32>
    %cst_84 = arith.constant -3.000000e+38 : f32
    %351 = vector.broadcast %cst_84 : f32 to vector<8x128xf32>
    %352 = arith.select %350, %351, %346 : vector<8x128xi1>, vector<8x128xf32>
    %353 = vector.broadcast %348 : vector<1x128xf32> to vector<16x128xf32>
    %354 = arith.mulf %353, %37 : vector<16x128xf32>
    %355 = arith.addf %41, %354 : vector<16x128xf32>
    %cst_85 = arith.constant dense<0xFF800000> : vector<128xf32>
    %356 = vector.multi_reduction <maximumf>, %352, %cst_85 [0] : vector<8x128xf32> to vector<128xf32>
    %357 = vector.shape_cast %356 : vector<128xf32> to vector<1x128xf32>
    %358 = vector.broadcast %357 : vector<1x128xf32> to vector<8x128xf32>
    %359 = arith.cmpf oeq, %352, %358 : vector<8x128xf32>
    %cst_86 = arith.constant -3.000000e+38 : f32
    %360 = vector.broadcast %cst_86 : f32 to vector<8x128xf32>
    %361 = arith.select %359, %360, %352 : vector<8x128xi1>, vector<8x128xf32>
    %362 = vector.broadcast %357 : vector<1x128xf32> to vector<16x128xf32>
    %363 = arith.mulf %362, %38 : vector<16x128xf32>
    %364 = arith.addf %355, %363 : vector<16x128xf32>
    %cst_87 = arith.constant dense<0xFF800000> : vector<128xf32>
    %365 = vector.multi_reduction <maximumf>, %361, %cst_87 [0] : vector<8x128xf32> to vector<128xf32>
    %366 = vector.shape_cast %365 : vector<128xf32> to vector<1x128xf32>
    %367 = vector.broadcast %366 : vector<1x128xf32> to vector<8x128xf32>
    %368 = arith.cmpf oeq, %361, %367 : vector<8x128xf32>
    %cst_88 = arith.constant -3.000000e+38 : f32
    %369 = vector.broadcast %cst_88 : f32 to vector<8x128xf32>
    %370 = arith.select %368, %369, %361 : vector<8x128xi1>, vector<8x128xf32>
    %371 = vector.broadcast %366 : vector<1x128xf32> to vector<16x128xf32>
    %372 = arith.mulf %371, %39 : vector<16x128xf32>
    %373 = arith.addf %364, %372 : vector<16x128xf32>
    %cst_89 = arith.constant dense<0xFF800000> : vector<128xf32>
    %374 = vector.multi_reduction <maximumf>, %370, %cst_89 [0] : vector<8x128xf32> to vector<128xf32>
    %375 = vector.shape_cast %374 : vector<128xf32> to vector<1x128xf32>
    %376 = vector.broadcast %375 : vector<1x128xf32> to vector<16x128xf32>
    %377 = arith.mulf %376, %40 : vector<16x128xf32>
    %378 = arith.addf %373, %377 : vector<16x128xf32>
    %cst_90 = arith.constant 2.000000e+01 : f32
    %379 = vector.broadcast %cst_90 : f32 to vector<16x128xf32>
    %380 = arith.cmpf ogt, %378, %379 : vector<16x128xf32>
    %cst_91 = arith.constant 2.000000e+01 : f32
    %381 = vector.broadcast %cst_91 : f32 to vector<16x128xf32>
    %382 = arith.minimumf %378, %381 : vector<16x128xf32>
    %383 = math.exp %382 : vector<16x128xf32>
    %384 = math.log1p %383 : vector<16x128xf32>
    %385 = arith.select %380, %378, %384 : vector<16x128xi1>, vector<16x128xf32>
    %386 = arith.mulf %385, %42 : vector<16x128xf32>
    %cst_92 = arith.constant dense<0.000000e+00> : vector<128xf32>
    %387 = vector.multi_reduction <add>, %386, %cst_92 [0] : vector<16x128xf32> to vector<128xf32>
    %388 = vector.shape_cast %387 : vector<128xf32> to vector<1x128xf32>
    %389 = arith.addf %388, %44 : vector<1x128xf32>
    %cst_93 = arith.constant 2.000000e+01 : f32
    %390 = vector.broadcast %cst_93 : f32 to vector<1x128xf32>
    %391 = arith.cmpf ogt, %389, %390 : vector<1x128xf32>
    %cst_94 = arith.constant 2.000000e+01 : f32
    %392 = vector.broadcast %cst_94 : f32 to vector<1x128xf32>
    %393 = arith.minimumf %389, %392 : vector<1x128xf32>
    %394 = math.exp %393 : vector<1x128xf32>
    %395 = math.log1p %394 : vector<1x128xf32>
    %396 = arith.select %391, %389, %395 : vector<1x128xi1>, vector<1x128xf32>
    %397 = vector.extract_strided_slice %28 {offsets = [4, 0], sizes = [1, 128], strides = [1, 1]} : vector<8x128xf32> to vector<1x128xf32>
    %398 = arith.mulf %396, %397 : vector<1x128xf32>
    %399 = arith.addf %329, %398 : vector<1x128xf32>
    %400 = vector.extract_strided_slice %1 {offsets = [5, 0, 0], sizes = [1, 32, 128], strides = [1, 1, 1]} : vector<8x32x128xf32> to vector<1x32x128xf32>
    %401 = vector.shape_cast %400 : vector<1x32x128xf32> to vector<32x128xf32>
    %402 = vector.shape_cast %401 : vector<32x128xf32> to vector<1x32x128xf32>
    %403 = vector.broadcast %402 : vector<1x32x128xf32> to vector<8x32x128xf32>
    %404 = arith.mulf %403, %3 : vector<8x32x128xf32>
    %cst_95 = arith.constant dense<0.000000e+00> : vector<8x128xf32>
    %405 = vector.multi_reduction <add>, %404, %cst_95 [1] : vector<8x32x128xf32> to vector<8x128xf32>
    %406 = vector.extract_strided_slice %8 {offsets = [5, 0], sizes = [1, 128], strides = [1, 1]} : vector<8x128xf32> to vector<1x128xf32>
    %407 = vector.broadcast %406 : vector<1x128xf32> to vector<8x128xf32>
    %408 = arith.mulf %405, %407 : vector<8x128xf32>
    %409 = arith.mulf %408, %13 : vector<8x128xf32>
    %c5_i32 = arith.constant 5 : i32
    %410 = vector.broadcast %c5_i32 : i32 to vector<1x128xi32>
    %411 = arith.cmpi sle, %29, %410 : vector<1x128xi32>
    %412 = vector.broadcast %411 : vector<1x128xi1> to vector<8x128xi1>
    %413 = arith.ori %33, %412 : vector<8x128xi1>
    %cst_96 = arith.constant 0.000000e+00 : f32
    %414 = vector.broadcast %cst_96 : f32 to vector<8x128xf32>
    %415 = arith.select %413, %414, %409 : vector<8x128xi1>, vector<8x128xf32>
    %416 = arith.subf %415, %36 : vector<8x128xf32>
    %cst_97 = arith.constant dense<0xFF800000> : vector<128xf32>
    %417 = vector.multi_reduction <maximumf>, %416, %cst_97 [0] : vector<8x128xf32> to vector<128xf32>
    %418 = vector.shape_cast %417 : vector<128xf32> to vector<1x128xf32>
    %419 = vector.broadcast %418 : vector<1x128xf32> to vector<8x128xf32>
    %420 = arith.cmpf oeq, %416, %419 : vector<8x128xf32>
    %cst_98 = arith.constant -3.000000e+38 : f32
    %421 = vector.broadcast %cst_98 : f32 to vector<8x128xf32>
    %422 = arith.select %420, %421, %416 : vector<8x128xi1>, vector<8x128xf32>
    %423 = vector.broadcast %418 : vector<1x128xf32> to vector<16x128xf32>
    %424 = arith.mulf %423, %37 : vector<16x128xf32>
    %425 = arith.addf %41, %424 : vector<16x128xf32>
    %cst_99 = arith.constant dense<0xFF800000> : vector<128xf32>
    %426 = vector.multi_reduction <maximumf>, %422, %cst_99 [0] : vector<8x128xf32> to vector<128xf32>
    %427 = vector.shape_cast %426 : vector<128xf32> to vector<1x128xf32>
    %428 = vector.broadcast %427 : vector<1x128xf32> to vector<8x128xf32>
    %429 = arith.cmpf oeq, %422, %428 : vector<8x128xf32>
    %cst_100 = arith.constant -3.000000e+38 : f32
    %430 = vector.broadcast %cst_100 : f32 to vector<8x128xf32>
    %431 = arith.select %429, %430, %422 : vector<8x128xi1>, vector<8x128xf32>
    %432 = vector.broadcast %427 : vector<1x128xf32> to vector<16x128xf32>
    %433 = arith.mulf %432, %38 : vector<16x128xf32>
    %434 = arith.addf %425, %433 : vector<16x128xf32>
    %cst_101 = arith.constant dense<0xFF800000> : vector<128xf32>
    %435 = vector.multi_reduction <maximumf>, %431, %cst_101 [0] : vector<8x128xf32> to vector<128xf32>
    %436 = vector.shape_cast %435 : vector<128xf32> to vector<1x128xf32>
    %437 = vector.broadcast %436 : vector<1x128xf32> to vector<8x128xf32>
    %438 = arith.cmpf oeq, %431, %437 : vector<8x128xf32>
    %cst_102 = arith.constant -3.000000e+38 : f32
    %439 = vector.broadcast %cst_102 : f32 to vector<8x128xf32>
    %440 = arith.select %438, %439, %431 : vector<8x128xi1>, vector<8x128xf32>
    %441 = vector.broadcast %436 : vector<1x128xf32> to vector<16x128xf32>
    %442 = arith.mulf %441, %39 : vector<16x128xf32>
    %443 = arith.addf %434, %442 : vector<16x128xf32>
    %cst_103 = arith.constant dense<0xFF800000> : vector<128xf32>
    %444 = vector.multi_reduction <maximumf>, %440, %cst_103 [0] : vector<8x128xf32> to vector<128xf32>
    %445 = vector.shape_cast %444 : vector<128xf32> to vector<1x128xf32>
    %446 = vector.broadcast %445 : vector<1x128xf32> to vector<16x128xf32>
    %447 = arith.mulf %446, %40 : vector<16x128xf32>
    %448 = arith.addf %443, %447 : vector<16x128xf32>
    %cst_104 = arith.constant 2.000000e+01 : f32
    %449 = vector.broadcast %cst_104 : f32 to vector<16x128xf32>
    %450 = arith.cmpf ogt, %448, %449 : vector<16x128xf32>
    %cst_105 = arith.constant 2.000000e+01 : f32
    %451 = vector.broadcast %cst_105 : f32 to vector<16x128xf32>
    %452 = arith.minimumf %448, %451 : vector<16x128xf32>
    %453 = math.exp %452 : vector<16x128xf32>
    %454 = math.log1p %453 : vector<16x128xf32>
    %455 = arith.select %450, %448, %454 : vector<16x128xi1>, vector<16x128xf32>
    %456 = arith.mulf %455, %42 : vector<16x128xf32>
    %cst_106 = arith.constant dense<0.000000e+00> : vector<128xf32>
    %457 = vector.multi_reduction <add>, %456, %cst_106 [0] : vector<16x128xf32> to vector<128xf32>
    %458 = vector.shape_cast %457 : vector<128xf32> to vector<1x128xf32>
    %459 = arith.addf %458, %44 : vector<1x128xf32>
    %cst_107 = arith.constant 2.000000e+01 : f32
    %460 = vector.broadcast %cst_107 : f32 to vector<1x128xf32>
    %461 = arith.cmpf ogt, %459, %460 : vector<1x128xf32>
    %cst_108 = arith.constant 2.000000e+01 : f32
    %462 = vector.broadcast %cst_108 : f32 to vector<1x128xf32>
    %463 = arith.minimumf %459, %462 : vector<1x128xf32>
    %464 = math.exp %463 : vector<1x128xf32>
    %465 = math.log1p %464 : vector<1x128xf32>
    %466 = arith.select %461, %459, %465 : vector<1x128xi1>, vector<1x128xf32>
    %467 = vector.extract_strided_slice %28 {offsets = [5, 0], sizes = [1, 128], strides = [1, 1]} : vector<8x128xf32> to vector<1x128xf32>
    %468 = arith.mulf %466, %467 : vector<1x128xf32>
    %469 = arith.addf %399, %468 : vector<1x128xf32>
    %470 = vector.extract_strided_slice %1 {offsets = [6, 0, 0], sizes = [1, 32, 128], strides = [1, 1, 1]} : vector<8x32x128xf32> to vector<1x32x128xf32>
    %471 = vector.shape_cast %470 : vector<1x32x128xf32> to vector<32x128xf32>
    %472 = vector.shape_cast %471 : vector<32x128xf32> to vector<1x32x128xf32>
    %473 = vector.broadcast %472 : vector<1x32x128xf32> to vector<8x32x128xf32>
    %474 = arith.mulf %473, %3 : vector<8x32x128xf32>
    %cst_109 = arith.constant dense<0.000000e+00> : vector<8x128xf32>
    %475 = vector.multi_reduction <add>, %474, %cst_109 [1] : vector<8x32x128xf32> to vector<8x128xf32>
    %476 = vector.extract_strided_slice %8 {offsets = [6, 0], sizes = [1, 128], strides = [1, 1]} : vector<8x128xf32> to vector<1x128xf32>
    %477 = vector.broadcast %476 : vector<1x128xf32> to vector<8x128xf32>
    %478 = arith.mulf %475, %477 : vector<8x128xf32>
    %479 = arith.mulf %478, %13 : vector<8x128xf32>
    %c6_i32 = arith.constant 6 : i32
    %480 = vector.broadcast %c6_i32 : i32 to vector<1x128xi32>
    %481 = arith.cmpi sle, %29, %480 : vector<1x128xi32>
    %482 = vector.broadcast %481 : vector<1x128xi1> to vector<8x128xi1>
    %483 = arith.ori %33, %482 : vector<8x128xi1>
    %cst_110 = arith.constant 0.000000e+00 : f32
    %484 = vector.broadcast %cst_110 : f32 to vector<8x128xf32>
    %485 = arith.select %483, %484, %479 : vector<8x128xi1>, vector<8x128xf32>
    %486 = arith.subf %485, %36 : vector<8x128xf32>
    %cst_111 = arith.constant dense<0xFF800000> : vector<128xf32>
    %487 = vector.multi_reduction <maximumf>, %486, %cst_111 [0] : vector<8x128xf32> to vector<128xf32>
    %488 = vector.shape_cast %487 : vector<128xf32> to vector<1x128xf32>
    %489 = vector.broadcast %488 : vector<1x128xf32> to vector<8x128xf32>
    %490 = arith.cmpf oeq, %486, %489 : vector<8x128xf32>
    %cst_112 = arith.constant -3.000000e+38 : f32
    %491 = vector.broadcast %cst_112 : f32 to vector<8x128xf32>
    %492 = arith.select %490, %491, %486 : vector<8x128xi1>, vector<8x128xf32>
    %493 = vector.broadcast %488 : vector<1x128xf32> to vector<16x128xf32>
    %494 = arith.mulf %493, %37 : vector<16x128xf32>
    %495 = arith.addf %41, %494 : vector<16x128xf32>
    %cst_113 = arith.constant dense<0xFF800000> : vector<128xf32>
    %496 = vector.multi_reduction <maximumf>, %492, %cst_113 [0] : vector<8x128xf32> to vector<128xf32>
    %497 = vector.shape_cast %496 : vector<128xf32> to vector<1x128xf32>
    %498 = vector.broadcast %497 : vector<1x128xf32> to vector<8x128xf32>
    %499 = arith.cmpf oeq, %492, %498 : vector<8x128xf32>
    %cst_114 = arith.constant -3.000000e+38 : f32
    %500 = vector.broadcast %cst_114 : f32 to vector<8x128xf32>
    %501 = arith.select %499, %500, %492 : vector<8x128xi1>, vector<8x128xf32>
    %502 = vector.broadcast %497 : vector<1x128xf32> to vector<16x128xf32>
    %503 = arith.mulf %502, %38 : vector<16x128xf32>
    %504 = arith.addf %495, %503 : vector<16x128xf32>
    %cst_115 = arith.constant dense<0xFF800000> : vector<128xf32>
    %505 = vector.multi_reduction <maximumf>, %501, %cst_115 [0] : vector<8x128xf32> to vector<128xf32>
    %506 = vector.shape_cast %505 : vector<128xf32> to vector<1x128xf32>
    %507 = vector.broadcast %506 : vector<1x128xf32> to vector<8x128xf32>
    %508 = arith.cmpf oeq, %501, %507 : vector<8x128xf32>
    %cst_116 = arith.constant -3.000000e+38 : f32
    %509 = vector.broadcast %cst_116 : f32 to vector<8x128xf32>
    %510 = arith.select %508, %509, %501 : vector<8x128xi1>, vector<8x128xf32>
    %511 = vector.broadcast %506 : vector<1x128xf32> to vector<16x128xf32>
    %512 = arith.mulf %511, %39 : vector<16x128xf32>
    %513 = arith.addf %504, %512 : vector<16x128xf32>
    %cst_117 = arith.constant dense<0xFF800000> : vector<128xf32>
    %514 = vector.multi_reduction <maximumf>, %510, %cst_117 [0] : vector<8x128xf32> to vector<128xf32>
    %515 = vector.shape_cast %514 : vector<128xf32> to vector<1x128xf32>
    %516 = vector.broadcast %515 : vector<1x128xf32> to vector<16x128xf32>
    %517 = arith.mulf %516, %40 : vector<16x128xf32>
    %518 = arith.addf %513, %517 : vector<16x128xf32>
    %cst_118 = arith.constant 2.000000e+01 : f32
    %519 = vector.broadcast %cst_118 : f32 to vector<16x128xf32>
    %520 = arith.cmpf ogt, %518, %519 : vector<16x128xf32>
    %cst_119 = arith.constant 2.000000e+01 : f32
    %521 = vector.broadcast %cst_119 : f32 to vector<16x128xf32>
    %522 = arith.minimumf %518, %521 : vector<16x128xf32>
    %523 = math.exp %522 : vector<16x128xf32>
    %524 = math.log1p %523 : vector<16x128xf32>
    %525 = arith.select %520, %518, %524 : vector<16x128xi1>, vector<16x128xf32>
    %526 = arith.mulf %525, %42 : vector<16x128xf32>
    %cst_120 = arith.constant dense<0.000000e+00> : vector<128xf32>
    %527 = vector.multi_reduction <add>, %526, %cst_120 [0] : vector<16x128xf32> to vector<128xf32>
    %528 = vector.shape_cast %527 : vector<128xf32> to vector<1x128xf32>
    %529 = arith.addf %528, %44 : vector<1x128xf32>
    %cst_121 = arith.constant 2.000000e+01 : f32
    %530 = vector.broadcast %cst_121 : f32 to vector<1x128xf32>
    %531 = arith.cmpf ogt, %529, %530 : vector<1x128xf32>
    %cst_122 = arith.constant 2.000000e+01 : f32
    %532 = vector.broadcast %cst_122 : f32 to vector<1x128xf32>
    %533 = arith.minimumf %529, %532 : vector<1x128xf32>
    %534 = math.exp %533 : vector<1x128xf32>
    %535 = math.log1p %534 : vector<1x128xf32>
    %536 = arith.select %531, %529, %535 : vector<1x128xi1>, vector<1x128xf32>
    %537 = vector.extract_strided_slice %28 {offsets = [6, 0], sizes = [1, 128], strides = [1, 1]} : vector<8x128xf32> to vector<1x128xf32>
    %538 = arith.mulf %536, %537 : vector<1x128xf32>
    %539 = arith.addf %469, %538 : vector<1x128xf32>
    %540 = vector.extract_strided_slice %1 {offsets = [7, 0, 0], sizes = [1, 32, 128], strides = [1, 1, 1]} : vector<8x32x128xf32> to vector<1x32x128xf32>
    %541 = vector.shape_cast %540 : vector<1x32x128xf32> to vector<32x128xf32>
    %542 = vector.shape_cast %541 : vector<32x128xf32> to vector<1x32x128xf32>
    %543 = vector.broadcast %542 : vector<1x32x128xf32> to vector<8x32x128xf32>
    %544 = arith.mulf %543, %3 : vector<8x32x128xf32>
    %cst_123 = arith.constant dense<0.000000e+00> : vector<8x128xf32>
    %545 = vector.multi_reduction <add>, %544, %cst_123 [1] : vector<8x32x128xf32> to vector<8x128xf32>
    %546 = vector.extract_strided_slice %8 {offsets = [7, 0], sizes = [1, 128], strides = [1, 1]} : vector<8x128xf32> to vector<1x128xf32>
    %547 = vector.broadcast %546 : vector<1x128xf32> to vector<8x128xf32>
    %548 = arith.mulf %545, %547 : vector<8x128xf32>
    %549 = arith.mulf %548, %13 : vector<8x128xf32>
    %c7_i32 = arith.constant 7 : i32
    %550 = vector.broadcast %c7_i32 : i32 to vector<1x128xi32>
    %551 = arith.cmpi sle, %29, %550 : vector<1x128xi32>
    %552 = vector.broadcast %551 : vector<1x128xi1> to vector<8x128xi1>
    %553 = arith.ori %33, %552 : vector<8x128xi1>
    %cst_124 = arith.constant 0.000000e+00 : f32
    %554 = vector.broadcast %cst_124 : f32 to vector<8x128xf32>
    %555 = arith.select %553, %554, %549 : vector<8x128xi1>, vector<8x128xf32>
    %556 = arith.subf %555, %36 : vector<8x128xf32>
    %cst_125 = arith.constant dense<0xFF800000> : vector<128xf32>
    %557 = vector.multi_reduction <maximumf>, %556, %cst_125 [0] : vector<8x128xf32> to vector<128xf32>
    %558 = vector.shape_cast %557 : vector<128xf32> to vector<1x128xf32>
    %559 = vector.broadcast %558 : vector<1x128xf32> to vector<8x128xf32>
    %560 = arith.cmpf oeq, %556, %559 : vector<8x128xf32>
    %cst_126 = arith.constant -3.000000e+38 : f32
    %561 = vector.broadcast %cst_126 : f32 to vector<8x128xf32>
    %562 = arith.select %560, %561, %556 : vector<8x128xi1>, vector<8x128xf32>
    %563 = vector.broadcast %558 : vector<1x128xf32> to vector<16x128xf32>
    %564 = arith.mulf %563, %37 : vector<16x128xf32>
    %565 = arith.addf %41, %564 : vector<16x128xf32>
    %cst_127 = arith.constant dense<0xFF800000> : vector<128xf32>
    %566 = vector.multi_reduction <maximumf>, %562, %cst_127 [0] : vector<8x128xf32> to vector<128xf32>
    %567 = vector.shape_cast %566 : vector<128xf32> to vector<1x128xf32>
    %568 = vector.broadcast %567 : vector<1x128xf32> to vector<8x128xf32>
    %569 = arith.cmpf oeq, %562, %568 : vector<8x128xf32>
    %cst_128 = arith.constant -3.000000e+38 : f32
    %570 = vector.broadcast %cst_128 : f32 to vector<8x128xf32>
    %571 = arith.select %569, %570, %562 : vector<8x128xi1>, vector<8x128xf32>
    %572 = vector.broadcast %567 : vector<1x128xf32> to vector<16x128xf32>
    %573 = arith.mulf %572, %38 : vector<16x128xf32>
    %574 = arith.addf %565, %573 : vector<16x128xf32>
    %cst_129 = arith.constant dense<0xFF800000> : vector<128xf32>
    %575 = vector.multi_reduction <maximumf>, %571, %cst_129 [0] : vector<8x128xf32> to vector<128xf32>
    %576 = vector.shape_cast %575 : vector<128xf32> to vector<1x128xf32>
    %577 = vector.broadcast %576 : vector<1x128xf32> to vector<8x128xf32>
    %578 = arith.cmpf oeq, %571, %577 : vector<8x128xf32>
    %cst_130 = arith.constant -3.000000e+38 : f32
    %579 = vector.broadcast %cst_130 : f32 to vector<8x128xf32>
    %580 = arith.select %578, %579, %571 : vector<8x128xi1>, vector<8x128xf32>
    %581 = vector.broadcast %576 : vector<1x128xf32> to vector<16x128xf32>
    %582 = arith.mulf %581, %39 : vector<16x128xf32>
    %583 = arith.addf %574, %582 : vector<16x128xf32>
    %cst_131 = arith.constant dense<0xFF800000> : vector<128xf32>
    %584 = vector.multi_reduction <maximumf>, %580, %cst_131 [0] : vector<8x128xf32> to vector<128xf32>
    %585 = vector.shape_cast %584 : vector<128xf32> to vector<1x128xf32>
    %586 = vector.broadcast %585 : vector<1x128xf32> to vector<16x128xf32>
    %587 = arith.mulf %586, %40 : vector<16x128xf32>
    %588 = arith.addf %583, %587 : vector<16x128xf32>
    %cst_132 = arith.constant 2.000000e+01 : f32
    %589 = vector.broadcast %cst_132 : f32 to vector<16x128xf32>
    %590 = arith.cmpf ogt, %588, %589 : vector<16x128xf32>
    %cst_133 = arith.constant 2.000000e+01 : f32
    %591 = vector.broadcast %cst_133 : f32 to vector<16x128xf32>
    %592 = arith.minimumf %588, %591 : vector<16x128xf32>
    %593 = math.exp %592 : vector<16x128xf32>
    %594 = math.log1p %593 : vector<16x128xf32>
    %595 = arith.select %590, %588, %594 : vector<16x128xi1>, vector<16x128xf32>
    %596 = arith.mulf %595, %42 : vector<16x128xf32>
    %cst_134 = arith.constant dense<0.000000e+00> : vector<128xf32>
    %597 = vector.multi_reduction <add>, %596, %cst_134 [0] : vector<16x128xf32> to vector<128xf32>
    %598 = vector.shape_cast %597 : vector<128xf32> to vector<1x128xf32>
    %599 = arith.addf %598, %44 : vector<1x128xf32>
    %cst_135 = arith.constant 2.000000e+01 : f32
    %600 = vector.broadcast %cst_135 : f32 to vector<1x128xf32>
    %601 = arith.cmpf ogt, %599, %600 : vector<1x128xf32>
    %cst_136 = arith.constant 2.000000e+01 : f32
    %602 = vector.broadcast %cst_136 : f32 to vector<1x128xf32>
    %603 = arith.minimumf %599, %602 : vector<1x128xf32>
    %604 = math.exp %603 : vector<1x128xf32>
    %605 = math.log1p %604 : vector<1x128xf32>
    %606 = arith.select %601, %599, %605 : vector<1x128xi1>, vector<1x128xf32>
    %607 = vector.extract_strided_slice %28 {offsets = [7, 0], sizes = [1, 128], strides = [1, 1]} : vector<8x128xf32> to vector<1x128xf32>
    %608 = arith.mulf %606, %607 : vector<1x128xf32>
    %609 = arith.addf %539, %608 : vector<1x128xf32>
    %610 = arith.mulf %609, %45 : vector<1x128xf32>
    %611 = arith.addf %610, %47 : vector<1x128xf32>
    %612 = arith.mulf %609, %46 : vector<1x128xf32>
    %613 = arith.addf %612, %48 : vector<1x128xf32>
    %614 = arith.maximumf %611, %613 : vector<1x128xf32>
    %615 = arith.subf %611, %614 : vector<1x128xf32>
    %616 = math.exp %615 : vector<1x128xf32>
    %617 = arith.subf %613, %614 : vector<1x128xf32>
    %618 = math.exp %617 : vector<1x128xf32>
    %619 = arith.addf %616, %618 : vector<1x128xf32>
    %620 = arith.divf %616, %619 : vector<1x128xf32>
    %621 = arith.divf %618, %619 : vector<1x128xf32>
    %622 = tpu.concatenate %620, %621 in 0 : vector<1x128xf32>, vector<1x128xf32> -> vector<2x128xf32>
    %c0_137 = arith.constant 0 : index
    %c0_138 = arith.constant 0 : index
    %623 = vector.load %arg5[%c0_137, %c0_138] : memref<2x128xf32, #tpu.memory_space<vmem>>, vector<2x128xf32>
    tpu.vector_store %arg5[%c0_137, %c0_138], %622 {strides = array<i32>} : memref<2x128xf32, #tpu.memory_space<vmem>>, vector<2x128xf32>,
    return
  }
  func.func @transform_0(%arg0: i32) -> (i32, i32, i32) {
    %c0_i32 = arith.constant 0 : i32
    %c0_i32_0 = arith.constant 0 : i32
    %c0_i32_1 = arith.constant 0 : i32
    return %c0_i32, %c0_i32_0, %arg0 : i32, i32, i32
  }
  func.func @transform_1(%arg0: i32) -> (i32, i32, i32) {
    %c0_i32 = arith.constant 0 : i32
    %c0_i32_0 = arith.constant 0 : i32
    %c0_i32_1 = arith.constant 0 : i32
    return %c0_i32, %c0_i32_0, %arg0 : i32, i32, i32
  }
  func.func @transform_2(%arg0: i32) -> (i32, i32) {
    %c0_i32 = arith.constant 0 : i32
    %c0_i32_0 = arith.constant 0 : i32
    return %c0_i32, %arg0 : i32, i32
  }
  func.func @transform_3(%arg0: i32) -> (i32, i32) {
    %c0_i32 = arith.constant 0 : i32
    %c0_i32_0 = arith.constant 0 : i32
    %c0_i32_1 = arith.constant 0 : i32
    return %c0_i32, %c0_i32_0 : i32, i32
  }
  func.func @transform_4(%arg0: i32) -> (i32, i32) {
    %c0_i32 = arith.constant 0 : i32
    %c0_i32_0 = arith.constant 0 : i32
    return %c0_i32, %arg0 : i32, i32
  }
}

</mosaic_0001>

<llo_original>
// kernel: tpu_custom_call.1
$region0: #{tpu_custom_call.1}
  #allocation0 [shape = 'u32[]', space=smem, size = 0x4, offset = 0x4, fixed_abs, tag = 'smem constant byte address 0x4 - core index']
  #allocation1 [shape = 'u32[72,128]{1,0:T(1,128)}', space=vmem, size = 0x9000, scoped, tag = 'internal scratch']
  %s0 = inlined_call_operand.hbm [shape: bf16[8,32,128], index: 0, kind: input, shape index: {}]
  %s1 = inlined_call_operand.hbm [shape: bf16[8,32,128], index: 1, kind: input, shape index: {}]
  %s2 = inlined_call_operand.hbm [shape: s32[2,128], index: 2, kind: input, shape index: {}]
  %s3 = inlined_call_operand.hbm [shape: f32[136,128], index: 3, kind: input, shape index: {}]
  %s4 = inlined_call_operand.hbm [shape: f32[2,128], index: 4, kind: output, shape index: {}]
  %s5 = sld [smem:[#allocation0]]
  $region42: #{tpu_custom_call.1} parent=0
    _
  %s7 = ssub.s32 1, %s5
  %s8 = scalar_select 0, %s7, %s5
  $region1: #{tpu_custom_call.1} parent=0
    #allocation2 [shape = 'u8[65536]{0}', space=vmem, size = 0x10000, scoped, tag = 'input window, operand 0, single buffered']
    #allocation3 [shape = 's32[1]{0}', space=sflag, size = 0x4, scoped, tag = 'scoped memory for tpu_custom_call.1']
    #allocation4 [shape = 's32[1]{0}', space=sflag, size = 0x4, scoped, tag = 'scoped memory for tpu_custom_call.1']
    #allocation5 [shape = 'u8[65536]{0}', space=vmem, size = 0x10000, scoped, tag = 'input window, operand 1, single buffered']
    #allocation6 [shape = 's32[1]{0}', space=sflag, size = 0x4, scoped, tag = 'scoped memory for tpu_custom_call.1']
    #allocation7 [shape = 'u8[1024]{0}', space=vmem, size = 0x400, scoped, tag = 'input window, operand 2, single buffered']
    #allocation8 [shape = 'u8[69632]{0}', space=vmem, size = 0x11000, scoped, tag = 'input window, operand 3, single buffered']
    #allocation9 [shape = 's32[1]{0}', space=sflag, size = 0x4, scoped, tag = 'scoped memory for tpu_custom_call.1']
    #allocation10 [shape = 'u8[1024]{0}', space=vmem, size = 0x400, scoped, tag = 'output window, operand 0, single buffered']
    %9 = vsyncpa [#allocation3], 0
    %10 = vsyncpa [#allocation6], 0
    %11 = vsyncpa [#allocation9], 0
    %12 = vsyncpa [#allocation4], 0
    // Predicated region
    $region2: #{tpu_custom_call.1} parent=1 // pred_check
      _
    $region3: #{tpu_custom_call.1} parent=1 // pred_check_branch
      %14 = sbr.rel (0) target = $region5
    $region4: #{tpu_custom_call.1} parent=1 // pred_region
      %16 = vsyncadd [#allocation3], 0
      %s17 = sshll.u32 %s0, 4
      %s18 = int_to_ptr.hbm [resolvable:$true] %s17
      %s19 = sshll.u32 [#allocation2], 4
      %s20 = int_to_ptr.vmem [resolvable:$true] %s19
      %25 = dma.hbm_to_vmem [thread:$0]  %s18, 2048, %s20, [#allocation3], 64, 64, 4
    $region5: #{tpu_custom_call.1} parent=1 // pred_fallthru
      _
    // Predicated region
    $region6: #{tpu_custom_call.1} parent=1 // pred_check
      _
    $region7: #{tpu_custom_call.1} parent=1 // pred_check_branch
      %27 = sbr.rel (0) target = $region9
    $region8: #{tpu_custom_call.1} parent=1 // pred_region
      %29 = vsyncadd [#allocation6], 0
      %s30 = sshll.u32 %s1, 4
      %s31 = int_to_ptr.hbm [resolvable:$true] %s30
      %s32 = sshll.u32 [#allocation5], 4
      %s33 = int_to_ptr.vmem [resolvable:$true] %s32
      %38 = dma.hbm_to_vmem [thread:$0]  %s31, 2048, %s33, [#allocation6], 64, 64, 4
    $region9: #{tpu_custom_call.1} parent=1 // pred_fallthru
      _
    // Predicated region
    $region10: #{tpu_custom_call.1} parent=1 // pred_check
      _
    $region11: #{tpu_custom_call.1} parent=1 // pred_check_branch
      %40 = sbr.rel (0) target = $region13
    $region12: #{tpu_custom_call.1} parent=1 // pred_region
      %42 = vsyncadd [#allocation6], 0
      %s44 = sshll.u32 %s2, 4
      %s45 = int_to_ptr.hbm [resolvable:$true] %s44
      %s46 = sshll.u32 [#allocation7], 4
      %s47 = int_to_ptr.vmem [resolvable:$true] %s46
      %49 = dma.hbm_to_vmem [thread:$0]  %s45, 32, %s47, [#allocation6]
    $region13: #{tpu_custom_call.1} parent=1 // pred_fallthru
      _
    // Predicated region
    $region14: #{tpu_custom_call.1} parent=1 // pred_check
      _
    $region15: #{tpu_custom_call.1} parent=1 // pred_check_branch
      %51 = sbr.rel (0) target = $region17
    $region16: #{tpu_custom_call.1} parent=1 // pred_region
      %53 = vsyncadd [#allocation9], 0
      %s54 = sshll.u32 %s3, 4
      %s55 = int_to_ptr.hbm [resolvable:$true] %s54
      %s56 = sshll.u32 [#allocation8], 4
      %s57 = int_to_ptr.vmem [resolvable:$true] %s56
      %62 = dma.hbm_to_vmem [thread:$0]  %s55, 2176, %s57, [#allocation9], 128, 128, 8
    $region17: #{tpu_custom_call.1} parent=1 // pred_fallthru
      _
    // Predicated region
    $region18: #{tpu_custom_call.1} parent=1 // pred_check
      _
    $region19: #{tpu_custom_call.1} parent=1 // pred_check_branch
      %64 = sbr.rel (0) target = $region21
    $region20: #{tpu_custom_call.1} parent=1 // pred_region
      %66 = dma.done [#allocation3], 2048
    $region21: #{tpu_custom_call.1} parent=1 // pred_fallthru
      _
    // Predicated region
    $region22: #{tpu_custom_call.1} parent=1 // pred_check
      _
    $region23: #{tpu_custom_call.1} parent=1 // pred_check_branch
      %68 = sbr.rel (0) target = $region25
    $region24: #{tpu_custom_call.1} parent=1 // pred_region
      %70 = dma.done [#allocation6], 2048
    $region25: #{tpu_custom_call.1} parent=1 // pred_fallthru
      _
    // Predicated region
    $region26: #{tpu_custom_call.1} parent=1 // pred_check
      _
    $region27: #{tpu_custom_call.1} parent=1 // pred_check_branch
      %72 = sbr.rel (0) target = $region29
    $region28: #{tpu_custom_call.1} parent=1 // pred_region
      %74 = dma.done [#allocation6], 32
    $region29: #{tpu_custom_call.1} parent=1 // pred_fallthru
      _
    // Predicated region
    $region30: #{tpu_custom_call.1} parent=1 // pred_check
      _
    $region31: #{tpu_custom_call.1} parent=1 // pred_check_branch
      %76 = sbr.rel (0) target = $region33
    $region32: #{tpu_custom_call.1} parent=1 // pred_region
      %78 = dma.done [#allocation9], 2176
    $region33: #{tpu_custom_call.1} parent=1 // pred_fallthru
      _
    %v79 = vld [vmem:[#allocation2] sm:$0xf]
    %v80 = vld [vmem:[#allocation2 + $0x4] sm:$0xf]
    %v81 = vld [vmem:[#allocation2 + $0x8] sm:$0xf]
    %v82 = vld [vmem:[#allocation2 + $0xc] sm:$0xf]
    %v83 = vld [vmem:[#allocation2 + $0x10] sm:$0xf]
    %v84 = vld [vmem:[#allocation2 + $0x14] sm:$0xf]
    %v85 = vld [vmem:[#allocation2 + $0x18] sm:$0xf]
    %v86 = vld [vmem:[#allocation2 + $0x1c] sm:$0xf]
    %v87 = vld [vmem:[#allocation2 + $0x20] sm:$0xf]
    %v88 = vld [vmem:[#allocation2 + $0x24] sm:$0xf]
    %v89 = vld [vmem:[#allocation2 + $0x28] sm:$0xf]
    %v90 = vld [vmem:[#allocation2 + $0x2c] sm:$0xf]
    %v91 = vld [vmem:[#allocation2 + $0x30] sm:$0xf]
    %v92 = vld [vmem:[#allocation2 + $0x34] sm:$0xf]
    %v93 = vld [vmem:[#allocation2 + $0x38] sm:$0xf]
    %v94 = vld [vmem:[#allocation2 + $0x3c] sm:$0xf]
    %v95 = vld [vmem:[#allocation2 + $0x40] sm:$0xf]
    %v96 = vld [vmem:[#allocation2 + $0x44] sm:$0xf]
    %v97 = vld [vmem:[#allocation2 + $0x48] sm:$0xf]
    %v98 = vld [vmem:[#allocation2 + $0x4c] sm:$0xf]
    %v99 = vld [vmem:[#allocation2 + $0x50] sm:$0xf]
    %v100 = vld [vmem:[#allocation2 + $0x54] sm:$0xf]
    %v101 = vld [vmem:[#allocation2 + $0x58] sm:$0xf]
    %v102 = vld [vmem:[#allocation2 + $0x5c] sm:$0xf]
    %v103 = vld [vmem:[#allocation2 + $0x60] sm:$0xf]
    %v104 = vld [vmem:[#allocation2 + $0x64] sm:$0xf]
    %v105 = vld [vmem:[#allocation2 + $0x68] sm:$0xf]
    %v106 = vld [vmem:[#allocation2 + $0x6c] sm:$0xf]
    %v107 = vld [vmem:[#allocation2 + $0x70] sm:$0xf]
    %v108 = vld [vmem:[#allocation2 + $0x74] sm:$0xf]
    %v109 = vld [vmem:[#allocation2 + $0x78] sm:$0xf]
    %v110 = vld [vmem:[#allocation2 + $0x7c] sm:$0xf]
    %v111 = vunpack.c.l.bf16 %v79
    %v112 = vunpack.c.l.bf16 %v80
    %v113 = vunpack.c.l.bf16 %v81
    %v114 = vunpack.c.l.bf16 %v82
    %v115 = vunpack.c.l.bf16 %v83
    %v116 = vunpack.c.l.bf16 %v84
    %v117 = vunpack.c.l.bf16 %v85
    %v118 = vunpack.c.l.bf16 %v86
    %v119 = vunpack.c.l.bf16 %v87
    %v120 = vunpack.c.l.bf16 %v88
    %v121 = vunpack.c.l.bf16 %v89
    %v122 = vunpack.c.l.bf16 %v90
    %v123 = vunpack.c.l.bf16 %v91
    %v124 = vunpack.c.l.bf16 %v92
    %v125 = vunpack.c.l.bf16 %v93
    %v126 = vunpack.c.l.bf16 %v94
    %v127 = vunpack.c.l.bf16 %v95
    %v128 = vunpack.c.l.bf16 %v96
    %v129 = vunpack.c.l.bf16 %v97
    %v130 = vunpack.c.l.bf16 %v98
    %v131 = vunpack.c.l.bf16 %v99
    %v132 = vunpack.c.l.bf16 %v100
    %v133 = vunpack.c.l.bf16 %v101
    %v134 = vunpack.c.l.bf16 %v102
    %v135 = vunpack.c.l.bf16 %v103
    %v136 = vunpack.c.l.bf16 %v104
    %v137 = vunpack.c.l.bf16 %v105
    %v138 = vunpack.c.l.bf16 %v106
    %v139 = vunpack.c.l.bf16 %v107
    %v140 = vunpack.c.l.bf16 %v108
    %v141 = vunpack.c.l.bf16 %v109
    %v142 = vunpack.c.l.bf16 %v110
    %v143 = vld [vmem:[#allocation5] sm:$0xf]
    %v144 = vld [vmem:[#allocation5 + $0x4] sm:$0xf]
    %v145 = vld [vmem:[#allocation5 + $0x8] sm:$0xf]
    %v146 = vld [vmem:[#allocation5 + $0xc] sm:$0xf]
    %v147 = vld [vmem:[#allocation5 + $0x10] sm:$0xf]
    %v148 = vld [vmem:[#allocation5 + $0x14] sm:$0xf]
    %v149 = vld [vmem:[#allocation5 + $0x18] sm:$0xf]
    %v150 = vld [vmem:[#allocation5 + $0x1c] sm:$0xf]
    %v151 = vld [vmem:[#allocation5 + $0x20] sm:$0xf]
    %v152 = vld [vmem:[#allocation5 + $0x24] sm:$0xf]
    %v153 = vld [vmem:[#allocation5 + $0x28] sm:$0xf]
    %v154 = vld [vmem:[#allocation5 + $0x2c] sm:$0xf]
    %v155 = vld [vmem:[#allocation5 + $0x30] sm:$0xf]
    %v156 = vld [vmem:[#allocation5 + $0x34] sm:$0xf]
    %v157 = vld [vmem:[#allocation5 + $0x38] sm:$0xf]
    %v158 = vld [vmem:[#allocation5 + $0x3c] sm:$0xf]
    %v159 = vld [vmem:[#allocation5 + $0x40] sm:$0xf]
    %v160 = vld [vmem:[#allocation5 + $0x44] sm:$0xf]
    %v161 = vld [vmem:[#allocation5 + $0x48] sm:$0xf]
    %v162 = vld [vmem:[#allocation5 + $0x4c] sm:$0xf]
    %v163 = vld [vmem:[#allocation5 + $0x50] sm:$0xf]
    %v164 = vld [vmem:[#allocation5 + $0x54] sm:$0xf]
    %v165 = vld [vmem:[#allocation5 + $0x58] sm:$0xf]
    %v166 = vld [vmem:[#allocation5 + $0x5c] sm:$0xf]
    %v167 = vld [vmem:[#allocation5 + $0x60] sm:$0xf]
    %v168 = vld [vmem:[#allocation5 + $0x64] sm:$0xf]
    %v169 = vld [vmem:[#allocation5 + $0x68] sm:$0xf]
    %v170 = vld [vmem:[#allocation5 + $0x6c] sm:$0xf]
    %v171 = vld [vmem:[#allocation5 + $0x70] sm:$0xf]
    %v172 = vld [vmem:[#allocation5 + $0x74] sm:$0xf]
    %v173 = vld [vmem:[#allocation5 + $0x78] sm:$0xf]
    %v174 = vld [vmem:[#allocation5 + $0x7c] sm:$0xf]
    %v175 = vunpack.c.l.bf16 %v143
    %v176 = vunpack.c.l.bf16 %v144
    %v177 = vunpack.c.l.bf16 %v145
    %v178 = vunpack.c.l.bf16 %v146
    %v179 = vunpack.c.l.bf16 %v147
    %v180 = vunpack.c.l.bf16 %v148
    %v181 = vunpack.c.l.bf16 %v149
    %v182 = vunpack.c.l.bf16 %v150
    %v183 = vunpack.c.l.bf16 %v151
    %v184 = vunpack.c.l.bf16 %v152
    %v185 = vunpack.c.l.bf16 %v153
    %v186 = vunpack.c.l.bf16 %v154
    %v187 = vunpack.c.l.bf16 %v155
    %v188 = vunpack.c.l.bf16 %v156
    %v189 = vunpack.c.l.bf16 %v157
    %v190 = vunpack.c.l.bf16 %v158
    %v191 = vunpack.c.l.bf16 %v159
    %v192 = vunpack.c.l.bf16 %v160
    %v193 = vunpack.c.l.bf16 %v161
    %v194 = vunpack.c.l.bf16 %v162
    %v195 = vunpack.c.l.bf16 %v163
    %v196 = vunpack.c.l.bf16 %v164
    %v197 = vunpack.c.l.bf16 %v165
    %v198 = vunpack.c.l.bf16 %v166
    %v199 = vunpack.c.l.bf16 %v167
    %v200 = vunpack.c.l.bf16 %v168
    %v201 = vunpack.c.l.bf16 %v169
    %v202 = vunpack.c.l.bf16 %v170
    %v203 = vunpack.c.l.bf16 %v171
    %v204 = vunpack.c.l.bf16 %v172
    %v205 = vunpack.c.l.bf16 %v173
    %v206 = vunpack.c.l.bf16 %v174
    %v207 = vmul.f32 %v111, %v111
    %v208 = vmul.f32 %v112, %v112
    %v209 = vmul.f32 %v113, %v113
    %v210 = vmul.f32 %v114, %v114
    %v211 = vmul.f32 %v115, %v115
    %v212 = vmul.f32 %v116, %v116
    %v213 = vmul.f32 %v117, %v117
    %v214 = vmul.f32 %v118, %v118
    %v215 = vmul.f32 %v119, %v119
    %v216 = vmul.f32 %v120, %v120
    %v217 = vmul.f32 %v121, %v121
    %v218 = vmul.f32 %v122, %v122
    %v219 = vmul.f32 %v123, %v123
    %v220 = vmul.f32 %v124, %v124
    %v221 = vmul.f32 %v125, %v125
    %v222 = vmul.f32 %v126, %v126
    %v223 = vmul.f32 %v127, %v127
    %v224 = vmul.f32 %v128, %v128
    %v225 = vmul.f32 %v129, %v129
    %v226 = vmul.f32 %v130, %v130
    %v227 = vmul.f32 %v131, %v131
    %v228 = vmul.f32 %v132, %v132
    %v229 = vmul.f32 %v133, %v133
    %v230 = vmul.f32 %v134, %v134
    %v231 = vmul.f32 %v135, %v135
    %v232 = vmul.f32 %v136, %v136
    %v233 = vmul.f32 %v137, %v137
    %v234 = vmul.f32 %v138, %v138
    %v235 = vmul.f32 %v139, %v139
    %v236 = vmul.f32 %v140, %v140
    %v237 = vmul.f32 %v141, %v141
    %v238 = vmul.f32 %v142, %v142
    %v239 = vadd.f32 %v207, %v208
    %v240 = vadd.f32 %v239, %v209
    %v241 = vadd.f32 %v240, %v210
    %v242 = vrot.slane %v241, 4
    %v243 = vadd.f32 %v241, %v242
    %v244 = vrot.slane %v243, 2
    %v245 = vadd.f32 %v243, %v244
    %v246 = vrot.slane %v245, 1
    %v247 = vadd.f32 %v245, %v246
    %v248 = vadd.f32 %v211, %v212
    %v249 = vadd.f32 %v248, %v213
    %v250 = vadd.f32 %v249, %v214
    %v251 = vrot.slane %v250, 4
    %v252 = vadd.f32 %v250, %v251
    %v253 = vrot.slane %v252, 2
    %v254 = vadd.f32 %v252, %v253
    %v255 = vrot.slane %v254, 1
    %v256 = vadd.f32 %v254, %v255
    %v257 = vadd.f32 %v215, %v216
    %v258 = vadd.f32 %v257, %v217
    %v259 = vadd.f32 %v258, %v218
    %v260 = vrot.slane %v259, 4
    %v261 = vadd.f32 %v259, %v260
    %v262 = vrot.slane %v261, 2
    %v263 = vadd.f32 %v261, %v262
    %v264 = vrot.slane %v263, 1
    %v265 = vadd.f32 %v263, %v264
    %v266 = vadd.f32 %v219, %v220
    %v267 = vadd.f32 %v266, %v221
    %v268 = vadd.f32 %v267, %v222
    %v269 = vrot.slane %v268, 4
    %v270 = vadd.f32 %v268, %v269
    %v271 = vrot.slane %v270, 2
    %v272 = vadd.f32 %v270, %v271
    %v273 = vrot.slane %v272, 1
    %v274 = vadd.f32 %v272, %v273
    %v275 = vadd.f32 %v223, %v224
    %v276 = vadd.f32 %v275, %v225
    %v277 = vadd.f32 %v276, %v226
    %v278 = vrot.slane %v277, 4
    %v279 = vadd.f32 %v277, %v278
    %v280 = vrot.slane %v279, 2
    %v281 = vadd.f32 %v279, %v280
    %v282 = vrot.slane %v281, 1
    %v283 = vadd.f32 %v281, %v282
    %v284 = vadd.f32 %v227, %v228
    %v285 = vadd.f32 %v284, %v229
    %v286 = vadd.f32 %v285, %v230
    %v287 = vrot.slane %v286, 4
    %v288 = vadd.f32 %v286, %v287
    %v289 = vrot.slane %v288, 2
    %v290 = vadd.f32 %v288, %v289
    %v291 = vrot.slane %v290, 1
    %v292 = vadd.f32 %v290, %v291
    %v293 = vadd.f32 %v231, %v232
    %v294 = vadd.f32 %v293, %v233
    %v295 = vadd.f32 %v294, %v234
    %v296 = vrot.slane %v295, 4
    %v297 = vadd.f32 %v295, %v296
    %v298 = vrot.slane %v297, 2
    %v299 = vadd.f32 %v297, %v298
    %v300 = vrot.slane %v299, 1
    %v301 = vadd.f32 %v299, %v300
    %v302 = vadd.f32 %v235, %v236
    %v303 = vadd.f32 %v302, %v237
    %v304 = vadd.f32 %v303, %v238
    %v305 = vrot.slane %v304, 4
    %v306 = vadd.f32 %v304, %v305
    %v307 = vrot.slane %v306, 2
    %v308 = vadd.f32 %v306, %v307
    %v309 = vrot.slane %v308, 1
    %v310 = vadd.f32 %v308, %v309
    %v311 = vadd.f32 %v247, 1e-12
    %v312 = vadd.f32 %v256, 1e-12
    %v313 = vadd.f32 %v265, 1e-12
    %v314 = vadd.f32 %v274, 1e-12
    %v315 = vadd.f32 %v283, 1e-12
    %v316 = vadd.f32 %v292, 1e-12
    %v317 = vadd.f32 %v301, 1e-12
    %v318 = vadd.f32 %v310, 1e-12
    %v319 = vrsqrt.pop %v311
    %v320 = vmul.f32 %v319, %v311
    %v321 = vmul.f32 %v320, %v319
    %v322 = vmul.f32 0.5, %v321
    %v323 = vsub.f32 1.5, %v322
    %v324 = vmul.f32 %v319, %v323
    %vm325 = vweird.f32 %v311
    %vm326 = vweird.f32 %v319
    %vm327 = vmor %vm325, %vm326
    %v328 = vsel %vm327, %v319, %v324
    %v329 = vrsqrt.pop %v312
    %v330 = vmul.f32 %v329, %v312
    %v331 = vmul.f32 %v330, %v329
    %v332 = vmul.f32 0.5, %v331
    %v333 = vsub.f32 1.5, %v332
    %v334 = vmul.f32 %v329, %v333
    %vm335 = vweird.f32 %v312
    %vm336 = vweird.f32 %v329
    %vm337 = vmor %vm335, %vm336
    %v338 = vsel %vm337, %v329, %v334
    %v339 = vrsqrt.pop %v313
    %v340 = vmul.f32 %v339, %v313
    %v341 = vmul.f32 %v340, %v339
    %v342 = vmul.f32 0.5, %v341
    %v343 = vsub.f32 1.5, %v342
    %v344 = vmul.f32 %v339, %v343
    %vm345 = vweird.f32 %v313
    %vm346 = vweird.f32 %v339
    %vm347 = vmor %vm345, %vm346
    %v348 = vsel %vm347, %v339, %v344
    %v349 = vrsqrt.pop %v314
    %v350 = vmul.f32 %v349, %v314
    %v351 = vmul.f32 %v350, %v349
    %v352 = vmul.f32 0.5, %v351
    %v353 = vsub.f32 1.5, %v352
    %v354 = vmul.f32 %v349, %v353
    %vm355 = vweird.f32 %v314
    %vm356 = vweird.f32 %v349
    %vm357 = vmor %vm355, %vm356
    %v358 = vsel %vm357, %v349, %v354
    %v359 = vrsqrt.pop %v315
    %v360 = vmul.f32 %v359, %v315
    %v361 = vmul.f32 %v360, %v359
    %v362 = vmul.f32 0.5, %v361
    %v363 = vsub.f32 1.5, %v362
    %v364 = vmul.f32 %v359, %v363
    %vm365 = vweird.f32 %v315
    %vm366 = vweird.f32 %v359
    %vm367 = vmor %vm365, %vm366
    %v368 = vsel %vm367, %v359, %v364
    %v369 = vrsqrt.pop %v316
    %v370 = vmul.f32 %v369, %v316
    %v371 = vmul.f32 %v370, %v369
    %v372 = vmul.f32 0.5, %v371
    %v373 = vsub.f32 1.5, %v372
    %v374 = vmul.f32 %v369, %v373
    %vm375 = vweird.f32 %v316
    %vm376 = vweird.f32 %v369
    %vm377 = vmor %vm375, %vm376
    %v378 = vsel %vm377, %v369, %v374
    %v379 = vrsqrt.pop %v317
    %v380 = vmul.f32 %v379, %v317
    %v381 = vmul.f32 %v380, %v379
    %v382 = vmul.f32 0.5, %v381
    %v383 = vsub.f32 1.5, %v382
    %v384 = vmul.f32 %v379, %v383
    %vm385 = vweird.f32 %v317
    %vm386 = vweird.f32 %v379
    %vm387 = vmor %vm385, %vm386
    %v388 = vsel %vm387, %v379, %v384
    %v389 = vrsqrt.pop %v318
    %v390 = vmul.f32 %v389, %v318
    %v391 = vmul.f32 %v390, %v389
    %v392 = vmul.f32 0.5, %v391
    %v393 = vsub.f32 1.5, %v392
    %v394 = vmul.f32 %v389, %v393
    %vm395 = vweird.f32 %v318
    %vm396 = vweird.f32 %v389
    %vm397 = vmor %vm395, %vm396
    %v398 = vsel %vm397, %v389, %v394
    %v399 = vmul.f32 %v175, %v175
    %v400 = vmul.f32 %v176, %v176
    %v401 = vmul.f32 %v177, %v177
    %v402 = vmul.f32 %v178, %v178
    %v403 = vmul.f32 %v179, %v179
    %v404 = vmul.f32 %v180, %v180
    %v405 = vmul.f32 %v181, %v181
    %v406 = vmul.f32 %v182, %v182
    %v407 = vmul.f32 %v183, %v183
    %v408 = vmul.f32 %v184, %v184
    %v409 = vmul.f32 %v185, %v185
    %v410 = vmul.f32 %v186, %v186
    %v411 = vmul.f32 %v187, %v187
    %v412 = vmul.f32 %v188, %v188
    %v413 = vmul.f32 %v189, %v189
    %v414 = vmul.f32 %v190, %v190
    %v415 = vmul.f32 %v191, %v191
    %v416 = vmul.f32 %v192, %v192
    %v417 = vmul.f32 %v193, %v193
    %v418 = vmul.f32 %v194, %v194
    %v419 = vmul.f32 %v195, %v195
    %v420 = vmul.f32 %v196, %v196
    %v421 = vmul.f32 %v197, %v197
    %v422 = vmul.f32 %v198, %v198
    %v423 = vmul.f32 %v199, %v199
    %v424 = vmul.f32 %v200, %v200
    %v425 = vmul.f32 %v201, %v201
    %v426 = vmul.f32 %v202, %v202
    %v427 = vmul.f32 %v203, %v203
    %v428 = vmul.f32 %v204, %v204
    %v429 = vmul.f32 %v205, %v205
    %v430 = vmul.f32 %v206, %v206
    %v431 = vadd.f32 %v399, %v400
    %v432 = vadd.f32 %v431, %v401
    %v433 = vadd.f32 %v432, %v402
    %v434 = vrot.slane %v433, 4
    %v435 = vadd.f32 %v433, %v434
    %v436 = vrot.slane %v435, 2
    %v437 = vadd.f32 %v435, %v436
    %v438 = vrot.slane %v437, 1
    %v439 = vadd.f32 %v437, %v438
    %v440 = vadd.f32 %v403, %v404
    %v441 = vadd.f32 %v440, %v405
    %v442 = vadd.f32 %v441, %v406
    %v443 = vrot.slane %v442, 4
    %v444 = vadd.f32 %v442, %v443
    %v445 = vrot.slane %v444, 2
    %v446 = vadd.f32 %v444, %v445
    %v447 = vrot.slane %v446, 1
    %v448 = vadd.f32 %v446, %v447
    %v449 = vadd.f32 %v407, %v408
    %v450 = vadd.f32 %v449, %v409
    %v451 = vadd.f32 %v450, %v410
    %v452 = vrot.slane %v451, 4
    %v453 = vadd.f32 %v451, %v452
    %v454 = vrot.slane %v453, 2
    %v455 = vadd.f32 %v453, %v454
    %v456 = vrot.slane %v455, 1
    %v457 = vadd.f32 %v455, %v456
    %v458 = vadd.f32 %v411, %v412
    %v459 = vadd.f32 %v458, %v413
    %v460 = vadd.f32 %v459, %v414
    %v461 = vrot.slane %v460, 4
    %v462 = vadd.f32 %v460, %v461
    %v463 = vrot.slane %v462, 2
    %v464 = vadd.f32 %v462, %v463
    %v465 = vrot.slane %v464, 1
    %v466 = vadd.f32 %v464, %v465
    %v467 = vadd.f32 %v415, %v416
    %v468 = vadd.f32 %v467, %v417
    %v469 = vadd.f32 %v468, %v418
    %v470 = vrot.slane %v469, 4
    %v471 = vadd.f32 %v469, %v470
    %v472 = vrot.slane %v471, 2
    %v473 = vadd.f32 %v471, %v472
    %v474 = vrot.slane %v473, 1
    %v475 = vadd.f32 %v473, %v474
    %v476 = vadd.f32 %v419, %v420
    %v477 = vadd.f32 %v476, %v421
    %v478 = vadd.f32 %v477, %v422
    %v479 = vrot.slane %v478, 4
    %v480 = vadd.f32 %v478, %v479
    %v481 = vrot.slane %v480, 2
    %v482 = vadd.f32 %v480, %v481
    %v483 = vrot.slane %v482, 1
    %v484 = vadd.f32 %v482, %v483
    %v485 = vadd.f32 %v423, %v424
    %v486 = vadd.f32 %v485, %v425
    %v487 = vadd.f32 %v486, %v426
    %v488 = vrot.slane %v487, 4
    %v489 = vadd.f32 %v487, %v488
    %v490 = vrot.slane %v489, 2
    %v491 = vadd.f32 %v489, %v490
    %v492 = vrot.slane %v491, 1
    %v493 = vadd.f32 %v491, %v492
    %v494 = vadd.f32 %v427, %v428
    %v495 = vadd.f32 %v494, %v429
    %v496 = vadd.f32 %v495, %v430
    %v497 = vrot.slane %v496, 4
    %v498 = vadd.f32 %v496, %v497
    %v499 = vrot.slane %v498, 2
    %v500 = vadd.f32 %v498, %v499
    %v501 = vrot.slane %v500, 1
    %v502 = vadd.f32 %v500, %v501
    %v503 = vadd.f32 %v439, 1e-12
    %v504 = vadd.f32 %v448, 1e-12
    %v505 = vadd.f32 %v457, 1e-12
    %v506 = vadd.f32 %v466, 1e-12
    %v507 = vadd.f32 %v475, 1e-12
    %v508 = vadd.f32 %v484, 1e-12
    %v509 = vadd.f32 %v493, 1e-12
    %v510 = vadd.f32 %v502, 1e-12
    %v511 = vrsqrt.pop %v503
    %v512 = vmul.f32 %v511, %v503
    %v513 = vmul.f32 %v512, %v511
    %v514 = vmul.f32 0.5, %v513
    %v515 = vsub.f32 1.5, %v514
    %v516 = vmul.f32 %v511, %v515
    %vm517 = vweird.f32 %v503
    %vm518 = vweird.f32 %v511
    %vm519 = vmor %vm517, %vm518
    %v520 = vsel %vm519, %v511, %v516
    %v521 = vrsqrt.pop %v504
    %v522 = vmul.f32 %v521, %v504
    %v523 = vmul.f32 %v522, %v521
    %v524 = vmul.f32 0.5, %v523
    %v525 = vsub.f32 1.5, %v524
    %v526 = vmul.f32 %v521, %v525
    %vm527 = vweird.f32 %v504
    %vm528 = vweird.f32 %v521
    %vm529 = vmor %vm527, %vm528
    %v530 = vsel %vm529, %v521, %v526
    %v531 = vrsqrt.pop %v505
    %v532 = vmul.f32 %v531, %v505
    %v533 = vmul.f32 %v532, %v531
    %v534 = vmul.f32 0.5, %v533
    %v535 = vsub.f32 1.5, %v534
    %v536 = vmul.f32 %v531, %v535
    %vm537 = vweird.f32 %v505
    %vm538 = vweird.f32 %v531
    %vm539 = vmor %vm537, %vm538
    %v540 = vsel %vm539, %v531, %v536
    %v541 = vrsqrt.pop %v506
    %v542 = vmul.f32 %v541, %v506
    %v543 = vmul.f32 %v542, %v541
    %v544 = vmul.f32 0.5, %v543
    %v545 = vsub.f32 1.5, %v544
    %v546 = vmul.f32 %v541, %v545
    %vm547 = vweird.f32 %v506
    %vm548 = vweird.f32 %v541
    %vm549 = vmor %vm547, %vm548
    %v550 = vsel %vm549, %v541, %v546
    %v551 = vrsqrt.pop %v507
    %v552 = vmul.f32 %v551, %v507
    %v553 = vmul.f32 %v552, %v551
    %v554 = vmul.f32 0.5, %v553
    %v555 = vsub.f32 1.5, %v554
    %v556 = vmul.f32 %v551, %v555
    %vm557 = vweird.f32 %v507
    %vm558 = vweird.f32 %v551
    %vm559 = vmor %vm557, %vm558
    %v560 = vsel %vm559, %v551, %v556
    %v561 = vrsqrt.pop %v508
    %v562 = vmul.f32 %v561, %v508
    %v563 = vmul.f32 %v562, %v561
    %v564 = vmul.f32 0.5, %v563
    %v565 = vsub.f32 1.5, %v564
    %v566 = vmul.f32 %v561, %v565
    %vm567 = vweird.f32 %v508
    %vm568 = vweird.f32 %v561
    %vm569 = vmor %vm567, %vm568
    %v570 = vsel %vm569, %v561, %v566
    %v571 = vrsqrt.pop %v509
    %v572 = vmul.f32 %v571, %v509
    %v573 = vmul.f32 %v572, %v571
    %v574 = vmul.f32 0.5, %v573
    %v575 = vsub.f32 1.5, %v574
    %v576 = vmul.f32 %v571, %v575
    %vm577 = vweird.f32 %v509
    %vm578 = vweird.f32 %v571
    %vm579 = vmor %vm577, %vm578
    %v580 = vsel %vm579, %v571, %v576
    %v581 = vrsqrt.pop %v510
    %v582 = vmul.f32 %v581, %v510
    %v583 = vmul.f32 %v582, %v581
    %v584 = vmul.f32 0.5, %v583
    %v585 = vsub.f32 1.5, %v584
    %v586 = vmul.f32 %v581, %v585
    %vm587 = vweird.f32 %v510
    %vm588 = vweird.f32 %v581
    %vm589 = vmor %vm587, %vm588
    %v590 = vsel %vm589, %v581, %v586
    %v591 = vld [vmem:[#allocation8] sm:$0xff]
    %v592 = vld [vmem:[#allocation8 + $0x8] sm:$0xff]
    %v593 = vld [vmem:[#allocation8 + $0x10] sm:$0xff]
    %v594 = vld [vmem:[#allocation8 + $0x18] sm:$0xff]
    %v595 = vmul.f32 %v111, %v591
    %v596 = vmul.f32 %v112, %v592
    %v597 = vmul.f32 %v113, %v593
    %v598 = vmul.f32 %v114, %v594
    %v599 = vmul.f32 %v115, %v591
    %v600 = vmul.f32 %v116, %v592
    %v601 = vmul.f32 %v117, %v593
    %v602 = vmul.f32 %v118, %v594
    %v603 = vmul.f32 %v119, %v591
    %v604 = vmul.f32 %v120, %v592
    %v605 = vmul.f32 %v121, %v593
    %v606 = vmul.f32 %v122, %v594
    %v607 = vmul.f32 %v123, %v591
    %v608 = vmul.f32 %v124, %v592
    %v609 = vmul.f32 %v125, %v593
    %v610 = vmul.f32 %v126, %v594
    %v611 = vmul.f32 %v127, %v591
    %v612 = vmul.f32 %v128, %v592
    %v613 = vmul.f32 %v129, %v593
    %v614 = vmul.f32 %v130, %v594
    %v615 = vmul.f32 %v131, %v591
    %v616 = vmul.f32 %v132, %v592
    %v617 = vmul.f32 %v133, %v593
    %v618 = vmul.f32 %v134, %v594
    %v619 = vmul.f32 %v135, %v591
    %v620 = vmul.f32 %v136, %v592
    %v621 = vmul.f32 %v137, %v593
    %v622 = vmul.f32 %v138, %v594
    %v623 = vmul.f32 %v139, %v591
    %v624 = vmul.f32 %v140, %v592
    %v625 = vmul.f32 %v141, %v593
    %v626 = vmul.f32 %v142, %v594
    %v627 = vadd.f32 %v595, %v596
    %v628 = vadd.f32 %v627, %v597
    %v629 = vadd.f32 %v628, %v598
    %v630 = vrot.slane %v629, 4
    %v631 = vadd.f32 %v629, %v630
    %v632 = vrot.slane %v631, 2
    %v633 = vadd.f32 %v631, %v632
    %v634 = vrot.slane %v633, 1
    %v635 = vadd.f32 %v633, %v634
    %v636 = vadd.f32 %v599, %v600
    %v637 = vadd.f32 %v636, %v601
    %v638 = vadd.f32 %v637, %v602
    %v639 = vrot.slane %v638, 4
    %v640 = vadd.f32 %v638, %v639
    %v641 = vrot.slane %v640, 2
    %v642 = vadd.f32 %v640, %v641
    %v643 = vrot.slane %v642, 1
    %v644 = vadd.f32 %v642, %v643
    %v645 = vadd.f32 %v603, %v604
    %v646 = vadd.f32 %v645, %v605
    %v647 = vadd.f32 %v646, %v606
    %v648 = vrot.slane %v647, 4
    %v649 = vadd.f32 %v647, %v648
    %v650 = vrot.slane %v649, 2
    %v651 = vadd.f32 %v649, %v650
    %v652 = vrot.slane %v651, 1
    %v653 = vadd.f32 %v651, %v652
    %v654 = vadd.f32 %v607, %v608
    %v655 = vadd.f32 %v654, %v609
    %v656 = vadd.f32 %v655, %v610
    %v657 = vrot.slane %v656, 4
    %v658 = vadd.f32 %v656, %v657
    %v659 = vrot.slane %v658, 2
    %v660 = vadd.f32 %v658, %v659
    %v661 = vrot.slane %v660, 1
    %v662 = vadd.f32 %v660, %v661
    %v663 = vadd.f32 %v611, %v612
    %v664 = vadd.f32 %v663, %v613
    %v665 = vadd.f32 %v664, %v614
    %v666 = vrot.slane %v665, 4
    %v667 = vadd.f32 %v665, %v666
    %v668 = vrot.slane %v667, 2
    %v669 = vadd.f32 %v667, %v668
    %v670 = vrot.slane %v669, 1
    %v671 = vadd.f32 %v669, %v670
    %v672 = vadd.f32 %v615, %v616
    %v673 = vadd.f32 %v672, %v617
    %v674 = vadd.f32 %v673, %v618
    %v675 = vrot.slane %v674, 4
    %v676 = vadd.f32 %v674, %v675
    %v677 = vrot.slane %v676, 2
    %v678 = vadd.f32 %v676, %v677
    %v679 = vrot.slane %v678, 1
    %v680 = vadd.f32 %v678, %v679
    %v681 = vadd.f32 %v619, %v620
    %v682 = vadd.f32 %v681, %v621
    %v683 = vadd.f32 %v682, %v622
    %v684 = vrot.slane %v683, 4
    %v685 = vadd.f32 %v683, %v684
    %v686 = vrot.slane %v685, 2
    %v687 = vadd.f32 %v685, %v686
    %v688 = vrot.slane %v687, 1
    %v689 = vadd.f32 %v687, %v688
    %v690 = vadd.f32 %v623, %v624
    %v691 = vadd.f32 %v690, %v625
    %v692 = vadd.f32 %v691, %v626
    %v693 = vrot.slane %v692, 4
    %v694 = vadd.f32 %v692, %v693
    %v695 = vrot.slane %v694, 2
    %v696 = vadd.f32 %v694, %v695
    %v697 = vrot.slane %v696, 1
    %v698 = vadd.f32 %v696, %v697
    %v699 = vmax.f32 %v635, %v671
    %v700 = vmax.f32 %v644, %v680
    %v701 = vmax.f32 %v653, %v689
    %v702 = vmax.f32 %v662, %v698
    %v703 = vmax.f32 %v699, %v700
    %v704 = vmax.f32 %v701, %v702
    %v705 = vmax.f32 %v703, %v704
    %v706 = vsub.f32 %v635, %v705
    %v707 = vsub.f32 %v644, %v705
    %v708 = vsub.f32 %v653, %v705
    %v709 = vsub.f32 %v662, %v705
    %v710 = vsub.f32 %v671, %v705
    %v711 = vsub.f32 %v680, %v705
    %v712 = vsub.f32 %v689, %v705
    %v713 = vsub.f32 %v698, %v705
    %v714 = vmul.f32 %v706, 1.442695
    %v715 = vpow.pop %v714
    %v716 = vmul.f32 %v707, 1.442695
    %v717 = vpow.pop %v716
    %v718 = vmul.f32 %v708, 1.442695
    %v719 = vpow.pop %v718
    %v720 = vmul.f32 %v709, 1.442695
    %v721 = vpow.pop %v720
    %v722 = vmul.f32 %v710, 1.442695
    %v723 = vpow.pop %v722
    %v724 = vmul.f32 %v711, 1.442695
    %v725 = vpow.pop %v724
    %v726 = vmul.f32 %v712, 1.442695
    %v727 = vpow.pop %v726
    %v728 = vmul.f32 %v713, 1.442695
    %v729 = vpow.pop %v728
    %v738 = vrot.slane %v717, 7
    %vm739 = vcmask 1041409
    %v740 = vsel %vm739, %v738, %v715
    %v741 = vrot.slane %v719, 6
    %vm742 = vcmask 1042434
    %v743 = vsel %vm742, %v741, %v740
    %v744 = vrot.slane %v721, 5
    %vm745 = vcmask 1043459
    %v746 = vsel %vm745, %v744, %v743
    %v747 = vrot.slane %v723, 4
    %vm748 = vcmask 1044484
    %v749 = vsel %vm748, %v747, %v746
    %v750 = vrot.slane %v725, 3
    %vm751 = vcmask 1045509
    %v752 = vsel %vm751, %v750, %v749
    %v753 = vrot.slane %v727, 2
    %vm754 = vcmask 1046534
    %v755 = vsel %vm754, %v753, %v752
    %v756 = vrot.slane %v729, 1
    %vm757 = vcmask 1047559
    %v758 = vsel %vm757, %v756, %v755
    %v760 = vrot.slane %v758, 4
    %v761 = vadd.f32 %v758, %v760
    %v762 = vrot.slane %v761, 2
    %v763 = vadd.f32 %v761, %v762
    %v764 = vrot.slane %v763, 1
    %v765 = vadd.f32 %v763, %v764
    %v766 = vrcp.pop %v765
    %v767 = vperm.slane %v766, 0
    %v768 = vmul.f32 %v715, %v767
    %v769 = vmul.f32 %v717, %v767
    %v770 = vmul.f32 %v719, %v767
    %v771 = vmul.f32 %v721, %v767
    %v772 = vmul.f32 %v723, %v767
    %v773 = vmul.f32 %v725, %v767
    %v774 = vmul.f32 %v727, %v767
    %v775 = vmul.f32 %v729, %v767
    %v776 = vld [vmem:[#allocation7] sm:$0x1]
    %v777 = vld [vmem:[#allocation7 + $0x1] sm:$0x1]
    %v778 = vlaneseq
    %v779 = vshrl.u32 %v778, 7
    %v780 = vperm.slane %v777, 0
    %vm781 = vcmp.ge.s32.totalorder %v779, %v780
    %v782 = vcvt.s32.f32 %v779
    %v783 = vmul.f32 %v782, 2.3841858e-07
    %v784 = vld [vmem:[#allocation8 + $0x20] sm:$0xff]
    %v785 = vld [vmem:[#allocation8 + $0x28] sm:$0xff]
    %v786 = vld [vmem:[#allocation8 + $0x30] sm:$0xff]
    %v787 = vld [vmem:[#allocation8 + $0x38] sm:$0xff]
    %v788 = vld [vmem:[#allocation8 + $0x40] sm:$0xff]
    %v789 = vld [vmem:[#allocation8 + $0x48] sm:$0xff]
    %v790 = vld [vmem:[#allocation8 + $0x50] sm:$0xff]
    %v791 = vld [vmem:[#allocation8 + $0x58] sm:$0xff]
    %v792 = vld [vmem:[#allocation8 + $0x60] sm:$0xff]
    %v793 = vld [vmem:[#allocation8 + $0x68] sm:$0xff]
    %v794 = vld [vmem:[#allocation8 + $0x70] sm:$0xff]
    %v795 = vld [vmem:[#allocation8 + $0x78] sm:$0xff]
    %v796 = vld [vmem:[#allocation8 + $0x80] sm:$0xff]
    %v797 = vmul.f32 %v111, %v175
    %v798 = vmul.f32 %v112, %v176
    %v799 = vmul.f32 %v113, %v177
    %v800 = vmul.f32 %v114, %v178
    %v801 = vmul.f32 %v111, %v179
    %v802 = vmul.f32 %v112, %v180
    %v803 = vmul.f32 %v113, %v181
    %v804 = vmul.f32 %v114, %v182
    %v805 = vmul.f32 %v111, %v183
    %v806 = vmul.f32 %v112, %v184
    %v807 = vmul.f32 %v113, %v185
    %v808 = vmul.f32 %v114, %v186
    %v809 = vmul.f32 %v111, %v187
    %v810 = vmul.f32 %v112, %v188
    %v811 = vmul.f32 %v113, %v189
    %v812 = vmul.f32 %v114, %v190
    %v813 = vmul.f32 %v111, %v191
    %v814 = vmul.f32 %v112, %v192
    %v815 = vmul.f32 %v113, %v193
    %v816 = vmul.f32 %v114, %v194
    %v817 = vmul.f32 %v111, %v195
    %v818 = vmul.f32 %v112, %v196
    %v819 = vmul.f32 %v113, %v197
    %v820 = vmul.f32 %v114, %v198
    %v821 = vmul.f32 %v111, %v199
    %v822 = vmul.f32 %v112, %v200
    %v823 = vmul.f32 %v113, %v201
    %v824 = vmul.f32 %v114, %v202
    %v825 = vmul.f32 %v111, %v203
    %v826 = vmul.f32 %v112, %v204
    %v827 = vmul.f32 %v113, %v205
    %v828 = vmul.f32 %v114, %v206
    %v829 = vadd.f32 %v797, %v798
    %v830 = vadd.f32 %v829, %v799
    %v831 = vadd.f32 %v830, %v800
    %v832 = vrot.slane %v831, 4
    %v833 = vadd.f32 %v831, %v832
    %v834 = vrot.slane %v833, 2
    %v835 = vadd.f32 %v833, %v834
    %v836 = vrot.slane %v835, 1
    %v837 = vadd.f32 %v835, %v836
    %v838 = vadd.f32 %v801, %v802
    %v839 = vadd.f32 %v838, %v803
    %v840 = vadd.f32 %v839, %v804
    %v841 = vrot.slane %v840, 4
    %v842 = vadd.f32 %v840, %v841
    %v843 = vrot.slane %v842, 2
    %v844 = vadd.f32 %v842, %v843
    %v845 = vrot.slane %v844, 1
    %v846 = vadd.f32 %v844, %v845
    %v847 = vadd.f32 %v805, %v806
    %v848 = vadd.f32 %v847, %v807
    %v849 = vadd.f32 %v848, %v808
    %v850 = vrot.slane %v849, 4
    %v851 = vadd.f32 %v849, %v850
    %v852 = vrot.slane %v851, 2
    %v853 = vadd.f32 %v851, %v852
    %v854 = vrot.slane %v853, 1
    %v855 = vadd.f32 %v853, %v854
    %v856 = vadd.f32 %v809, %v810
    %v857 = vadd.f32 %v856, %v811
    %v858 = vadd.f32 %v857, %v812
    %v859 = vrot.slane %v858, 4
    %v860 = vadd.f32 %v858, %v859
    %v861 = vrot.slane %v860, 2
    %v862 = vadd.f32 %v860, %v861
    %v863 = vrot.slane %v862, 1
    %v864 = vadd.f32 %v862, %v863
    %v865 = vadd.f32 %v813, %v814
    %v866 = vadd.f32 %v865, %v815
    %v867 = vadd.f32 %v866, %v816
    %v868 = vrot.slane %v867, 4
    %v869 = vadd.f32 %v867, %v868
    %v870 = vrot.slane %v869, 2
    %v871 = vadd.f32 %v869, %v870
    %v872 = vrot.slane %v871, 1
    %v873 = vadd.f32 %v871, %v872
    %v874 = vadd.f32 %v817, %v818
    %v875 = vadd.f32 %v874, %v819
    %v876 = vadd.f32 %v875, %v820
    %v877 = vrot.slane %v876, 4
    %v878 = vadd.f32 %v876, %v877
    %v879 = vrot.slane %v878, 2
    %v880 = vadd.f32 %v878, %v879
    %v881 = vrot.slane %v880, 1
    %v882 = vadd.f32 %v880, %v881
    %v883 = vadd.f32 %v821, %v822
    %v884 = vadd.f32 %v883, %v823
    %v885 = vadd.f32 %v884, %v824
    %v886 = vrot.slane %v885, 4
    %v887 = vadd.f32 %v885, %v886
    %v888 = vrot.slane %v887, 2
    %v889 = vadd.f32 %v887, %v888
    %v890 = vrot.slane %v889, 1
    %v891 = vadd.f32 %v889, %v890
    %v892 = vadd.f32 %v825, %v826
    %v893 = vadd.f32 %v892, %v827
    %v894 = vadd.f32 %v893, %v828
    %v895 = vrot.slane %v894, 4
    %v896 = vadd.f32 %v894, %v895
    %v897 = vrot.slane %v896, 2
    %v898 = vadd.f32 %v896, %v897
    %v899 = vrot.slane %v898, 1
    %v900 = vadd.f32 %v898, %v899
    %v901 = vmul.f32 %v837, %v328
    %v902 = vmul.f32 %v846, %v328
    %v903 = vmul.f32 %v855, %v328
    %v904 = vmul.f32 %v864, %v328
    %v905 = vmul.f32 %v873, %v328
    %v906 = vmul.f32 %v882, %v328
    %v907 = vmul.f32 %v891, %v328
    %v908 = vmul.f32 %v900, %v328
    %v909 = vmul.f32 %v901, %v520
    %v910 = vmul.f32 %v902, %v530
    %v911 = vmul.f32 %v903, %v540
    %v912 = vmul.f32 %v904, %v550
    %v913 = vmul.f32 %v905, %v560
    %v914 = vmul.f32 %v906, %v570
    %v915 = vmul.f32 %v907, %v580
    %v916 = vmul.f32 %v908, %v590
    %vm917 = vcmp.le.s32.totalorder %v776, 0
    %v918 = vsel %vm917, 1, 0
    %v919 = vperm.slane %v918, 0
    %vm920 = vcmp.eq.s32.totalorder %v919, 1
    %vm921 = vmor %vm781, %vm920
    %v930 = vrot.slane %v910, 7
    %v931 = vsel %vm739, %v930, %v909
    %v932 = vrot.slane %v911, 6
    %v933 = vsel %vm742, %v932, %v931
    %v934 = vrot.slane %v912, 5
    %v935 = vsel %vm745, %v934, %v933
    %v936 = vrot.slane %v913, 4
    %v937 = vsel %vm748, %v936, %v935
    %v938 = vrot.slane %v914, 3
    %v939 = vsel %vm751, %v938, %v937
    %v940 = vrot.slane %v915, 2
    %v941 = vsel %vm754, %v940, %v939
    %v942 = vrot.slane %v916, 1
    %v943 = vsel %vm757, %v942, %v941
    %v945 = vsel %vm921, 0.0, %v943
    %v946 = vsub.f32 %v945, %v783
    %v947 = vrot.slane %v946, 4
    %v948 = vmax.f32 %v946, %v947
    %v949 = vrot.slane %v948, 2
    %v950 = vmax.f32 %v948, %v949
    %v951 = vrot.slane %v950, 1
    %v952 = vmax.f32 %v950, %v951
    %vm953 = vcmp.eq.f32.partialorder %v946, %v952
    %v954 = vsel %vm953, -3e+38, %v946
    %v955 = vmul.f32 %v952, %v784
    %v956 = vmul.f32 %v952, %v785
    %v957 = vadd.f32 %v792, %v955
    %v958 = vadd.f32 %v793, %v956
    %v959 = vrot.slane %v954, 4
    %v960 = vmax.f32 %v954, %v959
    %v961 = vrot.slane %v960, 2
    %v962 = vmax.f32 %v960, %v961
    %v963 = vrot.slane %v962, 1
    %v964 = vmax.f32 %v962, %v963
    %vm965 = vcmp.eq.f32.partialorder %v954, %v964
    %v966 = vsel %vm965, -3e+38, %v954
    %v967 = vmul.f32 %v964, %v786
    %v968 = vmul.f32 %v964, %v787
    %v969 = vadd.f32 %v957, %v967
    %v970 = vadd.f32 %v958, %v968
    %v971 = vrot.slane %v966, 4
    %v972 = vmax.f32 %v966, %v971
    %v973 = vrot.slane %v972, 2
    %v974 = vmax.f32 %v972, %v973
    %v975 = vrot.slane %v974, 1
    %v976 = vmax.f32 %v974, %v975
    %vm977 = vcmp.eq.f32.partialorder %v966, %v976
    %v978 = vsel %vm977, -3e+38, %v966
    %v979 = vmul.f32 %v976, %v788
    %v980 = vmul.f32 %v976, %v789
    %v981 = vadd.f32 %v969, %v979
    %v982 = vadd.f32 %v970, %v980
    %v983 = vrot.slane %v978, 4
    %v984 = vmax.f32 %v978, %v983
    %v985 = vrot.slane %v984, 2
    %v986 = vmax.f32 %v984, %v985
    %v987 = vrot.slane %v986, 1
    %v988 = vmax.f32 %v986, %v987
    %v989 = vmul.f32 %v988, %v790
    %v990 = vmul.f32 %v988, %v791
    %v991 = vadd.f32 %v981, %v989
    %v992 = vadd.f32 %v982, %v990
    %vm993 = vcmp.gt.f32.partialorder %v991, 20.0
    %vm994 = vcmp.gt.f32.partialorder %v992, 20.0
    %v995 = vmin.f32 %v991, 20.0
    %v996 = vmin.f32 %v992, 20.0
    %v997 = vmul.f32 %v995, 1.442695
    %v998 = vpow.pop %v997
    %v999 = vmul.f32 %v996, 1.442695
    %v1000 = vpow.pop %v999
    %v1001 = vadd.f32 %v998, 1.0
    %v1002 = vlog2.pop %v1001
    %v1003 = vmul.f32 %v1002, 0.6931472
    %v1004 = vmul.f32 -0.5, %v998
    %v1005 = vadd.f32 %v1004, 1.0
    %v1006 = vmul.f32 %v1005, %v998
    %v1007 = vand.u32 2147483647, %v998
    %vm1008 = vcmp.lt.f32.partialorder %v1007, 0.0004427343
    %v1009 = vsel %vm1008, %v1006, %v1003
    %v1010 = vadd.f32 %v1000, 1.0
    %v1011 = vlog2.pop %v1010
    %v1012 = vmul.f32 %v1011, 0.6931472
    %v1013 = vmul.f32 -0.5, %v1000
    %v1014 = vadd.f32 %v1013, 1.0
    %v1015 = vmul.f32 %v1014, %v1000
    %v1016 = vand.u32 2147483647, %v1000
    %vm1017 = vcmp.lt.f32.partialorder %v1016, 0.0004427343
    %v1018 = vsel %vm1017, %v1015, %v1012
    %v1019 = vsel %vm993, %v991, %v1009
    %v1020 = vsel %vm994, %v992, %v1018
    %v1021 = vmul.f32 %v1019, %v794
    %v1022 = vmul.f32 %v1020, %v795
    %v1023 = vadd.f32 %v1021, %v1022
    %v1024 = vrot.slane %v1023, 4
    %v1025 = vadd.f32 %v1023, %v1024
    %v1026 = vrot.slane %v1025, 2
    %v1027 = vadd.f32 %v1025, %v1026
    %v1028 = vrot.slane %v1027, 1
    %v1029 = vadd.f32 %v1027, %v1028
    %v1030 = vadd.f32 %v1029, %v796
    %vm1031 = vcmp.gt.f32.partialorder %v1030, 20.0
    %v1032 = vmin.f32 %v1030, 20.0
    %v1033 = vmul.f32 %v1032, 1.442695
    %v1034 = vpow.pop %v1033
    %v1035 = vadd.f32 %v1034, 1.0
    %v1036 = vlog2.pop %v1035
    %v1037 = vmul.f32 %v1036, 0.6931472
    %v1038 = vmul.f32 -0.5, %v1034
    %v1039 = vadd.f32 %v1038, 1.0
    %v1040 = vmul.f32 %v1039, %v1034
    %v1041 = vand.u32 2147483647, %v1034
    %vm1042 = vcmp.lt.f32.partialorder %v1041, 0.0004427343
    %v1043 = vsel %vm1042, %v1040, %v1037
    %v1044 = vsel %vm1031, %v1030, %v1043
    %v1045 = vmul.f32 %v1044, %v768
    %v1046 = vadd.f32 %v1045, 0.0
    %v1047 = vmul.f32 %v115, %v175
    %v1048 = vmul.f32 %v116, %v176
    %v1049 = vmul.f32 %v117, %v177
    %v1050 = vmul.f32 %v118, %v178
    %v1051 = vmul.f32 %v115, %v179
    %v1052 = vmul.f32 %v116, %v180
    %v1053 = vmul.f32 %v117, %v181
    %v1054 = vmul.f32 %v118, %v182
    %v1055 = vmul.f32 %v115, %v183
    %v1056 = vmul.f32 %v116, %v184
    %v1057 = vmul.f32 %v117, %v185
    %v1058 = vmul.f32 %v118, %v186
    %v1059 = vmul.f32 %v115, %v187
    %v1060 = vmul.f32 %v116, %v188
    %v1061 = vmul.f32 %v117, %v189
    %v1062 = vmul.f32 %v118, %v190
    %v1063 = vmul.f32 %v115, %v191
    %v1064 = vmul.f32 %v116, %v192
    %v1065 = vmul.f32 %v117, %v193
    %v1066 = vmul.f32 %v118, %v194
    %v1067 = vmul.f32 %v115, %v195
    %v1068 = vmul.f32 %v116, %v196
    %v1069 = vmul.f32 %v117, %v197
    %v1070 = vmul.f32 %v118, %v198
    %v1071 = vmul.f32 %v115, %v199
    %v1072 = vmul.f32 %v116, %v200
    %v1073 = vmul.f32 %v117, %v201
    %v1074 = vmul.f32 %v118, %v202
    %v1075 = vmul.f32 %v115, %v203
    %v1076 = vmul.f32 %v116, %v204
    %v1077 = vmul.f32 %v117, %v205
    %v1078 = vmul.f32 %v118, %v206
    %v1079 = vadd.f32 %v1047, %v1048
    %v1080 = vadd.f32 %v1079, %v1049
    %v1081 = vadd.f32 %v1080, %v1050
    %v1082 = vrot.slane %v1081, 4
    %v1083 = vadd.f32 %v1081, %v1082
    %v1084 = vrot.slane %v1083, 2
    %v1085 = vadd.f32 %v1083, %v1084
    %v1086 = vrot.slane %v1085, 1
    %v1087 = vadd.f32 %v1085, %v1086
    %v1088 = vadd.f32 %v1051, %v1052
    %v1089 = vadd.f32 %v1088, %v1053
    %v1090 = vadd.f32 %v1089, %v1054
    %v1091 = vrot.slane %v1090, 4
    %v1092 = vadd.f32 %v1090, %v1091
    %v1093 = vrot.slane %v1092, 2
    %v1094 = vadd.f32 %v1092, %v1093
    %v1095 = vrot.slane %v1094, 1
    %v1096 = vadd.f32 %v1094, %v1095
    %v1097 = vadd.f32 %v1055, %v1056
    %v1098 = vadd.f32 %v1097, %v1057
    %v1099 = vadd.f32 %v1098, %v1058
    %v1100 = vrot.slane %v1099, 4
    %v1101 = vadd.f32 %v1099, %v1100
    %v1102 = vrot.slane %v1101, 2
    %v1103 = vadd.f32 %v1101, %v1102
    %v1104 = vrot.slane %v1103, 1
    %v1105 = vadd.f32 %v1103, %v1104
    %v1106 = vadd.f32 %v1059, %v1060
    %v1107 = vadd.f32 %v1106, %v1061
    %v1108 = vadd.f32 %v1107, %v1062
    %v1109 = vrot.slane %v1108, 4
    %v1110 = vadd.f32 %v1108, %v1109
    %v1111 = vrot.slane %v1110, 2
    %v1112 = vadd.f32 %v1110, %v1111
    %v1113 = vrot.slane %v1112, 1
    %v1114 = vadd.f32 %v1112, %v1113
    %v1115 = vadd.f32 %v1063, %v1064
    %v1116 = vadd.f32 %v1115, %v1065
    %v1117 = vadd.f32 %v1116, %v1066
    %v1118 = vrot.slane %v1117, 4
    %v1119 = vadd.f32 %v1117, %v1118
    %v1120 = vrot.slane %v1119, 2
    %v1121 = vadd.f32 %v1119, %v1120
    %v1122 = vrot.slane %v1121, 1
    %v1123 = vadd.f32 %v1121, %v1122
    %v1124 = vadd.f32 %v1067, %v1068
    %v1125 = vadd.f32 %v1124, %v1069
    %v1126 = vadd.f32 %v1125, %v1070
    %v1127 = vrot.slane %v1126, 4
    %v1128 = vadd.f32 %v1126, %v1127
    %v1129 = vrot.slane %v1128, 2
    %v1130 = vadd.f32 %v1128, %v1129
    %v1131 = vrot.slane %v1130, 1
    %v1132 = vadd.f32 %v1130, %v1131
    %v1133 = vadd.f32 %v1071, %v1072
    %v1134 = vadd.f32 %v1133, %v1073
    %v1135 = vadd.f32 %v1134, %v1074
    %v1136 = vrot.slane %v1135, 4
    %v1137 = vadd.f32 %v1135, %v1136
    %v1138 = vrot.slane %v1137, 2
    %v1139 = vadd.f32 %v1137, %v1138
    %v1140 = vrot.slane %v1139, 1
    %v1141 = vadd.f32 %v1139, %v1140
    %v1142 = vadd.f32 %v1075, %v1076
    %v1143 = vadd.f32 %v1142, %v1077
    %v1144 = vadd.f32 %v1143, %v1078
    %v1145 = vrot.slane %v1144, 4
    %v1146 = vadd.f32 %v1144, %v1145
    %v1147 = vrot.slane %v1146, 2
    %v1148 = vadd.f32 %v1146, %v1147
    %v1149 = vrot.slane %v1148, 1
    %v1150 = vadd.f32 %v1148, %v1149
    %v1151 = vmul.f32 %v1087, %v338
    %v1152 = vmul.f32 %v1096, %v338
    %v1153 = vmul.f32 %v1105, %v338
    %v1154 = vmul.f32 %v1114, %v338
    %v1155 = vmul.f32 %v1123, %v338
    %v1156 = vmul.f32 %v1132, %v338
    %v1157 = vmul.f32 %v1141, %v338
    %v1158 = vmul.f32 %v1150, %v338
    %v1159 = vmul.f32 %v1151, %v520
    %v1160 = vmul.f32 %v1152, %v530
    %v1161 = vmul.f32 %v1153, %v540
    %v1162 = vmul.f32 %v1154, %v550
    %v1163 = vmul.f32 %v1155, %v560
    %v1164 = vmul.f32 %v1156, %v570
    %v1165 = vmul.f32 %v1157, %v580
    %v1166 = vmul.f32 %v1158, %v590
    %vm1167 = vcmp.le.s32.totalorder %v776, 1
    %v1168 = vsel %vm1167, 1, 0
    %v1169 = vperm.slane %v1168, 0
    %vm1170 = vcmp.eq.s32.totalorder %v1169, 1
    %vm1171 = vmor %vm781, %vm1170
    %v1180 = vrot.slane %v1160, 7
    %v1181 = vsel %vm739, %v1180, %v1159
    %v1182 = vrot.slane %v1161, 6
    %v1183 = vsel %vm742, %v1182, %v1181
    %v1184 = vrot.slane %v1162, 5
    %v1185 = vsel %vm745, %v1184, %v1183
    %v1186 = vrot.slane %v1163, 4
    %v1187 = vsel %vm748, %v1186, %v1185
    %v1188 = vrot.slane %v1164, 3
    %v1189 = vsel %vm751, %v1188, %v1187
    %v1190 = vrot.slane %v1165, 2
    %v1191 = vsel %vm754, %v1190, %v1189
    %v1192 = vrot.slane %v1166, 1
    %v1193 = vsel %vm757, %v1192, %v1191
    %v1195 = vsel %vm1171, 0.0, %v1193
    %v1196 = vsub.f32 %v1195, %v783
    %v1197 = vrot.slane %v1196, 4
    %v1198 = vmax.f32 %v1196, %v1197
    %v1199 = vrot.slane %v1198, 2
    %v1200 = vmax.f32 %v1198, %v1199
    %v1201 = vrot.slane %v1200, 1
    %v1202 = vmax.f32 %v1200, %v1201
    %vm1203 = vcmp.eq.f32.partialorder %v1196, %v1202
    %v1204 = vsel %vm1203, -3e+38, %v1196
    %v1205 = vmul.f32 %v1202, %v784
    %v1206 = vmul.f32 %v1202, %v785
    %v1207 = vadd.f32 %v792, %v1205
    %v1208 = vadd.f32 %v793, %v1206
    %v1209 = vrot.slane %v1204, 4
    %v1210 = vmax.f32 %v1204, %v1209
    %v1211 = vrot.slane %v1210, 2
    %v1212 = vmax.f32 %v1210, %v1211
    %v1213 = vrot.slane %v1212, 1
    %v1214 = vmax.f32 %v1212, %v1213
    %vm1215 = vcmp.eq.f32.partialorder %v1204, %v1214
    %v1216 = vsel %vm1215, -3e+38, %v1204
    %v1217 = vmul.f32 %v1214, %v786
    %v1218 = vmul.f32 %v1214, %v787
    %v1219 = vadd.f32 %v1207, %v1217
    %v1220 = vadd.f32 %v1208, %v1218
    %v1221 = vrot.slane %v1216, 4
    %v1222 = vmax.f32 %v1216, %v1221
    %v1223 = vrot.slane %v1222, 2
    %v1224 = vmax.f32 %v1222, %v1223
    %v1225 = vrot.slane %v1224, 1
    %v1226 = vmax.f32 %v1224, %v1225
    %vm1227 = vcmp.eq.f32.partialorder %v1216, %v1226
    %v1228 = vsel %vm1227, -3e+38, %v1216
    %v1229 = vmul.f32 %v1226, %v788
    %v1230 = vmul.f32 %v1226, %v789
    %v1231 = vadd.f32 %v1219, %v1229
    %v1232 = vadd.f32 %v1220, %v1230
    %v1233 = vrot.slane %v1228, 4
    %v1234 = vmax.f32 %v1228, %v1233
    %v1235 = vrot.slane %v1234, 2
    %v1236 = vmax.f32 %v1234, %v1235
    %v1237 = vrot.slane %v1236, 1
    %v1238 = vmax.f32 %v1236, %v1237
    %v1239 = vmul.f32 %v1238, %v790
    %v1240 = vmul.f32 %v1238, %v791
    %v1241 = vadd.f32 %v1231, %v1239
    %v1242 = vadd.f32 %v1232, %v1240
    %vm1243 = vcmp.gt.f32.partialorder %v1241, 20.0
    %vm1244 = vcmp.gt.f32.partialorder %v1242, 20.0
    %v1245 = vmin.f32 %v1241, 20.0
    %v1246 = vmin.f32 %v1242, 20.0
    %v1247 = vmul.f32 %v1245, 1.442695
    %v1248 = vpow.pop %v1247
    %v1249 = vmul.f32 %v1246, 1.442695
    %v1250 = vpow.pop %v1249
    %v1251 = vadd.f32 %v1248, 1.0
    %v1252 = vlog2.pop %v1251
    %v1253 = vmul.f32 %v1252, 0.6931472
    %v1254 = vmul.f32 -0.5, %v1248
    %v1255 = vadd.f32 %v1254, 1.0
    %v1256 = vmul.f32 %v1255, %v1248
    %v1257 = vand.u32 2147483647, %v1248
    %vm1258 = vcmp.lt.f32.partialorder %v1257, 0.0004427343
    %v1259 = vsel %vm1258, %v1256, %v1253
    %v1260 = vadd.f32 %v1250, 1.0
    %v1261 = vlog2.pop %v1260
    %v1262 = vmul.f32 %v1261, 0.6931472
    %v1263 = vmul.f32 -0.5, %v1250
    %v1264 = vadd.f32 %v1263, 1.0
    %v1265 = vmul.f32 %v1264, %v1250
    %v1266 = vand.u32 2147483647, %v1250
    %vm1267 = vcmp.lt.f32.partialorder %v1266, 0.0004427343
    %v1268 = vsel %vm1267, %v1265, %v1262
    %v1269 = vsel %vm1243, %v1241, %v1259
    %v1270 = vsel %vm1244, %v1242, %v1268
    %v1271 = vmul.f32 %v1269, %v794
    %v1272 = vmul.f32 %v1270, %v795
    %v1273 = vadd.f32 %v1271, %v1272
    %v1274 = vrot.slane %v1273, 4
    %v1275 = vadd.f32 %v1273, %v1274
    %v1276 = vrot.slane %v1275, 2
    %v1277 = vadd.f32 %v1275, %v1276
    %v1278 = vrot.slane %v1277, 1
    %v1279 = vadd.f32 %v1277, %v1278
    %v1280 = vadd.f32 %v1279, %v796
    %vm1281 = vcmp.gt.f32.partialorder %v1280, 20.0
    %v1282 = vmin.f32 %v1280, 20.0
    %v1283 = vmul.f32 %v1282, 1.442695
    %v1284 = vpow.pop %v1283
    %v1285 = vadd.f32 %v1284, 1.0
    %v1286 = vlog2.pop %v1285
    %v1287 = vmul.f32 %v1286, 0.6931472
    %v1288 = vmul.f32 -0.5, %v1284
    %v1289 = vadd.f32 %v1288, 1.0
    %v1290 = vmul.f32 %v1289, %v1284
    %v1291 = vand.u32 2147483647, %v1284
    %vm1292 = vcmp.lt.f32.partialorder %v1291, 0.0004427343
    %v1293 = vsel %vm1292, %v1290, %v1287
    %v1294 = vsel %vm1281, %v1280, %v1293
    %v1295 = vmul.f32 %v1294, %v769
    %v1296 = vadd.f32 %v1046, %v1295
    %v1297 = vmul.f32 %v119, %v175
    %v1298 = vmul.f32 %v120, %v176
    %v1299 = vmul.f32 %v121, %v177
    %v1300 = vmul.f32 %v122, %v178
    %v1301 = vmul.f32 %v119, %v179
    %v1302 = vmul.f32 %v120, %v180
    %v1303 = vmul.f32 %v121, %v181
    %v1304 = vmul.f32 %v122, %v182
    %v1305 = vmul.f32 %v119, %v183
    %v1306 = vmul.f32 %v120, %v184
    %v1307 = vmul.f32 %v121, %v185
    %v1308 = vmul.f32 %v122, %v186
    %v1309 = vmul.f32 %v119, %v187
    %v1310 = vmul.f32 %v120, %v188
    %v1311 = vmul.f32 %v121, %v189
    %v1312 = vmul.f32 %v122, %v190
    %v1313 = vmul.f32 %v119, %v191
    %v1314 = vmul.f32 %v120, %v192
    %v1315 = vmul.f32 %v121, %v193
    %v1316 = vmul.f32 %v122, %v194
    %v1317 = vmul.f32 %v119, %v195
    %v1318 = vmul.f32 %v120, %v196
    %v1319 = vmul.f32 %v121, %v197
    %v1320 = vmul.f32 %v122, %v198
    %v1321 = vmul.f32 %v119, %v199
    %v1322 = vmul.f32 %v120, %v200
    %v1323 = vmul.f32 %v121, %v201
    %v1324 = vmul.f32 %v122, %v202
    %v1325 = vmul.f32 %v119, %v203
    %v1326 = vmul.f32 %v120, %v204
    %v1327 = vmul.f32 %v121, %v205
    %v1328 = vmul.f32 %v122, %v206
    %v1329 = vadd.f32 %v1297, %v1298
    %v1330 = vadd.f32 %v1329, %v1299
    %v1331 = vadd.f32 %v1330, %v1300
    %v1332 = vrot.slane %v1331, 4
    %v1333 = vadd.f32 %v1331, %v1332
    %v1334 = vrot.slane %v1333, 2
    %v1335 = vadd.f32 %v1333, %v1334
    %v1336 = vrot.slane %v1335, 1
    %v1337 = vadd.f32 %v1335, %v1336
    %v1338 = vadd.f32 %v1301, %v1302
    %v1339 = vadd.f32 %v1338, %v1303
    %v1340 = vadd.f32 %v1339, %v1304
    %v1341 = vrot.slane %v1340, 4
    %v1342 = vadd.f32 %v1340, %v1341
    %v1343 = vrot.slane %v1342, 2
    %v1344 = vadd.f32 %v1342, %v1343
    %v1345 = vrot.slane %v1344, 1
    %v1346 = vadd.f32 %v1344, %v1345
    %v1347 = vadd.f32 %v1305, %v1306
    %v1348 = vadd.f32 %v1347, %v1307
    %v1349 = vadd.f32 %v1348, %v1308
    %v1350 = vrot.slane %v1349, 4
    %v1351 = vadd.f32 %v1349, %v1350
    %v1352 = vrot.slane %v1351, 2
    %v1353 = vadd.f32 %v1351, %v1352
    %v1354 = vrot.slane %v1353, 1
    %v1355 = vadd.f32 %v1353, %v1354
    %v1356 = vadd.f32 %v1309, %v1310
    %v1357 = vadd.f32 %v1356, %v1311
    %v1358 = vadd.f32 %v1357, %v1312
    %v1359 = vrot.slane %v1358, 4
    %v1360 = vadd.f32 %v1358, %v1359
    %v1361 = vrot.slane %v1360, 2
    %v1362 = vadd.f32 %v1360, %v1361
    %v1363 = vrot.slane %v1362, 1
    %v1364 = vadd.f32 %v1362, %v1363
    %v1365 = vadd.f32 %v1313, %v1314
    %v1366 = vadd.f32 %v1365, %v1315
    %v1367 = vadd.f32 %v1366, %v1316
    %v1368 = vrot.slane %v1367, 4
    %v1369 = vadd.f32 %v1367, %v1368
    %v1370 = vrot.slane %v1369, 2
    %v1371 = vadd.f32 %v1369, %v1370
    %v1372 = vrot.slane %v1371, 1
    %v1373 = vadd.f32 %v1371, %v1372
    %v1374 = vadd.f32 %v1317, %v1318
    %v1375 = vadd.f32 %v1374, %v1319
    %v1376 = vadd.f32 %v1375, %v1320
    %v1377 = vrot.slane %v1376, 4
    %v1378 = vadd.f32 %v1376, %v1377
    %v1379 = vrot.slane %v1378, 2
    %v1380 = vadd.f32 %v1378, %v1379
    %v1381 = vrot.slane %v1380, 1
    %v1382 = vadd.f32 %v1380, %v1381
    %v1383 = vadd.f32 %v1321, %v1322
    %v1384 = vadd.f32 %v1383, %v1323
    %v1385 = vadd.f32 %v1384, %v1324
    %v1386 = vrot.slane %v1385, 4
    %v1387 = vadd.f32 %v1385, %v1386
    %v1388 = vrot.slane %v1387, 2
    %v1389 = vadd.f32 %v1387, %v1388
    %v1390 = vrot.slane %v1389, 1
    %v1391 = vadd.f32 %v1389, %v1390
    %v1392 = vadd.f32 %v1325, %v1326
    %v1393 = vadd.f32 %v1392, %v1327
    %v1394 = vadd.f32 %v1393, %v1328
    %v1395 = vrot.slane %v1394, 4
    %v1396 = vadd.f32 %v1394, %v1395
    %v1397 = vrot.slane %v1396, 2
    %v1398 = vadd.f32 %v1396, %v1397
    %v1399 = vrot.slane %v1398, 1
    %v1400 = vadd.f32 %v1398, %v1399
    %v1401 = vmul.f32 %v1337, %v348
    %v1402 = vmul.f32 %v1346, %v348
    %v1403 = vmul.f32 %v1355, %v348
    %v1404 = vmul.f32 %v1364, %v348
    %v1405 = vmul.f32 %v1373, %v348
    %v1406 = vmul.f32 %v1382, %v348
    %v1407 = vmul.f32 %v1391, %v348
    %v1408 = vmul.f32 %v1400, %v348
    %v1409 = vmul.f32 %v1401, %v520
    %v1410 = vmul.f32 %v1402, %v530
    %v1411 = vmul.f32 %v1403, %v540
    %v1412 = vmul.f32 %v1404, %v550
    %v1413 = vmul.f32 %v1405, %v560
    %v1414 = vmul.f32 %v1406, %v570
    %v1415 = vmul.f32 %v1407, %v580
    %v1416 = vmul.f32 %v1408, %v590
    %vm1417 = vcmp.le.s32.totalorder %v776, 2
    %v1418 = vsel %vm1417, 1, 0
    %v1419 = vperm.slane %v1418, 0
    %vm1420 = vcmp.eq.s32.totalorder %v1419, 1
    %vm1421 = vmor %vm781, %vm1420
    %v1430 = vrot.slane %v1410, 7
    %v1431 = vsel %vm739, %v1430, %v1409
    %v1432 = vrot.slane %v1411, 6
    %v1433 = vsel %vm742, %v1432, %v1431
    %v1434 = vrot.slane %v1412, 5
    %v1435 = vsel %vm745, %v1434, %v1433
    %v1436 = vrot.slane %v1413, 4
    %v1437 = vsel %vm748, %v1436, %v1435
    %v1438 = vrot.slane %v1414, 3
    %v1439 = vsel %vm751, %v1438, %v1437
    %v1440 = vrot.slane %v1415, 2
    %v1441 = vsel %vm754, %v1440, %v1439
    %v1442 = vrot.slane %v1416, 1
    %v1443 = vsel %vm757, %v1442, %v1441
    %v1445 = vsel %vm1421, 0.0, %v1443
    %v1446 = vsub.f32 %v1445, %v783
    %v1447 = vrot.slane %v1446, 4
    %v1448 = vmax.f32 %v1446, %v1447
    %v1449 = vrot.slane %v1448, 2
    %v1450 = vmax.f32 %v1448, %v1449
    %v1451 = vrot.slane %v1450, 1
    %v1452 = vmax.f32 %v1450, %v1451
    %vm1453 = vcmp.eq.f32.partialorder %v1446, %v1452
    %v1454 = vsel %vm1453, -3e+38, %v1446
    %v1455 = vmul.f32 %v1452, %v784
    %v1456 = vmul.f32 %v1452, %v785
    %v1457 = vadd.f32 %v792, %v1455
    %v1458 = vadd.f32 %v793, %v1456
    %v1459 = vrot.slane %v1454, 4
    %v1460 = vmax.f32 %v1454, %v1459
    %v1461 = vrot.slane %v1460, 2
    %v1462 = vmax.f32 %v1460, %v1461
    %v1463 = vrot.slane %v1462, 1
    %v1464 = vmax.f32 %v1462, %v1463
    %vm1465 = vcmp.eq.f32.partialorder %v1454, %v1464
    %v1466 = vsel %vm1465, -3e+38, %v1454
    %v1467 = vmul.f32 %v1464, %v786
    %v1468 = vmul.f32 %v1464, %v787
    %v1469 = vadd.f32 %v1457, %v1467
    %v1470 = vadd.f32 %v1458, %v1468
    %v1471 = vrot.slane %v1466, 4
    %v1472 = vmax.f32 %v1466, %v1471
    %v1473 = vrot.slane %v1472, 2
    %v1474 = vmax.f32 %v1472, %v1473
    %v1475 = vrot.slane %v1474, 1
    %v1476 = vmax.f32 %v1474, %v1475
    %vm1477 = vcmp.eq.f32.partialorder %v1466, %v1476
    %v1478 = vsel %vm1477, -3e+38, %v1466
    %v1479 = vmul.f32 %v1476, %v788
    %v1480 = vmul.f32 %v1476, %v789
    %v1481 = vadd.f32 %v1469, %v1479
    %v1482 = vadd.f32 %v1470, %v1480
    %v1483 = vrot.slane %v1478, 4
    %v1484 = vmax.f32 %v1478, %v1483
    %v1485 = vrot.slane %v1484, 2
    %v1486 = vmax.f32 %v1484, %v1485
    %v1487 = vrot.slane %v1486, 1
    %v1488 = vmax.f32 %v1486, %v1487
    %v1489 = vmul.f32 %v1488, %v790
    %v1490 = vmul.f32 %v1488, %v791
    %v1491 = vadd.f32 %v1481, %v1489
    %v1492 = vadd.f32 %v1482, %v1490
    %vm1493 = vcmp.gt.f32.partialorder %v1491, 20.0
    %vm1494 = vcmp.gt.f32.partialorder %v1492, 20.0
    %v1495 = vmin.f32 %v1491, 20.0
    %v1496 = vmin.f32 %v1492, 20.0
    %v1497 = vmul.f32 %v1495, 1.442695
    %v1498 = vpow.pop %v1497
    %v1499 = vmul.f32 %v1496, 1.442695
    %v1500 = vpow.pop %v1499
    %v1501 = vadd.f32 %v1498, 1.0
    %v1502 = vlog2.pop %v1501
    %v1503 = vmul.f32 %v1502, 0.6931472
    %v1504 = vmul.f32 -0.5, %v1498
    %v1505 = vadd.f32 %v1504, 1.0
    %v1506 = vmul.f32 %v1505, %v1498
    %v1507 = vand.u32 2147483647, %v1498
    %vm1508 = vcmp.lt.f32.partialorder %v1507, 0.0004427343
    %v1509 = vsel %vm1508, %v1506, %v1503
    %v1510 = vadd.f32 %v1500, 1.0
    %v1511 = vlog2.pop %v1510
    %v1512 = vmul.f32 %v1511, 0.6931472
    %v1513 = vmul.f32 -0.5, %v1500
    %v1514 = vadd.f32 %v1513, 1.0
    %v1515 = vmul.f32 %v1514, %v1500
    %v1516 = vand.u32 2147483647, %v1500
    %vm1517 = vcmp.lt.f32.partialorder %v1516, 0.0004427343
    %v1518 = vsel %vm1517, %v1515, %v1512
    %v1519 = vsel %vm1493, %v1491, %v1509
    %v1520 = vsel %vm1494, %v1492, %v1518
    %v1521 = vmul.f32 %v1519, %v794
    %v1522 = vmul.f32 %v1520, %v795
    %v1523 = vadd.f32 %v1521, %v1522
    %v1524 = vrot.slane %v1523, 4
    %v1525 = vadd.f32 %v1523, %v1524
    %v1526 = vrot.slane %v1525, 2
    %v1527 = vadd.f32 %v1525, %v1526
    %v1528 = vrot.slane %v1527, 1
    %v1529 = vadd.f32 %v1527, %v1528
    %v1530 = vadd.f32 %v1529, %v796
    %vm1531 = vcmp.gt.f32.partialorder %v1530, 20.0
    %v1532 = vmin.f32 %v1530, 20.0
    %v1533 = vmul.f32 %v1532, 1.442695
    %v1534 = vpow.pop %v1533
    %v1535 = vadd.f32 %v1534, 1.0
    %v1536 = vlog2.pop %v1535
    %v1537 = vmul.f32 %v1536, 0.6931472
    %v1538 = vmul.f32 -0.5, %v1534
    %v1539 = vadd.f32 %v1538, 1.0
    %v1540 = vmul.f32 %v1539, %v1534
    %v1541 = vand.u32 2147483647, %v1534
    %vm1542 = vcmp.lt.f32.partialorder %v1541, 0.0004427343
    %v1543 = vsel %vm1542, %v1540, %v1537
    %v1544 = vsel %vm1531, %v1530, %v1543
    %v1545 = vmul.f32 %v1544, %v770
    %v1546 = vadd.f32 %v1296, %v1545
    %v1547 = vmul.f32 %v123, %v175
    %v1548 = vmul.f32 %v124, %v176
    %v1549 = vmul.f32 %v125, %v177
    %v1550 = vmul.f32 %v126, %v178
    %v1551 = vmul.f32 %v123, %v179
    %v1552 = vmul.f32 %v124, %v180
    %v1553 = vmul.f32 %v125, %v181
    %v1554 = vmul.f32 %v126, %v182
    %v1555 = vmul.f32 %v123, %v183
    %v1556 = vmul.f32 %v124, %v184
    %v1557 = vmul.f32 %v125, %v185
    %v1558 = vmul.f32 %v126, %v186
    %v1559 = vmul.f32 %v123, %v187
    %v1560 = vmul.f32 %v124, %v188
    %v1561 = vmul.f32 %v125, %v189
    %v1562 = vmul.f32 %v126, %v190
    %v1563 = vmul.f32 %v123, %v191
    %v1564 = vmul.f32 %v124, %v192
    %v1565 = vmul.f32 %v125, %v193
    %v1566 = vmul.f32 %v126, %v194
    %v1567 = vmul.f32 %v123, %v195
    %v1568 = vmul.f32 %v124, %v196
    %v1569 = vmul.f32 %v125, %v197
    %v1570 = vmul.f32 %v126, %v198
    %v1571 = vmul.f32 %v123, %v199
    %v1572 = vmul.f32 %v124, %v200
    %v1573 = vmul.f32 %v125, %v201
    %v1574 = vmul.f32 %v126, %v202
    %v1575 = vmul.f32 %v123, %v203
    %v1576 = vmul.f32 %v124, %v204
    %v1577 = vmul.f32 %v125, %v205
    %v1578 = vmul.f32 %v126, %v206
    %v1579 = vadd.f32 %v1547, %v1548
    %v1580 = vadd.f32 %v1579, %v1549
    %v1581 = vadd.f32 %v1580, %v1550
    %v1582 = vrot.slane %v1581, 4
    %v1583 = vadd.f32 %v1581, %v1582
    %v1584 = vrot.slane %v1583, 2
    %v1585 = vadd.f32 %v1583, %v1584
    %v1586 = vrot.slane %v1585, 1
    %v1587 = vadd.f32 %v1585, %v1586
    %v1588 = vadd.f32 %v1551, %v1552
    %v1589 = vadd.f32 %v1588, %v1553
    %v1590 = vadd.f32 %v1589, %v1554
    %v1591 = vrot.slane %v1590, 4
    %v1592 = vadd.f32 %v1590, %v1591
    %v1593 = vrot.slane %v1592, 2
    %v1594 = vadd.f32 %v1592, %v1593
    %v1595 = vrot.slane %v1594, 1
    %v1596 = vadd.f32 %v1594, %v1595
    %v1597 = vadd.f32 %v1555, %v1556
    %v1598 = vadd.f32 %v1597, %v1557
    %v1599 = vadd.f32 %v1598, %v1558
    %v1600 = vrot.slane %v1599, 4
    %v1601 = vadd.f32 %v1599, %v1600
    %v1602 = vrot.slane %v1601, 2
    %v1603 = vadd.f32 %v1601, %v1602
    %v1604 = vrot.slane %v1603, 1
    %v1605 = vadd.f32 %v1603, %v1604
    %v1606 = vadd.f32 %v1559, %v1560
    %v1607 = vadd.f32 %v1606, %v1561
    %v1608 = vadd.f32 %v1607, %v1562
    %v1609 = vrot.slane %v1608, 4
    %v1610 = vadd.f32 %v1608, %v1609
    %v1611 = vrot.slane %v1610, 2
    %v1612 = vadd.f32 %v1610, %v1611
    %v1613 = vrot.slane %v1612, 1
    %v1614 = vadd.f32 %v1612, %v1613
    %v1615 = vadd.f32 %v1563, %v1564
    %v1616 = vadd.f32 %v1615, %v1565
    %v1617 = vadd.f32 %v1616, %v1566
    %v1618 = vrot.slane %v1617, 4
    %v1619 = vadd.f32 %v1617, %v1618
    %v1620 = vrot.slane %v1619, 2
    %v1621 = vadd.f32 %v1619, %v1620
    %v1622 = vrot.slane %v1621, 1
    %v1623 = vadd.f32 %v1621, %v1622
    %v1624 = vadd.f32 %v1567, %v1568
    %v1625 = vadd.f32 %v1624, %v1569
    %v1626 = vadd.f32 %v1625, %v1570
    %v1627 = vrot.slane %v1626, 4
    %v1628 = vadd.f32 %v1626, %v1627
    %v1629 = vrot.slane %v1628, 2
    %v1630 = vadd.f32 %v1628, %v1629
    %v1631 = vrot.slane %v1630, 1
    %v1632 = vadd.f32 %v1630, %v1631
    %v1633 = vadd.f32 %v1571, %v1572
    %v1634 = vadd.f32 %v1633, %v1573
    %v1635 = vadd.f32 %v1634, %v1574
    %v1636 = vrot.slane %v1635, 4
    %v1637 = vadd.f32 %v1635, %v1636
    %v1638 = vrot.slane %v1637, 2
    %v1639 = vadd.f32 %v1637, %v1638
    %v1640 = vrot.slane %v1639, 1
    %v1641 = vadd.f32 %v1639, %v1640
    %v1642 = vadd.f32 %v1575, %v1576
    %v1643 = vadd.f32 %v1642, %v1577
    %v1644 = vadd.f32 %v1643, %v1578
    %v1645 = vrot.slane %v1644, 4
    %v1646 = vadd.f32 %v1644, %v1645
    %v1647 = vrot.slane %v1646, 2
    %v1648 = vadd.f32 %v1646, %v1647
    %v1649 = vrot.slane %v1648, 1
    %v1650 = vadd.f32 %v1648, %v1649
    %v1651 = vmul.f32 %v1587, %v358
    %v1652 = vmul.f32 %v1596, %v358
    %v1653 = vmul.f32 %v1605, %v358
    %v1654 = vmul.f32 %v1614, %v358
    %v1655 = vmul.f32 %v1623, %v358
    %v1656 = vmul.f32 %v1632, %v358
    %v1657 = vmul.f32 %v1641, %v358
    %v1658 = vmul.f32 %v1650, %v358
    %v1659 = vmul.f32 %v1651, %v520
    %v1660 = vmul.f32 %v1652, %v530
    %v1661 = vmul.f32 %v1653, %v540
    %v1662 = vmul.f32 %v1654, %v550
    %v1663 = vmul.f32 %v1655, %v560
    %v1664 = vmul.f32 %v1656, %v570
    %v1665 = vmul.f32 %v1657, %v580
    %v1666 = vmul.f32 %v1658, %v590
    %vm1667 = vcmp.le.s32.totalorder %v776, 3
    %v1668 = vsel %vm1667, 1, 0
    %v1669 = vperm.slane %v1668, 0
    %vm1670 = vcmp.eq.s32.totalorder %v1669, 1
    %vm1671 = vmor %vm781, %vm1670
    %v1680 = vrot.slane %v1660, 7
    %v1681 = vsel %vm739, %v1680, %v1659
    %v1682 = vrot.slane %v1661, 6
    %v1683 = vsel %vm742, %v1682, %v1681
    %v1684 = vrot.slane %v1662, 5
    %v1685 = vsel %vm745, %v1684, %v1683
    %v1686 = vrot.slane %v1663, 4
    %v1687 = vsel %vm748, %v1686, %v1685
    %v1688 = vrot.slane %v1664, 3
    %v1689 = vsel %vm751, %v1688, %v1687
    %v1690 = vrot.slane %v1665, 2
    %v1691 = vsel %vm754, %v1690, %v1689
    %v1692 = vrot.slane %v1666, 1
    %v1693 = vsel %vm757, %v1692, %v1691
    %v1695 = vsel %vm1671, 0.0, %v1693
    %v1696 = vsub.f32 %v1695, %v783
    %v1697 = vrot.slane %v1696, 4
    %v1698 = vmax.f32 %v1696, %v1697
    %v1699 = vrot.slane %v1698, 2
    %v1700 = vmax.f32 %v1698, %v1699
    %v1701 = vrot.slane %v1700, 1
    %v1702 = vmax.f32 %v1700, %v1701
    %vm1703 = vcmp.eq.f32.partialorder %v1696, %v1702
    %v1704 = vsel %vm1703, -3e+38, %v1696
    %v1705 = vmul.f32 %v1702, %v784
    %v1706 = vmul.f32 %v1702, %v785
    %v1707 = vadd.f32 %v792, %v1705
    %v1708 = vadd.f32 %v793, %v1706
    %v1709 = vrot.slane %v1704, 4
    %v1710 = vmax.f32 %v1704, %v1709
    %v1711 = vrot.slane %v1710, 2
    %v1712 = vmax.f32 %v1710, %v1711
    %v1713 = vrot.slane %v1712, 1
    %v1714 = vmax.f32 %v1712, %v1713
    %vm1715 = vcmp.eq.f32.partialorder %v1704, %v1714
    %v1716 = vsel %vm1715, -3e+38, %v1704
    %v1717 = vmul.f32 %v1714, %v786
    %v1718 = vmul.f32 %v1714, %v787
    %v1719 = vadd.f32 %v1707, %v1717
    %v1720 = vadd.f32 %v1708, %v1718
    %v1721 = vrot.slane %v1716, 4
    %v1722 = vmax.f32 %v1716, %v1721
    %v1723 = vrot.slane %v1722, 2
    %v1724 = vmax.f32 %v1722, %v1723
    %v1725 = vrot.slane %v1724, 1
    %v1726 = vmax.f32 %v1724, %v1725
    %vm1727 = vcmp.eq.f32.partialorder %v1716, %v1726
    %v1728 = vsel %vm1727, -3e+38, %v1716
    %v1729 = vmul.f32 %v1726, %v788
    %v1730 = vmul.f32 %v1726, %v789
    %v1731 = vadd.f32 %v1719, %v1729
    %v1732 = vadd.f32 %v1720, %v1730
    %v1733 = vrot.slane %v1728, 4
    %v1734 = vmax.f32 %v1728, %v1733
    %v1735 = vrot.slane %v1734, 2
    %v1736 = vmax.f32 %v1734, %v1735
    %v1737 = vrot.slane %v1736, 1
    %v1738 = vmax.f32 %v1736, %v1737
    %v1739 = vmul.f32 %v1738, %v790
    %v1740 = vmul.f32 %v1738, %v791
    %v1741 = vadd.f32 %v1731, %v1739
    %v1742 = vadd.f32 %v1732, %v1740
    %vm1743 = vcmp.gt.f32.partialorder %v1741, 20.0
    %vm1744 = vcmp.gt.f32.partialorder %v1742, 20.0
    %v1745 = vmin.f32 %v1741, 20.0
    %v1746 = vmin.f32 %v1742, 20.0
    %v1747 = vmul.f32 %v1745, 1.442695
    %v1748 = vpow.pop %v1747
    %v1749 = vmul.f32 %v1746, 1.442695
    %v1750 = vpow.pop %v1749
    %v1751 = vadd.f32 %v1748, 1.0
    %v1752 = vlog2.pop %v1751
    %v1753 = vmul.f32 %v1752, 0.6931472
    %v1754 = vmul.f32 -0.5, %v1748
    %v1755 = vadd.f32 %v1754, 1.0
    %v1756 = vmul.f32 %v1755, %v1748
    %v1757 = vand.u32 2147483647, %v1748
    %vm1758 = vcmp.lt.f32.partialorder %v1757, 0.0004427343
    %v1759 = vsel %vm1758, %v1756, %v1753
    %v1760 = vadd.f32 %v1750, 1.0
    %v1761 = vlog2.pop %v1760
    %v1762 = vmul.f32 %v1761, 0.6931472
    %v1763 = vmul.f32 -0.5, %v1750
    %v1764 = vadd.f32 %v1763, 1.0
    %v1765 = vmul.f32 %v1764, %v1750
    %v1766 = vand.u32 2147483647, %v1750
    %vm1767 = vcmp.lt.f32.partialorder %v1766, 0.0004427343
    %v1768 = vsel %vm1767, %v1765, %v1762
    %v1769 = vsel %vm1743, %v1741, %v1759
    %v1770 = vsel %vm1744, %v1742, %v1768
    %v1771 = vmul.f32 %v1769, %v794
    %v1772 = vmul.f32 %v1770, %v795
    %v1773 = vadd.f32 %v1771, %v1772
    %v1774 = vrot.slane %v1773, 4
    %v1775 = vadd.f32 %v1773, %v1774
    %v1776 = vrot.slane %v1775, 2
    %v1777 = vadd.f32 %v1775, %v1776
    %v1778 = vrot.slane %v1777, 1
    %v1779 = vadd.f32 %v1777, %v1778
    %v1780 = vadd.f32 %v1779, %v796
    %vm1781 = vcmp.gt.f32.partialorder %v1780, 20.0
    %v1782 = vmin.f32 %v1780, 20.0
    %v1783 = vmul.f32 %v1782, 1.442695
    %v1784 = vpow.pop %v1783
    %v1785 = vadd.f32 %v1784, 1.0
    %v1786 = vlog2.pop %v1785
    %v1787 = vmul.f32 %v1786, 0.6931472
    %v1788 = vmul.f32 -0.5, %v1784
    %v1789 = vadd.f32 %v1788, 1.0
    %v1790 = vmul.f32 %v1789, %v1784
    %v1791 = vand.u32 2147483647, %v1784
    %vm1792 = vcmp.lt.f32.partialorder %v1791, 0.0004427343
    %v1793 = vsel %vm1792, %v1790, %v1787
    %v1794 = vsel %vm1781, %v1780, %v1793
    %v1795 = vmul.f32 %v1794, %v771
    %v1796 = vadd.f32 %v1546, %v1795
    %v1797 = vmul.f32 %v127, %v175
    %v1798 = vmul.f32 %v128, %v176
    %v1799 = vmul.f32 %v129, %v177
    %v1800 = vmul.f32 %v130, %v178
    %v1801 = vmul.f32 %v127, %v179
    %v1802 = vmul.f32 %v128, %v180
    %v1803 = vmul.f32 %v129, %v181
    %v1804 = vmul.f32 %v130, %v182
    %v1805 = vmul.f32 %v127, %v183
    %v1806 = vmul.f32 %v128, %v184
    %v1807 = vmul.f32 %v129, %v185
    %v1808 = vmul.f32 %v130, %v186
    %v1809 = vmul.f32 %v127, %v187
    %v1810 = vmul.f32 %v128, %v188
    %v1811 = vmul.f32 %v129, %v189
    %v1812 = vmul.f32 %v130, %v190
    %v1813 = vmul.f32 %v127, %v191
    %v1814 = vmul.f32 %v128, %v192
    %v1815 = vmul.f32 %v129, %v193
    %v1816 = vmul.f32 %v130, %v194
    %v1817 = vmul.f32 %v127, %v195
    %v1818 = vmul.f32 %v128, %v196
    %v1819 = vmul.f32 %v129, %v197
    %v1820 = vmul.f32 %v130, %v198
    %v1821 = vmul.f32 %v127, %v199
    %v1822 = vmul.f32 %v128, %v200
    %v1823 = vmul.f32 %v129, %v201
    %v1824 = vmul.f32 %v130, %v202
    %v1825 = vmul.f32 %v127, %v203
    %v1826 = vmul.f32 %v128, %v204
    %v1827 = vmul.f32 %v129, %v205
    %v1828 = vmul.f32 %v130, %v206
    %v1829 = vadd.f32 %v1797, %v1798
    %v1830 = vadd.f32 %v1829, %v1799
    %v1831 = vadd.f32 %v1830, %v1800
    %v1832 = vrot.slane %v1831, 4
    %v1833 = vadd.f32 %v1831, %v1832
    %v1834 = vrot.slane %v1833, 2
    %v1835 = vadd.f32 %v1833, %v1834
    %v1836 = vrot.slane %v1835, 1
    %v1837 = vadd.f32 %v1835, %v1836
    %v1838 = vadd.f32 %v1801, %v1802
    %v1839 = vadd.f32 %v1838, %v1803
    %v1840 = vadd.f32 %v1839, %v1804
    %v1841 = vrot.slane %v1840, 4
    %v1842 = vadd.f32 %v1840, %v1841
    %v1843 = vrot.slane %v1842, 2
    %v1844 = vadd.f32 %v1842, %v1843
    %v1845 = vrot.slane %v1844, 1
    %v1846 = vadd.f32 %v1844, %v1845
    %v1847 = vadd.f32 %v1805, %v1806
    %v1848 = vadd.f32 %v1847, %v1807
    %v1849 = vadd.f32 %v1848, %v1808
    %v1850 = vrot.slane %v1849, 4
    %v1851 = vadd.f32 %v1849, %v1850
    %v1852 = vrot.slane %v1851, 2
    %v1853 = vadd.f32 %v1851, %v1852
    %v1854 = vrot.slane %v1853, 1
    %v1855 = vadd.f32 %v1853, %v1854
    %v1856 = vadd.f32 %v1809, %v1810
    %v1857 = vadd.f32 %v1856, %v1811
    %v1858 = vadd.f32 %v1857, %v1812
    %v1859 = vrot.slane %v1858, 4
    %v1860 = vadd.f32 %v1858, %v1859
    %v1861 = vrot.slane %v1860, 2
    %v1862 = vadd.f32 %v1860, %v1861
    %v1863 = vrot.slane %v1862, 1
    %v1864 = vadd.f32 %v1862, %v1863
    %v1865 = vadd.f32 %v1813, %v1814
    %v1866 = vadd.f32 %v1865, %v1815
    %v1867 = vadd.f32 %v1866, %v1816
    %v1868 = vrot.slane %v1867, 4
    %v1869 = vadd.f32 %v1867, %v1868
    %v1870 = vrot.slane %v1869, 2
    %v1871 = vadd.f32 %v1869, %v1870
    %v1872 = vrot.slane %v1871, 1
    %v1873 = vadd.f32 %v1871, %v1872
    %v1874 = vadd.f32 %v1817, %v1818
    %v1875 = vadd.f32 %v1874, %v1819
    %v1876 = vadd.f32 %v1875, %v1820
    %v1877 = vrot.slane %v1876, 4
    %v1878 = vadd.f32 %v1876, %v1877
    %v1879 = vrot.slane %v1878, 2
    %v1880 = vadd.f32 %v1878, %v1879
    %v1881 = vrot.slane %v1880, 1
    %v1882 = vadd.f32 %v1880, %v1881
    %v1883 = vadd.f32 %v1821, %v1822
    %v1884 = vadd.f32 %v1883, %v1823
    %v1885 = vadd.f32 %v1884, %v1824
    %v1886 = vrot.slane %v1885, 4
    %v1887 = vadd.f32 %v1885, %v1886
    %v1888 = vrot.slane %v1887, 2
    %v1889 = vadd.f32 %v1887, %v1888
    %v1890 = vrot.slane %v1889, 1
    %v1891 = vadd.f32 %v1889, %v1890
    %v1892 = vadd.f32 %v1825, %v1826
    %v1893 = vadd.f32 %v1892, %v1827
    %v1894 = vadd.f32 %v1893, %v1828
    %v1895 = vrot.slane %v1894, 4
    %v1896 = vadd.f32 %v1894, %v1895
    %v1897 = vrot.slane %v1896, 2
    %v1898 = vadd.f32 %v1896, %v1897
    %v1899 = vrot.slane %v1898, 1
    %v1900 = vadd.f32 %v1898, %v1899
    %v1901 = vmul.f32 %v1837, %v368
    %v1902 = vmul.f32 %v1846, %v368
    %v1903 = vmul.f32 %v1855, %v368
    %v1904 = vmul.f32 %v1864, %v368
    %v1905 = vmul.f32 %v1873, %v368
    %v1906 = vmul.f32 %v1882, %v368
    %v1907 = vmul.f32 %v1891, %v368
    %v1908 = vmul.f32 %v1900, %v368
    %v1909 = vmul.f32 %v1901, %v520
    %v1910 = vmul.f32 %v1902, %v530
    %v1911 = vmul.f32 %v1903, %v540
    %v1912 = vmul.f32 %v1904, %v550
    %v1913 = vmul.f32 %v1905, %v560
    %v1914 = vmul.f32 %v1906, %v570
    %v1915 = vmul.f32 %v1907, %v580
    %v1916 = vmul.f32 %v1908, %v590
    %vm1917 = vcmp.le.s32.totalorder %v776, 4
    %v1918 = vsel %vm1917, 1, 0
    %v1919 = vperm.slane %v1918, 0
    %vm1920 = vcmp.eq.s32.totalorder %v1919, 1
    %vm1921 = vmor %vm781, %vm1920
    %v1930 = vrot.slane %v1910, 7
    %v1931 = vsel %vm739, %v1930, %v1909
    %v1932 = vrot.slane %v1911, 6
    %v1933 = vsel %vm742, %v1932, %v1931
    %v1934 = vrot.slane %v1912, 5
    %v1935 = vsel %vm745, %v1934, %v1933
    %v1936 = vrot.slane %v1913, 4
    %v1937 = vsel %vm748, %v1936, %v1935
    %v1938 = vrot.slane %v1914, 3
    %v1939 = vsel %vm751, %v1938, %v1937
    %v1940 = vrot.slane %v1915, 2
    %v1941 = vsel %vm754, %v1940, %v1939
    %v1942 = vrot.slane %v1916, 1
    %v1943 = vsel %vm757, %v1942, %v1941
    %v1945 = vsel %vm1921, 0.0, %v1943
    %v1946 = vsub.f32 %v1945, %v783
    %v1947 = vrot.slane %v1946, 4
    %v1948 = vmax.f32 %v1946, %v1947
    %v1949 = vrot.slane %v1948, 2
    %v1950 = vmax.f32 %v1948, %v1949
    %v1951 = vrot.slane %v1950, 1
    %v1952 = vmax.f32 %v1950, %v1951
    %vm1953 = vcmp.eq.f32.partialorder %v1946, %v1952
    %v1954 = vsel %vm1953, -3e+38, %v1946
    %v1955 = vmul.f32 %v1952, %v784
    %v1956 = vmul.f32 %v1952, %v785
    %v1957 = vadd.f32 %v792, %v1955
    %v1958 = vadd.f32 %v793, %v1956
    %v1959 = vrot.slane %v1954, 4
    %v1960 = vmax.f32 %v1954, %v1959
    %v1961 = vrot.slane %v1960, 2
    %v1962 = vmax.f32 %v1960, %v1961
    %v1963 = vrot.slane %v1962, 1
    %v1964 = vmax.f32 %v1962, %v1963
    %vm1965 = vcmp.eq.f32.partialorder %v1954, %v1964
    %v1966 = vsel %vm1965, -3e+38, %v1954
    %v1967 = vmul.f32 %v1964, %v786
    %v1968 = vmul.f32 %v1964, %v787
    %v1969 = vadd.f32 %v1957, %v1967
    %v1970 = vadd.f32 %v1958, %v1968
    %v1971 = vrot.slane %v1966, 4
    %v1972 = vmax.f32 %v1966, %v1971
    %v1973 = vrot.slane %v1972, 2
    %v1974 = vmax.f32 %v1972, %v1973
    %v1975 = vrot.slane %v1974, 1
    %v1976 = vmax.f32 %v1974, %v1975
    %vm1977 = vcmp.eq.f32.partialorder %v1966, %v1976
    %v1978 = vsel %vm1977, -3e+38, %v1966
    %v1979 = vmul.f32 %v1976, %v788
    %v1980 = vmul.f32 %v1976, %v789
    %v1981 = vadd.f32 %v1969, %v1979
    %v1982 = vadd.f32 %v1970, %v1980
    %v1983 = vrot.slane %v1978, 4
    %v1984 = vmax.f32 %v1978, %v1983
    %v1985 = vrot.slane %v1984, 2
    %v1986 = vmax.f32 %v1984, %v1985
    %v1987 = vrot.slane %v1986, 1
    %v1988 = vmax.f32 %v1986, %v1987
    %v1989 = vmul.f32 %v1988, %v790
    %v1990 = vmul.f32 %v1988, %v791
    %v1991 = vadd.f32 %v1981, %v1989
    %v1992 = vadd.f32 %v1982, %v1990
    %vm1993 = vcmp.gt.f32.partialorder %v1991, 20.0
    %vm1994 = vcmp.gt.f32.partialorder %v1992, 20.0
    %v1995 = vmin.f32 %v1991, 20.0
    %v1996 = vmin.f32 %v1992, 20.0
    %v1997 = vmul.f32 %v1995, 1.442695
    %v1998 = vpow.pop %v1997
    %v1999 = vmul.f32 %v1996, 1.442695
    %v2000 = vpow.pop %v1999
    %v2001 = vadd.f32 %v1998, 1.0
    %v2002 = vlog2.pop %v2001
    %v2003 = vmul.f32 %v2002, 0.6931472
    %v2004 = vmul.f32 -0.5, %v1998
    %v2005 = vadd.f32 %v2004, 1.0
    %v2006 = vmul.f32 %v2005, %v1998
    %v2007 = vand.u32 2147483647, %v1998
    %vm2008 = vcmp.lt.f32.partialorder %v2007, 0.0004427343
    %v2009 = vsel %vm2008, %v2006, %v2003
    %v2010 = vadd.f32 %v2000, 1.0
    %v2011 = vlog2.pop %v2010
    %v2012 = vmul.f32 %v2011, 0.6931472
    %v2013 = vmul.f32 -0.5, %v2000
    %v2014 = vadd.f32 %v2013, 1.0
    %v2015 = vmul.f32 %v2014, %v2000
    %v2016 = vand.u32 2147483647, %v2000
    %vm2017 = vcmp.lt.f32.partialorder %v2016, 0.0004427343
    %v2018 = vsel %vm2017, %v2015, %v2012
    %v2019 = vsel %vm1993, %v1991, %v2009
    %v2020 = vsel %vm1994, %v1992, %v2018
    %v2021 = vmul.f32 %v2019, %v794
    %v2022 = vmul.f32 %v2020, %v795
    %v2023 = vadd.f32 %v2021, %v2022
    %v2024 = vrot.slane %v2023, 4
    %v2025 = vadd.f32 %v2023, %v2024
    %v2026 = vrot.slane %v2025, 2
    %v2027 = vadd.f32 %v2025, %v2026
    %v2028 = vrot.slane %v2027, 1
    %v2029 = vadd.f32 %v2027, %v2028
    %v2030 = vadd.f32 %v2029, %v796
    %vm2031 = vcmp.gt.f32.partialorder %v2030, 20.0
    %v2032 = vmin.f32 %v2030, 20.0
    %v2033 = vmul.f32 %v2032, 1.442695
    %v2034 = vpow.pop %v2033
    %v2035 = vadd.f32 %v2034, 1.0
    %v2036 = vlog2.pop %v2035
    %v2037 = vmul.f32 %v2036, 0.6931472
    %v2038 = vmul.f32 -0.5, %v2034
    %v2039 = vadd.f32 %v2038, 1.0
    %v2040 = vmul.f32 %v2039, %v2034
    %v2041 = vand.u32 2147483647, %v2034
    %vm2042 = vcmp.lt.f32.partialorder %v2041, 0.0004427343
    %v2043 = vsel %vm2042, %v2040, %v2037
    %v2044 = vsel %vm2031, %v2030, %v2043
    %v2045 = vmul.f32 %v2044, %v772
    %v2046 = vadd.f32 %v1796, %v2045
    %v2047 = vmul.f32 %v131, %v175
    %v2048 = vmul.f32 %v132, %v176
    %v2049 = vmul.f32 %v133, %v177
    %v2050 = vmul.f32 %v134, %v178
    %v2051 = vmul.f32 %v131, %v179
    %v2052 = vmul.f32 %v132, %v180
    %v2053 = vmul.f32 %v133, %v181
    %v2054 = vmul.f32 %v134, %v182
    %v2055 = vmul.f32 %v131, %v183
    %v2056 = vmul.f32 %v132, %v184
    %v2057 = vmul.f32 %v133, %v185
    %v2058 = vmul.f32 %v134, %v186
    %v2059 = vmul.f32 %v131, %v187
    %v2060 = vmul.f32 %v132, %v188
    %v2061 = vmul.f32 %v133, %v189
    %v2062 = vmul.f32 %v134, %v190
    %v2063 = vmul.f32 %v131, %v191
    %v2064 = vmul.f32 %v132, %v192
    %v2065 = vmul.f32 %v133, %v193
    %v2066 = vmul.f32 %v134, %v194
    %v2067 = vmul.f32 %v131, %v195
    %v2068 = vmul.f32 %v132, %v196
    %v2069 = vmul.f32 %v133, %v197
    %v2070 = vmul.f32 %v134, %v198
    %v2071 = vmul.f32 %v131, %v199
    %v2072 = vmul.f32 %v132, %v200
    %v2073 = vmul.f32 %v133, %v201
    %v2074 = vmul.f32 %v134, %v202
    %v2075 = vmul.f32 %v131, %v203
    %v2076 = vmul.f32 %v132, %v204
    %v2077 = vmul.f32 %v133, %v205
    %v2078 = vmul.f32 %v134, %v206
    %v2079 = vadd.f32 %v2047, %v2048
    %v2080 = vadd.f32 %v2079, %v2049
    %v2081 = vadd.f32 %v2080, %v2050
    %v2082 = vrot.slane %v2081, 4
    %v2083 = vadd.f32 %v2081, %v2082
    %v2084 = vrot.slane %v2083, 2
    %v2085 = vadd.f32 %v2083, %v2084
    %v2086 = vrot.slane %v2085, 1
    %v2087 = vadd.f32 %v2085, %v2086
    %v2088 = vadd.f32 %v2051, %v2052
    %v2089 = vadd.f32 %v2088, %v2053
    %v2090 = vadd.f32 %v2089, %v2054
    %v2091 = vrot.slane %v2090, 4
    %v2092 = vadd.f32 %v2090, %v2091
    %v2093 = vrot.slane %v2092, 2
    %v2094 = vadd.f32 %v2092, %v2093
    %v2095 = vrot.slane %v2094, 1
    %v2096 = vadd.f32 %v2094, %v2095
    %v2097 = vadd.f32 %v2055, %v2056
    %v2098 = vadd.f32 %v2097, %v2057
    %v2099 = vadd.f32 %v2098, %v2058
    %v2100 = vrot.slane %v2099, 4
    %v2101 = vadd.f32 %v2099, %v2100
    %v2102 = vrot.slane %v2101, 2
    %v2103 = vadd.f32 %v2101, %v2102
    %v2104 = vrot.slane %v2103, 1
    %v2105 = vadd.f32 %v2103, %v2104
    %v2106 = vadd.f32 %v2059, %v2060
    %v2107 = vadd.f32 %v2106, %v2061
    %v2108 = vadd.f32 %v2107, %v2062
    %v2109 = vrot.slane %v2108, 4
    %v2110 = vadd.f32 %v2108, %v2109
    %v2111 = vrot.slane %v2110, 2
    %v2112 = vadd.f32 %v2110, %v2111
    %v2113 = vrot.slane %v2112, 1
    %v2114 = vadd.f32 %v2112, %v2113
    %v2115 = vadd.f32 %v2063, %v2064
    %v2116 = vadd.f32 %v2115, %v2065
    %v2117 = vadd.f32 %v2116, %v2066
    %v2118 = vrot.slane %v2117, 4
    %v2119 = vadd.f32 %v2117, %v2118
    %v2120 = vrot.slane %v2119, 2
    %v2121 = vadd.f32 %v2119, %v2120
    %v2122 = vrot.slane %v2121, 1
    %v2123 = vadd.f32 %v2121, %v2122
    %v2124 = vadd.f32 %v2067, %v2068
    %v2125 = vadd.f32 %v2124, %v2069
    %v2126 = vadd.f32 %v2125, %v2070
    %v2127 = vrot.slane %v2126, 4
    %v2128 = vadd.f32 %v2126, %v2127
    %v2129 = vrot.slane %v2128, 2
    %v2130 = vadd.f32 %v2128, %v2129
    %v2131 = vrot.slane %v2130, 1
    %v2132 = vadd.f32 %v2130, %v2131
    %v2133 = vadd.f32 %v2071, %v2072
    %v2134 = vadd.f32 %v2133, %v2073
    %v2135 = vadd.f32 %v2134, %v2074
    %v2136 = vrot.slane %v2135, 4
    %v2137 = vadd.f32 %v2135, %v2136
    %v2138 = vrot.slane %v2137, 2
    %v2139 = vadd.f32 %v2137, %v2138
    %v2140 = vrot.slane %v2139, 1
    %v2141 = vadd.f32 %v2139, %v2140
    %v2142 = vadd.f32 %v2075, %v2076
    %v2143 = vadd.f32 %v2142, %v2077
    %v2144 = vadd.f32 %v2143, %v2078
    %v2145 = vrot.slane %v2144, 4
    %v2146 = vadd.f32 %v2144, %v2145
    %v2147 = vrot.slane %v2146, 2
    %v2148 = vadd.f32 %v2146, %v2147
    %v2149 = vrot.slane %v2148, 1
    %v2150 = vadd.f32 %v2148, %v2149
    %v2151 = vmul.f32 %v2087, %v378
    %v2152 = vmul.f32 %v2096, %v378
    %v2153 = vmul.f32 %v2105, %v378
    %v2154 = vmul.f32 %v2114, %v378
    %v2155 = vmul.f32 %v2123, %v378
    %v2156 = vmul.f32 %v2132, %v378
    %v2157 = vmul.f32 %v2141, %v378
    %v2158 = vmul.f32 %v2150, %v378
    %v2159 = vmul.f32 %v2151, %v520
    %v2160 = vmul.f32 %v2152, %v530
    %v2161 = vmul.f32 %v2153, %v540
    %v2162 = vmul.f32 %v2154, %v550
    %v2163 = vmul.f32 %v2155, %v560
    %v2164 = vmul.f32 %v2156, %v570
    %v2165 = vmul.f32 %v2157, %v580
    %v2166 = vmul.f32 %v2158, %v590
    %vm2167 = vcmp.le.s32.totalorder %v776, 5
    %v2168 = vsel %vm2167, 1, 0
    %v2169 = vperm.slane %v2168, 0
    %vm2170 = vcmp.eq.s32.totalorder %v2169, 1
    %vm2171 = vmor %vm781, %vm2170
    %v2180 = vrot.slane %v2160, 7
    %v2181 = vsel %vm739, %v2180, %v2159
    %v2182 = vrot.slane %v2161, 6
    %v2183 = vsel %vm742, %v2182, %v2181
    %v2184 = vrot.slane %v2162, 5
    %v2185 = vsel %vm745, %v2184, %v2183
    %v2186 = vrot.slane %v2163, 4
    %v2187 = vsel %vm748, %v2186, %v2185
    %v2188 = vrot.slane %v2164, 3
    %v2189 = vsel %vm751, %v2188, %v2187
    %v2190 = vrot.slane %v2165, 2
    %v2191 = vsel %vm754, %v2190, %v2189
    %v2192 = vrot.slane %v2166, 1
    %v2193 = vsel %vm757, %v2192, %v2191
    %v2195 = vsel %vm2171, 0.0, %v2193
    %v2196 = vsub.f32 %v2195, %v783
    %v2197 = vrot.slane %v2196, 4
    %v2198 = vmax.f32 %v2196, %v2197
    %v2199 = vrot.slane %v2198, 2
    %v2200 = vmax.f32 %v2198, %v2199
    %v2201 = vrot.slane %v2200, 1
    %v2202 = vmax.f32 %v2200, %v2201
    %vm2203 = vcmp.eq.f32.partialorder %v2196, %v2202
    %v2204 = vsel %vm2203, -3e+38, %v2196
    %v2205 = vmul.f32 %v2202, %v784
    %v2206 = vmul.f32 %v2202, %v785
    %v2207 = vadd.f32 %v792, %v2205
    %v2208 = vadd.f32 %v793, %v2206
    %v2209 = vrot.slane %v2204, 4
    %v2210 = vmax.f32 %v2204, %v2209
    %v2211 = vrot.slane %v2210, 2
    %v2212 = vmax.f32 %v2210, %v2211
    %v2213 = vrot.slane %v2212, 1
    %v2214 = vmax.f32 %v2212, %v2213
    %vm2215 = vcmp.eq.f32.partialorder %v2204, %v2214
    %v2216 = vsel %vm2215, -3e+38, %v2204
    %v2217 = vmul.f32 %v2214, %v786
    %v2218 = vmul.f32 %v2214, %v787
    %v2219 = vadd.f32 %v2207, %v2217
    %v2220 = vadd.f32 %v2208, %v2218
    %v2221 = vrot.slane %v2216, 4
    %v2222 = vmax.f32 %v2216, %v2221
    %v2223 = vrot.slane %v2222, 2
    %v2224 = vmax.f32 %v2222, %v2223
    %v2225 = vrot.slane %v2224, 1
    %v2226 = vmax.f32 %v2224, %v2225
    %vm2227 = vcmp.eq.f32.partialorder %v2216, %v2226
    %v2228 = vsel %vm2227, -3e+38, %v2216
    %v2229 = vmul.f32 %v2226, %v788
    %v2230 = vmul.f32 %v2226, %v789
    %v2231 = vadd.f32 %v2219, %v2229
    %v2232 = vadd.f32 %v2220, %v2230
    %v2233 = vrot.slane %v2228, 4
    %v2234 = vmax.f32 %v2228, %v2233
    %v2235 = vrot.slane %v2234, 2
    %v2236 = vmax.f32 %v2234, %v2235
    %v2237 = vrot.slane %v2236, 1
    %v2238 = vmax.f32 %v2236, %v2237
    %v2239 = vmul.f32 %v2238, %v790
    %v2240 = vmul.f32 %v2238, %v791
    %v2241 = vadd.f32 %v2231, %v2239
    %v2242 = vadd.f32 %v2232, %v2240
    %vm2243 = vcmp.gt.f32.partialorder %v2241, 20.0
    %vm2244 = vcmp.gt.f32.partialorder %v2242, 20.0
    %v2245 = vmin.f32 %v2241, 20.0
    %v2246 = vmin.f32 %v2242, 20.0
    %v2247 = vmul.f32 %v2245, 1.442695
    %v2248 = vpow.pop %v2247
    %v2249 = vmul.f32 %v2246, 1.442695
    %v2250 = vpow.pop %v2249
    %v2251 = vadd.f32 %v2248, 1.0
    %v2252 = vlog2.pop %v2251
    %v2253 = vmul.f32 %v2252, 0.6931472
    %v2254 = vmul.f32 -0.5, %v2248
    %v2255 = vadd.f32 %v2254, 1.0
    %v2256 = vmul.f32 %v2255, %v2248
    %v2257 = vand.u32 2147483647, %v2248
    %vm2258 = vcmp.lt.f32.partialorder %v2257, 0.0004427343
    %v2259 = vsel %vm2258, %v2256, %v2253
    %v2260 = vadd.f32 %v2250, 1.0
    %v2261 = vlog2.pop %v2260
    %v2262 = vmul.f32 %v2261, 0.6931472
    %v2263 = vmul.f32 -0.5, %v2250
    %v2264 = vadd.f32 %v2263, 1.0
    %v2265 = vmul.f32 %v2264, %v2250
    %v2266 = vand.u32 2147483647, %v2250
    %vm2267 = vcmp.lt.f32.partialorder %v2266, 0.0004427343
    %v2268 = vsel %vm2267, %v2265, %v2262
    %v2269 = vsel %vm2243, %v2241, %v2259
    %v2270 = vsel %vm2244, %v2242, %v2268
    %v2271 = vmul.f32 %v2269, %v794
    %v2272 = vmul.f32 %v2270, %v795
    %v2273 = vadd.f32 %v2271, %v2272
    %v2274 = vrot.slane %v2273, 4
    %v2275 = vadd.f32 %v2273, %v2274
    %v2276 = vrot.slane %v2275, 2
    %v2277 = vadd.f32 %v2275, %v2276
    %v2278 = vrot.slane %v2277, 1
    %v2279 = vadd.f32 %v2277, %v2278
    %v2280 = vadd.f32 %v2279, %v796
    %vm2281 = vcmp.gt.f32.partialorder %v2280, 20.0
    %v2282 = vmin.f32 %v2280, 20.0
    %v2283 = vmul.f32 %v2282, 1.442695
    %v2284 = vpow.pop %v2283
    %v2285 = vadd.f32 %v2284, 1.0
    %v2286 = vlog2.pop %v2285
    %v2287 = vmul.f32 %v2286, 0.6931472
    %v2288 = vmul.f32 -0.5, %v2284
    %v2289 = vadd.f32 %v2288, 1.0
    %v2290 = vmul.f32 %v2289, %v2284
    %v2291 = vand.u32 2147483647, %v2284
    %vm2292 = vcmp.lt.f32.partialorder %v2291, 0.0004427343
    %v2293 = vsel %vm2292, %v2290, %v2287
    %v2294 = vsel %vm2281, %v2280, %v2293
    %v2295 = vmul.f32 %v2294, %v773
    %v2296 = vadd.f32 %v2046, %v2295
    %v2297 = vmul.f32 %v135, %v175
    %v2298 = vmul.f32 %v136, %v176
    %v2299 = vmul.f32 %v137, %v177
    %v2300 = vmul.f32 %v138, %v178
    %v2301 = vmul.f32 %v135, %v179
    %v2302 = vmul.f32 %v136, %v180
    %v2303 = vmul.f32 %v137, %v181
    %v2304 = vmul.f32 %v138, %v182
    %v2305 = vmul.f32 %v135, %v183
    %v2306 = vmul.f32 %v136, %v184
    %v2307 = vmul.f32 %v137, %v185
    %v2308 = vmul.f32 %v138, %v186
    %v2309 = vmul.f32 %v135, %v187
    %v2310 = vmul.f32 %v136, %v188
    %v2311 = vmul.f32 %v137, %v189
    %v2312 = vmul.f32 %v138, %v190
    %v2313 = vmul.f32 %v135, %v191
    %v2314 = vmul.f32 %v136, %v192
    %v2315 = vmul.f32 %v137, %v193
    %v2316 = vmul.f32 %v138, %v194
    %v2317 = vmul.f32 %v135, %v195
    %v2318 = vmul.f32 %v136, %v196
    %v2319 = vmul.f32 %v137, %v197
    %v2320 = vmul.f32 %v138, %v198
    %v2321 = vmul.f32 %v135, %v199
    %v2322 = vmul.f32 %v136, %v200
    %v2323 = vmul.f32 %v137, %v201
    %v2324 = vmul.f32 %v138, %v202
    %v2325 = vmul.f32 %v135, %v203
    %v2326 = vmul.f32 %v136, %v204
    %v2327 = vmul.f32 %v137, %v205
    %v2328 = vmul.f32 %v138, %v206
    %v2329 = vadd.f32 %v2297, %v2298
    %v2330 = vadd.f32 %v2329, %v2299
    %v2331 = vadd.f32 %v2330, %v2300
    %v2332 = vrot.slane %v2331, 4
    %v2333 = vadd.f32 %v2331, %v2332
    %v2334 = vrot.slane %v2333, 2
    %v2335 = vadd.f32 %v2333, %v2334
    %v2336 = vrot.slane %v2335, 1
    %v2337 = vadd.f32 %v2335, %v2336
    %v2338 = vadd.f32 %v2301, %v2302
    %v2339 = vadd.f32 %v2338, %v2303
    %v2340 = vadd.f32 %v2339, %v2304
    %v2341 = vrot.slane %v2340, 4
    %v2342 = vadd.f32 %v2340, %v2341
    %v2343 = vrot.slane %v2342, 2
    %v2344 = vadd.f32 %v2342, %v2343
    %v2345 = vrot.slane %v2344, 1
    %v2346 = vadd.f32 %v2344, %v2345
    %v2347 = vadd.f32 %v2305, %v2306
    %v2348 = vadd.f32 %v2347, %v2307
    %v2349 = vadd.f32 %v2348, %v2308
    %v2350 = vrot.slane %v2349, 4
    %v2351 = vadd.f32 %v2349, %v2350
    %v2352 = vrot.slane %v2351, 2
    %v2353 = vadd.f32 %v2351, %v2352
    %v2354 = vrot.slane %v2353, 1
    %v2355 = vadd.f32 %v2353, %v2354
    %v2356 = vadd.f32 %v2309, %v2310
    %v2357 = vadd.f32 %v2356, %v2311
    %v2358 = vadd.f32 %v2357, %v2312
    %v2359 = vrot.slane %v2358, 4
    %v2360 = vadd.f32 %v2358, %v2359
    %v2361 = vrot.slane %v2360, 2
    %v2362 = vadd.f32 %v2360, %v2361
    %v2363 = vrot.slane %v2362, 1
    %v2364 = vadd.f32 %v2362, %v2363
    %v2365 = vadd.f32 %v2313, %v2314
    %v2366 = vadd.f32 %v2365, %v2315
    %v2367 = vadd.f32 %v2366, %v2316
    %v2368 = vrot.slane %v2367, 4
    %v2369 = vadd.f32 %v2367, %v2368
    %v2370 = vrot.slane %v2369, 2
    %v2371 = vadd.f32 %v2369, %v2370
    %v2372 = vrot.slane %v2371, 1
    %v2373 = vadd.f32 %v2371, %v2372
    %v2374 = vadd.f32 %v2317, %v2318
    %v2375 = vadd.f32 %v2374, %v2319
    %v2376 = vadd.f32 %v2375, %v2320
    %v2377 = vrot.slane %v2376, 4
    %v2378 = vadd.f32 %v2376, %v2377
    %v2379 = vrot.slane %v2378, 2
    %v2380 = vadd.f32 %v2378, %v2379
    %v2381 = vrot.slane %v2380, 1
    %v2382 = vadd.f32 %v2380, %v2381
    %v2383 = vadd.f32 %v2321, %v2322
    %v2384 = vadd.f32 %v2383, %v2323
    %v2385 = vadd.f32 %v2384, %v2324
    %v2386 = vrot.slane %v2385, 4
    %v2387 = vadd.f32 %v2385, %v2386
    %v2388 = vrot.slane %v2387, 2
    %v2389 = vadd.f32 %v2387, %v2388
    %v2390 = vrot.slane %v2389, 1
    %v2391 = vadd.f32 %v2389, %v2390
    %v2392 = vadd.f32 %v2325, %v2326
    %v2393 = vadd.f32 %v2392, %v2327
    %v2394 = vadd.f32 %v2393, %v2328
    %v2395 = vrot.slane %v2394, 4
    %v2396 = vadd.f32 %v2394, %v2395
    %v2397 = vrot.slane %v2396, 2
    %v2398 = vadd.f32 %v2396, %v2397
    %v2399 = vrot.slane %v2398, 1
    %v2400 = vadd.f32 %v2398, %v2399
    %v2401 = vmul.f32 %v2337, %v388
    %v2402 = vmul.f32 %v2346, %v388
    %v2403 = vmul.f32 %v2355, %v388
    %v2404 = vmul.f32 %v2364, %v388
    %v2405 = vmul.f32 %v2373, %v388
    %v2406 = vmul.f32 %v2382, %v388
    %v2407 = vmul.f32 %v2391, %v388
    %v2408 = vmul.f32 %v2400, %v388
    %v2409 = vmul.f32 %v2401, %v520
    %v2410 = vmul.f32 %v2402, %v530
    %v2411 = vmul.f32 %v2403, %v540
    %v2412 = vmul.f32 %v2404, %v550
    %v2413 = vmul.f32 %v2405, %v560
    %v2414 = vmul.f32 %v2406, %v570
    %v2415 = vmul.f32 %v2407, %v580
    %v2416 = vmul.f32 %v2408, %v590
    %vm2417 = vcmp.le.s32.totalorder %v776, 6
    %v2418 = vsel %vm2417, 1, 0
    %v2419 = vperm.slane %v2418, 0
    %vm2420 = vcmp.eq.s32.totalorder %v2419, 1
    %vm2421 = vmor %vm781, %vm2420
    %v2430 = vrot.slane %v2410, 7
    %v2431 = vsel %vm739, %v2430, %v2409
    %v2432 = vrot.slane %v2411, 6
    %v2433 = vsel %vm742, %v2432, %v2431
    %v2434 = vrot.slane %v2412, 5
    %v2435 = vsel %vm745, %v2434, %v2433
    %v2436 = vrot.slane %v2413, 4
    %v2437 = vsel %vm748, %v2436, %v2435
    %v2438 = vrot.slane %v2414, 3
    %v2439 = vsel %vm751, %v2438, %v2437
    %v2440 = vrot.slane %v2415, 2
    %v2441 = vsel %vm754, %v2440, %v2439
    %v2442 = vrot.slane %v2416, 1
    %v2443 = vsel %vm757, %v2442, %v2441
    %v2445 = vsel %vm2421, 0.0, %v2443
    %v2446 = vsub.f32 %v2445, %v783
    %v2447 = vrot.slane %v2446, 4
    %v2448 = vmax.f32 %v2446, %v2447
    %v2449 = vrot.slane %v2448, 2
    %v2450 = vmax.f32 %v2448, %v2449
    %v2451 = vrot.slane %v2450, 1
    %v2452 = vmax.f32 %v2450, %v2451
    %vm2453 = vcmp.eq.f32.partialorder %v2446, %v2452
    %v2454 = vsel %vm2453, -3e+38, %v2446
    %v2455 = vmul.f32 %v2452, %v784
    %v2456 = vmul.f32 %v2452, %v785
    %v2457 = vadd.f32 %v792, %v2455
    %v2458 = vadd.f32 %v793, %v2456
    %v2459 = vrot.slane %v2454, 4
    %v2460 = vmax.f32 %v2454, %v2459
    %v2461 = vrot.slane %v2460, 2
    %v2462 = vmax.f32 %v2460, %v2461
    %v2463 = vrot.slane %v2462, 1
    %v2464 = vmax.f32 %v2462, %v2463
    %vm2465 = vcmp.eq.f32.partialorder %v2454, %v2464
    %v2466 = vsel %vm2465, -3e+38, %v2454
    %v2467 = vmul.f32 %v2464, %v786
    %v2468 = vmul.f32 %v2464, %v787
    %v2469 = vadd.f32 %v2457, %v2467
    %v2470 = vadd.f32 %v2458, %v2468
    %v2471 = vrot.slane %v2466, 4
    %v2472 = vmax.f32 %v2466, %v2471
    %v2473 = vrot.slane %v2472, 2
    %v2474 = vmax.f32 %v2472, %v2473
    %v2475 = vrot.slane %v2474, 1
    %v2476 = vmax.f32 %v2474, %v2475
    %vm2477 = vcmp.eq.f32.partialorder %v2466, %v2476
    %v2478 = vsel %vm2477, -3e+38, %v2466
    %v2479 = vmul.f32 %v2476, %v788
    %v2480 = vmul.f32 %v2476, %v789
    %v2481 = vadd.f32 %v2469, %v2479
    %v2482 = vadd.f32 %v2470, %v2480
    %v2483 = vrot.slane %v2478, 4
    %v2484 = vmax.f32 %v2478, %v2483
    %v2485 = vrot.slane %v2484, 2
    %v2486 = vmax.f32 %v2484, %v2485
    %v2487 = vrot.slane %v2486, 1
    %v2488 = vmax.f32 %v2486, %v2487
    %v2489 = vmul.f32 %v2488, %v790
    %v2490 = vmul.f32 %v2488, %v791
    %v2491 = vadd.f32 %v2481, %v2489
    %v2492 = vadd.f32 %v2482, %v2490
    %vm2493 = vcmp.gt.f32.partialorder %v2491, 20.0
    %vm2494 = vcmp.gt.f32.partialorder %v2492, 20.0
    %v2495 = vmin.f32 %v2491, 20.0
    %v2496 = vmin.f32 %v2492, 20.0
    %v2497 = vmul.f32 %v2495, 1.442695
    %v2498 = vpow.pop %v2497
    %v2499 = vmul.f32 %v2496, 1.442695
    %v2500 = vpow.pop %v2499
    %v2501 = vadd.f32 %v2498, 1.0
    %v2502 = vlog2.pop %v2501
    %v2503 = vmul.f32 %v2502, 0.6931472
    %v2504 = vmul.f32 -0.5, %v2498
    %v2505 = vadd.f32 %v2504, 1.0
    %v2506 = vmul.f32 %v2505, %v2498
    %v2507 = vand.u32 2147483647, %v2498
    %vm2508 = vcmp.lt.f32.partialorder %v2507, 0.0004427343
    %v2509 = vsel %vm2508, %v2506, %v2503
    %v2510 = vadd.f32 %v2500, 1.0
    %v2511 = vlog2.pop %v2510
    %v2512 = vmul.f32 %v2511, 0.6931472
    %v2513 = vmul.f32 -0.5, %v2500
    %v2514 = vadd.f32 %v2513, 1.0
    %v2515 = vmul.f32 %v2514, %v2500
    %v2516 = vand.u32 2147483647, %v2500
    %vm2517 = vcmp.lt.f32.partialorder %v2516, 0.0004427343
    %v2518 = vsel %vm2517, %v2515, %v2512
    %v2519 = vsel %vm2493, %v2491, %v2509
    %v2520 = vsel %vm2494, %v2492, %v2518
    %v2521 = vmul.f32 %v2519, %v794
    %v2522 = vmul.f32 %v2520, %v795
    %v2523 = vadd.f32 %v2521, %v2522
    %v2524 = vrot.slane %v2523, 4
    %v2525 = vadd.f32 %v2523, %v2524
    %v2526 = vrot.slane %v2525, 2
    %v2527 = vadd.f32 %v2525, %v2526
    %v2528 = vrot.slane %v2527, 1
    %v2529 = vadd.f32 %v2527, %v2528
    %v2530 = vadd.f32 %v2529, %v796
    %vm2531 = vcmp.gt.f32.partialorder %v2530, 20.0
    %v2532 = vmin.f32 %v2530, 20.0
    %v2533 = vmul.f32 %v2532, 1.442695
    %v2534 = vpow.pop %v2533
    %v2535 = vadd.f32 %v2534, 1.0
    %v2536 = vlog2.pop %v2535
    %v2537 = vmul.f32 %v2536, 0.6931472
    %v2538 = vmul.f32 -0.5, %v2534
    %v2539 = vadd.f32 %v2538, 1.0
    %v2540 = vmul.f32 %v2539, %v2534
    %v2541 = vand.u32 2147483647, %v2534
    %vm2542 = vcmp.lt.f32.partialorder %v2541, 0.0004427343
    %v2543 = vsel %vm2542, %v2540, %v2537
    %v2544 = vsel %vm2531, %v2530, %v2543
    %v2545 = vmul.f32 %v2544, %v774
    %v2546 = vadd.f32 %v2296, %v2545
    %v2547 = vmul.f32 %v139, %v175
    %v2548 = vmul.f32 %v140, %v176
    %v2549 = vmul.f32 %v141, %v177
    %v2550 = vmul.f32 %v142, %v178
    %v2551 = vmul.f32 %v139, %v179
    %v2552 = vmul.f32 %v140, %v180
    %v2553 = vmul.f32 %v141, %v181
    %v2554 = vmul.f32 %v142, %v182
    %v2555 = vmul.f32 %v139, %v183
    %v2556 = vmul.f32 %v140, %v184
    %v2557 = vmul.f32 %v141, %v185
    %v2558 = vmul.f32 %v142, %v186
    %v2559 = vmul.f32 %v139, %v187
    %v2560 = vmul.f32 %v140, %v188
    %v2561 = vmul.f32 %v141, %v189
    %v2562 = vmul.f32 %v142, %v190
    %v2563 = vmul.f32 %v139, %v191
    %v2564 = vmul.f32 %v140, %v192
    %v2565 = vmul.f32 %v141, %v193
    %v2566 = vmul.f32 %v142, %v194
    %v2567 = vmul.f32 %v139, %v195
    %v2568 = vmul.f32 %v140, %v196
    %v2569 = vmul.f32 %v141, %v197
    %v2570 = vmul.f32 %v142, %v198
    %v2571 = vmul.f32 %v139, %v199
    %v2572 = vmul.f32 %v140, %v200
    %v2573 = vmul.f32 %v141, %v201
    %v2574 = vmul.f32 %v142, %v202
    %v2575 = vmul.f32 %v139, %v203
    %v2576 = vmul.f32 %v140, %v204
    %v2577 = vmul.f32 %v141, %v205
    %v2578 = vmul.f32 %v142, %v206
    %v2579 = vadd.f32 %v2547, %v2548
    %v2580 = vadd.f32 %v2579, %v2549
    %v2581 = vadd.f32 %v2580, %v2550
    %v2582 = vrot.slane %v2581, 4
    %v2583 = vadd.f32 %v2581, %v2582
    %v2584 = vrot.slane %v2583, 2
    %v2585 = vadd.f32 %v2583, %v2584
    %v2586 = vrot.slane %v2585, 1
    %v2587 = vadd.f32 %v2585, %v2586
    %v2588 = vadd.f32 %v2551, %v2552
    %v2589 = vadd.f32 %v2588, %v2553
    %v2590 = vadd.f32 %v2589, %v2554
    %v2591 = vrot.slane %v2590, 4
    %v2592 = vadd.f32 %v2590, %v2591
    %v2593 = vrot.slane %v2592, 2
    %v2594 = vadd.f32 %v2592, %v2593
    %v2595 = vrot.slane %v2594, 1
    %v2596 = vadd.f32 %v2594, %v2595
    %v2597 = vadd.f32 %v2555, %v2556
    %v2598 = vadd.f32 %v2597, %v2557
    %v2599 = vadd.f32 %v2598, %v2558
    %v2600 = vrot.slane %v2599, 4
    %v2601 = vadd.f32 %v2599, %v2600
    %v2602 = vrot.slane %v2601, 2
    %v2603 = vadd.f32 %v2601, %v2602
    %v2604 = vrot.slane %v2603, 1
    %v2605 = vadd.f32 %v2603, %v2604
    %v2606 = vadd.f32 %v2559, %v2560
    %v2607 = vadd.f32 %v2606, %v2561
    %v2608 = vadd.f32 %v2607, %v2562
    %v2609 = vrot.slane %v2608, 4
    %v2610 = vadd.f32 %v2608, %v2609
    %v2611 = vrot.slane %v2610, 2
    %v2612 = vadd.f32 %v2610, %v2611
    %v2613 = vrot.slane %v2612, 1
    %v2614 = vadd.f32 %v2612, %v2613
    %v2615 = vadd.f32 %v2563, %v2564
    %v2616 = vadd.f32 %v2615, %v2565
    %v2617 = vadd.f32 %v2616, %v2566
    %v2618 = vrot.slane %v2617, 4
    %v2619 = vadd.f32 %v2617, %v2618
    %v2620 = vrot.slane %v2619, 2
    %v2621 = vadd.f32 %v2619, %v2620
    %v2622 = vrot.slane %v2621, 1
    %v2623 = vadd.f32 %v2621, %v2622
    %v2624 = vadd.f32 %v2567, %v2568
    %v2625 = vadd.f32 %v2624, %v2569
    %v2626 = vadd.f32 %v2625, %v2570
    %v2627 = vrot.slane %v2626, 4
    %v2628 = vadd.f32 %v2626, %v2627
    %v2629 = vrot.slane %v2628, 2
    %v2630 = vadd.f32 %v2628, %v2629
    %v2631 = vrot.slane %v2630, 1
    %v2632 = vadd.f32 %v2630, %v2631
    %v2633 = vadd.f32 %v2571, %v2572
    %v2634 = vadd.f32 %v2633, %v2573
    %v2635 = vadd.f32 %v2634, %v2574
    %v2636 = vrot.slane %v2635, 4
    %v2637 = vadd.f32 %v2635, %v2636
    %v2638 = vrot.slane %v2637, 2
    %v2639 = vadd.f32 %v2637, %v2638
    %v2640 = vrot.slane %v2639, 1
    %v2641 = vadd.f32 %v2639, %v2640
    %v2642 = vadd.f32 %v2575, %v2576
    %v2643 = vadd.f32 %v2642, %v2577
    %v2644 = vadd.f32 %v2643, %v2578
    %v2645 = vrot.slane %v2644, 4
    %v2646 = vadd.f32 %v2644, %v2645
    %v2647 = vrot.slane %v2646, 2
    %v2648 = vadd.f32 %v2646, %v2647
    %v2649 = vrot.slane %v2648, 1
    %v2650 = vadd.f32 %v2648, %v2649
    %v2651 = vmul.f32 %v2587, %v398
    %v2652 = vmul.f32 %v2596, %v398
    %v2653 = vmul.f32 %v2605, %v398
    %v2654 = vmul.f32 %v2614, %v398
    %v2655 = vmul.f32 %v2623, %v398
    %v2656 = vmul.f32 %v2632, %v398
    %v2657 = vmul.f32 %v2641, %v398
    %v2658 = vmul.f32 %v2650, %v398
    %v2659 = vmul.f32 %v2651, %v520
    %v2660 = vmul.f32 %v2652, %v530
    %v2661 = vmul.f32 %v2653, %v540
    %v2662 = vmul.f32 %v2654, %v550
    %v2663 = vmul.f32 %v2655, %v560
    %v2664 = vmul.f32 %v2656, %v570
    %v2665 = vmul.f32 %v2657, %v580
    %v2666 = vmul.f32 %v2658, %v590
    %vm2667 = vcmp.le.s32.totalorder %v776, 7
    %v2668 = vsel %vm2667, 1, 0
    %v2669 = vperm.slane %v2668, 0
    %vm2670 = vcmp.eq.s32.totalorder %v2669, 1
    %vm2671 = vmor %vm781, %vm2670
    %v2680 = vrot.slane %v2660, 7
    %v2681 = vsel %vm739, %v2680, %v2659
    %v2682 = vrot.slane %v2661, 6
    %v2683 = vsel %vm742, %v2682, %v2681
    %v2684 = vrot.slane %v2662, 5
    %v2685 = vsel %vm745, %v2684, %v2683
    %v2686 = vrot.slane %v2663, 4
    %v2687 = vsel %vm748, %v2686, %v2685
    %v2688 = vrot.slane %v2664, 3
    %v2689 = vsel %vm751, %v2688, %v2687
    %v2690 = vrot.slane %v2665, 2
    %v2691 = vsel %vm754, %v2690, %v2689
    %v2692 = vrot.slane %v2666, 1
    %v2693 = vsel %vm757, %v2692, %v2691
    %v2695 = vsel %vm2671, 0.0, %v2693
    %v2696 = vsub.f32 %v2695, %v783
    %v2697 = vrot.slane %v2696, 4
    %v2698 = vmax.f32 %v2696, %v2697
    %v2699 = vrot.slane %v2698, 2
    %v2700 = vmax.f32 %v2698, %v2699
    %v2701 = vrot.slane %v2700, 1
    %v2702 = vmax.f32 %v2700, %v2701
    %vm2703 = vcmp.eq.f32.partialorder %v2696, %v2702
    %v2704 = vsel %vm2703, -3e+38, %v2696
    %v2705 = vmul.f32 %v2702, %v784
    %v2706 = vmul.f32 %v2702, %v785
    %v2707 = vadd.f32 %v792, %v2705
    %v2708 = vadd.f32 %v793, %v2706
    %v2709 = vrot.slane %v2704, 4
    %v2710 = vmax.f32 %v2704, %v2709
    %v2711 = vrot.slane %v2710, 2
    %v2712 = vmax.f32 %v2710, %v2711
    %v2713 = vrot.slane %v2712, 1
    %v2714 = vmax.f32 %v2712, %v2713
    %vm2715 = vcmp.eq.f32.partialorder %v2704, %v2714
    %v2716 = vsel %vm2715, -3e+38, %v2704
    %v2717 = vmul.f32 %v2714, %v786
    %v2718 = vmul.f32 %v2714, %v787
    %v2719 = vadd.f32 %v2707, %v2717
    %v2720 = vadd.f32 %v2708, %v2718
    %v2721 = vrot.slane %v2716, 4
    %v2722 = vmax.f32 %v2716, %v2721
    %v2723 = vrot.slane %v2722, 2
    %v2724 = vmax.f32 %v2722, %v2723
    %v2725 = vrot.slane %v2724, 1
    %v2726 = vmax.f32 %v2724, %v2725
    %vm2727 = vcmp.eq.f32.partialorder %v2716, %v2726
    %v2728 = vsel %vm2727, -3e+38, %v2716
    %v2729 = vmul.f32 %v2726, %v788
    %v2730 = vmul.f32 %v2726, %v789
    %v2731 = vadd.f32 %v2719, %v2729
    %v2732 = vadd.f32 %v2720, %v2730
    %v2733 = vrot.slane %v2728, 4
    %v2734 = vmax.f32 %v2728, %v2733
    %v2735 = vrot.slane %v2734, 2
    %v2736 = vmax.f32 %v2734, %v2735
    %v2737 = vrot.slane %v2736, 1
    %v2738 = vmax.f32 %v2736, %v2737
    %v2739 = vmul.f32 %v2738, %v790
    %v2740 = vmul.f32 %v2738, %v791
    %v2741 = vadd.f32 %v2731, %v2739
    %v2742 = vadd.f32 %v2732, %v2740
    %vm2743 = vcmp.gt.f32.partialorder %v2741, 20.0
    %vm2744 = vcmp.gt.f32.partialorder %v2742, 20.0
    %v2745 = vmin.f32 %v2741, 20.0
    %v2746 = vmin.f32 %v2742, 20.0
    %v2747 = vmul.f32 %v2745, 1.442695
    %v2748 = vpow.pop %v2747
    %v2749 = vmul.f32 %v2746, 1.442695
    %v2750 = vpow.pop %v2749
    %v2751 = vadd.f32 %v2748, 1.0
    %v2752 = vlog2.pop %v2751
    %v2753 = vmul.f32 %v2752, 0.6931472
    %v2754 = vmul.f32 -0.5, %v2748
    %v2755 = vadd.f32 %v2754, 1.0
    %v2756 = vmul.f32 %v2755, %v2748
    %v2757 = vand.u32 2147483647, %v2748
    %vm2758 = vcmp.lt.f32.partialorder %v2757, 0.0004427343
    %v2759 = vsel %vm2758, %v2756, %v2753
    %v2760 = vadd.f32 %v2750, 1.0
    %v2761 = vlog2.pop %v2760
    %v2762 = vmul.f32 %v2761, 0.6931472
    %v2763 = vmul.f32 -0.5, %v2750
    %v2764 = vadd.f32 %v2763, 1.0
    %v2765 = vmul.f32 %v2764, %v2750
    %v2766 = vand.u32 2147483647, %v2750
    %vm2767 = vcmp.lt.f32.partialorder %v2766, 0.0004427343
    %v2768 = vsel %vm2767, %v2765, %v2762
    %v2769 = vsel %vm2743, %v2741, %v2759
    %v2770 = vsel %vm2744, %v2742, %v2768
    %v2771 = vmul.f32 %v2769, %v794
    %v2772 = vmul.f32 %v2770, %v795
    %v2773 = vadd.f32 %v2771, %v2772
    %v2774 = vrot.slane %v2773, 4
    %v2775 = vadd.f32 %v2773, %v2774
    %v2776 = vrot.slane %v2775, 2
    %v2777 = vadd.f32 %v2775, %v2776
    %v2778 = vrot.slane %v2777, 1
    %v2779 = vadd.f32 %v2777, %v2778
    %v2780 = vadd.f32 %v2779, %v796
    %vm2781 = vcmp.gt.f32.partialorder %v2780, 20.0
    %v2782 = vmin.f32 %v2780, 20.0
    %v2783 = vmul.f32 %v2782, 1.442695
    %v2784 = vpow.pop %v2783
    %v2785 = vadd.f32 %v2784, 1.0
    %v2786 = vlog2.pop %v2785
    %v2787 = vmul.f32 %v2786, 0.6931472
    %v2788 = vmul.f32 -0.5, %v2784
    %v2789 = vadd.f32 %v2788, 1.0
    %v2790 = vmul.f32 %v2789, %v2784
    %v2791 = vand.u32 2147483647, %v2784
    %vm2792 = vcmp.lt.f32.partialorder %v2791, 0.0004427343
    %v2793 = vsel %vm2792, %v2790, %v2787
    %v2794 = vsel %vm2781, %v2780, %v2793
    %v2795 = vmul.f32 %v2794, %v775
    %v2796 = vadd.f32 %v2546, %v2795
    %v2798 = vrot.slane %v796, 1
    %v2800 = vmul.f32 %v2796, %v2798
    %v2801 = vrot.slane %v796, 3
    %v2803 = vadd.f32 %v2800, %v2801
    %v2804 = vrot.slane %v796, 2
    %v2806 = vmul.f32 %v2796, %v2804
    %v2807 = vrot.slane %v796, 4
    %v2809 = vadd.f32 %v2806, %v2807
    %v2810 = vmax.f32 %v2803, %v2809
    %v2811 = vsub.f32 %v2803, %v2810
    %v2812 = vmul.f32 %v2811, 1.442695
    %v2813 = vpow.pop %v2812
    %v2814 = vsub.f32 %v2809, %v2810
    %v2815 = vmul.f32 %v2814, 1.442695
    %v2816 = vpow.pop %v2815
    %v2817 = vadd.f32 %v2813, %v2816
    %v2818 = vrcp.pop %v2817
    %v2819 = vmul.f32 %v2817, %v2818
    %v2820 = vsub.f32 1.0, %v2819
    %v2821 = vmul.f32 %v2818, %v2820
    %v2822 = vadd.f32 %v2818, %v2821
    %vm2823 = vweird.f32 %v2817
    %vm2824 = vweird.f32 %v2818
    %vm2825 = vmor %vm2823, %vm2824
    %v2826 = vsel %vm2825, %v2818, %v2822
    %v2827 = vand.u32 2147483647, %v2817
    %vm2828 = vcmp.eq.f32.partialorder %v2827, 8.507059e+37
    %v2829 = vand.u32 %v2817, 2147483648
    %v2830 = vor.u32 1.1754944e-38, %v2829
    %v2831 = vsel %vm2828, %v2830, %v2826
    %v2832 = vmul.f32 %v2813, %v2831
    %v2833 = vmul.f32 %v2816, %v2831
    %v2835 = vrot.slane %v2833, 7
    %vm2837 = vcmask 1040384
    %v2838 = vsel %vm2837, %v2832, %v2835
    %2839 = vst [vmem:[#allocation10] sm:$0x3] %v2838
    // Predicated region
    $region34: #{tpu_custom_call.1} parent=1 // pred_check
      _
    $region35: #{tpu_custom_call.1} parent=1 // pred_check_branch
      %2841 = sbr.rel (0) target = $region37
    $region36: #{tpu_custom_call.1} parent=1 // pred_region
      %2843 = vsyncadd [#allocation4], 0
      %s2845 = sshll.u32 [#allocation10], 4
      %s2846 = int_to_ptr.vmem [resolvable:$true] %s2845
      %s2847 = sshll.u32 %s4, 4
      %s2848 = int_to_ptr.hbm [resolvable:$true] %s2847
      %2850 = dma.vmem_to_hbm [thread:$0]  %s2846, 32, %s2848, [#allocation4]
    $region37: #{tpu_custom_call.1} parent=1 // pred_fallthru
      _
    // Predicated region
    $region38: #{tpu_custom_call.1} parent=1 // pred_check
      _
    $region39: #{tpu_custom_call.1} parent=1 // pred_check_branch
      %2852 = sbr.rel (0) target = $region41
    $region40: #{tpu_custom_call.1} parent=1 // pred_region
      %2854 = dma.done [#allocation4], 32
    $region41: #{tpu_custom_call.1} parent=1 // pred_fallthru
      _
    %2855 = vsyncpa [#allocation3], 1
    %2856 = vsyncpa [#allocation6], 1
    %2857 = vsyncpa [#allocation9], 1
    %2858 = vsyncpa [#allocation4], 1

</llo_original>
